<compile_context>
chip_gen: v7x
topology: tpu7x:2x2x1
jax: 0.10.0
libtpu: 0.0.40
codegen_flags: <defaults>
</compile_context>

<pallas_src>
import math
import functools
from itertools import combinations

import jax
import jax.numpy as jnp
from jax import lax
from jax.experimental import pallas as pl
from jax.experimental.pallas import tpu as pltpu


# --------------------------------------------------------------------------
# shared in-kernel helpers
# --------------------------------------------------------------------------
def _logsumexp(x, axis):
    m = jnp.max(x, axis=axis, keepdims=True)
    return m + jnp.log(jnp.sum(jnp.exp(x - m), axis=axis, keepdims=True))


def _sinkhorn_2d(scores, tau, max_iter):
    """Log-space Sinkhorn on a single (Nr, Nc) score matrix.

    Matches the ThinkMatch alternating row/col normalization (row first).
    The loop is a static Python loop -> fully unrolled, and each half-iteration
    performs exactly one normalization (row, then col) instead of computing
    both and discarding one.
    NOTE: nrows == ncols == full N is assumed, so dummy_row / masking are
    no-ops at these shapes.
    # TODO(synk): variable graph sizes (padded batches) would need the
    # dummy-row / masking handling of the reference Sinkhorn.
    """
    log_s = scores * (1.0 / tau)
    for _ in range(max_iter // 2):
        log_s = log_s - _logsumexp(log_s, axis=1)   # row normalization
        log_s = log_s - _logsumexp(log_s, axis=0)   # column normalization
    if max_iter % 2 == 1:
        log_s = log_s - _logsumexp(log_s, axis=1)
    return jnp.exp(log_s)


# --------------------------------------------------------------------------
# fused PCA-GM kernel: Gconv(src) + Gconv(tgt) + Affinity + Sinkhorn
# (+ cross-graph linear at layer n-2), all layers, one grid step per sample
# --------------------------------------------------------------------------
def _pca_gm_fused_kernel(*refs, n_layers, has_cross, cross_idx, tau, sk_iter):
    """refs layout:
        [A_src, A_tgt, src, tgt]
        + [Wa_i, ba_i, Wu_i, bu_i, Aff_i] * n_layers
        + ([Wc_top, Wc_bot, bc] if has_cross)
        + [out]
    """
    a_src = refs[0][0]            # (N, N)
    a_tgt = refs[1][0]            # (N, N)
    emb1 = refs[2][0]             # (N, C0)
    emb2 = refs[3][0]             # (N, C0)
    pos = 4
    layer_refs = []
    for _ in range(n_layers):
        layer_refs.append(refs[pos:pos + 5])
        pos += 5
    if has_cross:
        wct_ref, wcb_ref, bc_ref = refs[pos:pos + 3]
        pos += 3
    out_ref = refs[pos]

    N = a_src.shape[0]

    # F.normalize(A, p=1, dim=-2): scale each column by the reciprocal of its
    # L1 norm.  Done once per sample (A is layer-invariant), reciprocal on EUP.
    def col_normalize(a):
        col = jnp.sum(jnp.abs(a), axis=0, keepdims=True)            # (1, N)
        inv = pl.reciprocal(jnp.maximum(col, 1e-12), approx=True)
        return a * inv

    an_src = col_normalize(a_src)
    an_tgt = col_normalize(a_tgt)

    s = None
    for i in range(n_layers):
        wa_ref, ba_ref, wu_ref, bu_ref, aff_ref = layer_refs[i]

        # ---- Siamese Gconv: both graphs through the shared weights in a
        # single (2N, Cin) @ (Cin, F) MXU matmul.
        x_both = jnp.concatenate([emb1, emb2], axis=0)               # (2N, Cin)
        ax = jnp.maximum(
            jnp.dot(x_both, wa_ref[...], preferred_element_type=jnp.float32)
            + ba_ref[...], 0.0)
        ux = jnp.maximum(
            jnp.dot(x_both, wu_ref[...], preferred_element_type=jnp.float32)
            + bu_ref[...], 0.0)
        emb1 = jnp.dot(an_src, ax[:N], preferred_element_type=jnp.float32) + ux[:N]
        emb2 = jnp.dot(an_tgt, ax[N:], preferred_element_type=jnp.float32) + ux[N:]

        # ---- Affinity: emb1 @ Aff @ emb2^T  (spec uses Aff directly, no
        # symmetrization).
        xa = jnp.dot(emb1, aff_ref[...], preferred_element_type=jnp.float32)
        scores = jnp.dot(xa, emb2.T, preferred_element_type=jnp.float32)   # (N, N)

        # ---- Sinkhorn, fully unrolled, VMEM resident.
        s = _sinkhorn_2d(scores, tau, sk_iter)

        # ---- Cross-graph linear at layer n_layers - 2.
        # Linear(cat(e, s @ e_other)) == e @ Wc_top + (s @ e_other) @ Wc_bot + b
        if has_cross and i == cross_idx:
            se2 = jnp.dot(s, emb2, preferred_element_type=jnp.float32)
            ste1 = jnp.dot(s.T, emb1, preferred_element_type=jnp.float32)
            wct = wct_ref[...]
            wcb = wcb_ref[...]
            bc = bc_ref[...]
            new1 = (jnp.dot(emb1, wct, preferred_element_type=jnp.float32)
                    + jnp.dot(se2, wcb, preferred_element_type=jnp.float32) + bc)
            new2 = (jnp.dot(emb2, wct, preferred_element_type=jnp.float32)
                    + jnp.dot(ste1, wcb, preferred_element_type=jnp.float32) + bc)
            emb1, emb2 = new1, new2

    out_ref[0] = s   # ds_mat = ss[-1]


def _broadcast_spec(arr):
    zeros = (0,) * arr.ndim
    return pl.BlockSpec(arr.shape, lambda b, _z=zeros: _z)


def pca_gm_fused(A_src, A_tgt, src, tgt, params, *, sk_tau, sk_iter):
    """Fused PCA_GM.forward (cross_iter=False branch).

    A_src/A_tgt: (B, N, N), src/tgt: (B, N, C0).  Returns ds_mat (B, N, N).
    One pallas_call, grid over B with 'parallel' semantics, all intermediates
    kept in VMEM.
    """
    B, N, C0 = src.shape
    n_layers = len(params["gnn"])
    has_cross = "cross" in params
    cross_idx = n_layers - 2

    inputs = [A_src, A_tgt, src, tgt]
    in_specs = [
        pl.BlockSpec((1, N, N), lambda b: (b, 0, 0)),
        pl.BlockSpec((1, N, N), lambda b: (b, 0, 0)),
        pl.BlockSpec((1, N, C0), lambda b: (b, 0, 0)),
        pl.BlockSpec((1, N, C0), lambda b: (b, 0, 0)),
    ]
    for i in range(n_layers):
        Wa, ba, Wu, bu = params["gnn"][i]
        Aff = params["aff"][i]
        for w in (Wa, ba, Wu, bu, Aff):
            inputs.append(w)
            in_specs.append(_broadcast_spec(w))
    if has_cross:
        Wc, bc = params["cross"]
        F = Wc.shape[1]
        # split the (2F, F) cross-graph weight at trace time (no in-kernel
        # slicing of a VMEM ref)
        Wct, Wcb = Wc[:F, :], Wc[F:, :]
        for w in (Wct, Wcb, bc):
            inputs.append(w)
            in_specs.append(_broadcast_spec(w))

    kernel = functools.partial(
        _pca_gm_fused_kernel, n_layers=n_layers, has_cross=has_cross,
        cross_idx=cross_idx, tau=sk_tau, sk_iter=sk_iter)

    return pl.pallas_call(
        kernel,
        out_shape=jax.ShapeDtypeStruct((B, N, N), jnp.float32),
        grid=(B,),
        in_specs=in_specs,
        out_specs=pl.BlockSpec((1, N, N), lambda b: (b, 0, 0)),
        compiler_params=pltpu.CompilerParams(dimension_semantics=("parallel",)),
    )(*inputs)


# --------------------------------------------------------------------------
# standalone batched Sinkhorn kernel (for the final MGM pairwise step)
# --------------------------------------------------------------------------
def _sinkhorn_kernel(s_ref, o_ref, *, tau, max_iter):
    o_ref[0] = _sinkhorn_2d(s_ref[0], tau, max_iter)


def sinkhorn(S, *, tau, max_iter):
    B, Nr, Nc = S.shape
    return pl.pallas_call(
        functools.partial(_sinkhorn_kernel, tau=tau, max_iter=max_iter),
        out_shape=jax.ShapeDtypeStruct((B, Nr, Nc), jnp.float32),
        grid=(B,),
        in_specs=[pl.BlockSpec((1, Nr, Nc), lambda b: (b, 0, 0))],
        out_specs=pl.BlockSpec((1, Nr, Nc), lambda b: (b, 0, 0)),
        compiler_params=pltpu.CompilerParams(dimension_semantics=("parallel",)),
    )(S)


# --------------------------------------------------------------------------
# parameter init (matches the torch modules' parameterization)
# --------------------------------------------------------------------------
def init_params(key, feature_channel, gnn_feat):
    params = {"gnn": [], "aff": []}
    n_layers = len(gnn_feat)
    for i in range(n_layers):
        cin = feature_channel if i == 0 else gnn_feat[i - 1]
        cout = gnn_feat[i]
        stdv = 1.0 / math.sqrt(cin)
        key, k1, k2, k3, k4 = jax.random.split(key, 5)
        Wa = jax.random.uniform(k1, (cin, cout), jnp.float32, -stdv, stdv)
        ba = jax.random.uniform(k2, (1, cout), jnp.float32, -stdv, stdv)
        Wu = jax.random.uniform(k3, (cin, cout), jnp.float32, -stdv, stdv)
        bu = jax.random.uniform(k4, (1, cout), jnp.float32, -stdv, stdv)
        params["gnn"].append((Wa, ba, Wu, bu))
        # Affinity: uniform(-1/sqrt(d), 1/sqrt(d)) + eye(d)
        key, ka = jax.random.split(key)
        stdv_a = 1.0 / math.sqrt(cout)
        Aff = (jax.random.uniform(ka, (cout, cout), jnp.float32, -stdv_a, stdv_a)
               + jnp.eye(cout, dtype=jnp.float32))
        params["aff"].append(Aff)
        if i == n_layers - 2:
            f = cout
            stdv_c = 1.0 / math.sqrt(2 * f)
            key, kw, kb = jax.random.split(key, 3)
            Wc = jax.random.uniform(kw, (2 * f, f), jnp.float32, -stdv_c, stdv_c)
            bc = jax.random.uniform(kb, (1, f), jnp.float32, -stdv_c, stdv_c)
            params["cross"] = (Wc, bc)
    return params


# --------------------------------------------------------------------------
# MGM_Model forward
# --------------------------------------------------------------------------
def mgm_forward(params, pos_features, As, *, sk_tau, sk_iter):
    """Forward of MGM_Model.

    pos_features / As: lists (length n_graphs) of (B, n_nodes, C) / (B, n, n).
    Returns (pred_s dict keyed by (idx1, idx2), nan_encountered).
    """
    n_graphs = len(pos_features)
    B, n_nodes, _ = pos_features[0].shape
    total = n_nodes * n_graphs
    pairs = list(combinations(range(n_graphs), 2))
    n_pairs = len(pairs)

    # --- run PCA-GM on every graph pair in ONE fused pallas_call by stacking
    # the pairs along the (parallel) grid axis.
    A_src = jnp.concatenate([As[i] for (i, j) in pairs], axis=0)
    A_tgt = jnp.concatenate([As[j] for (i, j) in pairs], axis=0)
    src = jnp.concatenate([pos_features[i] for (i, j) in pairs], axis=0)
    tgt = jnp.concatenate([pos_features[j] for (i, j) in pairs], axis=0)

    ds_all = pca_gm_fused(A_src, A_tgt, src, tgt, params,
                          sk_tau=sk_tau, sk_iter=sk_iter)            # (P*B, n, n)
    ds_all = ds_all.reshape(n_pairs, B, n_nodes, n_nodes)

    nan_per_pair = jnp.any(jnp.isnan(ds_all), axis=(1, 2, 3))        # (P,)
    nan_encountered = jnp.any(nan_per_pair)
    ds_all = jnp.nan_to_num(ds_all, nan=0.0)
    # torch breaks the pair loop after the first NaN pair (that pair is still
    # added); mask out pairs that would come after it.
    nan_int = nan_per_pair.astype(jnp.int32)
    earlier_nan = jnp.cumsum(nan_int) - nan_int
    include = (earlier_nan == 0).astype(jnp.float32)                 # (P,)

    # --- joint_S = I + upper-triangular pairwise blocks
    joint_S = jnp.tile(jnp.eye(total, dtype=jnp.float32)[None], (B, 1, 1))
    for p, (i, j) in enumerate(pairs):
        joint_S = joint_S.at[:, i * n_nodes:(i + 1) * n_nodes,
                             j * n_nodes:(j + 1) * n_nodes].add(ds_all[p] * include[p])

    # --- spectral fusion (torch.symeig with default upper=True: eigendecompose
    # the symmetric matrix built from the upper triangle).
    # TODO(synk): dense eigendecomposition has no Pallas equivalent; uses XLA's
    # jnp.linalg.eigh here.
    matching = []
    for b in range(B):
        s_b = joint_S[b]
        upper = jnp.triu(s_b)
        s_sym = upper + upper.T - jnp.diag(jnp.diag(s_b))
        e, v = jnp.linalg.eigh(s_sym, symmetrize_input=False)
        top = jnp.argsort(-jnp.abs(e))[:n_nodes]
        e_top = e[top]
        diff = e_top[:-1] - e_top[1:]
        v_top = v[:, top]
        spectral = n_graphs * (v_top @ v_top.T)
        use_spectral = jnp.min(jnp.abs(diff)) > 1e-4
        matching.append(jnp.where(use_spectral, spectral, s_b))
    matching_s = jnp.stack(matching, axis=0)                         # (B, total, total)

    # --- final pairwise Sinkhorn over all (idx1, idx2) blocks, again batched
    # into a single Pallas launch.
    blocks = jnp.concatenate(
        [matching_s[:, i * n_nodes:(i + 1) * n_nodes,
                    j * n_nodes:(j + 1) * n_nodes] for (i, j) in pairs], axis=0)
    pred = sinkhorn(blocks, tau=sk_tau, max_iter=sk_iter)            # (P*B, n, n)
    pred = pred.reshape(n_pairs, B, n_nodes, n_nodes)
    pred_s = {pairs[p]: pred[p] for p in range(n_pairs)}

    # TODO(synk): hungarian() (LAP solver -> perm_mat / perm_mat_list) has no
    # clean Pallas equivalent; omitted.
    return pred_s, nan_encountered


# --------------------------------------------------------------------------
# main
# --------------------------------------------------------------------------
if __name__ == "__main__":
    # pca_params / gnn_params / mgm setup (synthetic, small)
    FEATURE_CHANNEL = 32
    GNN_FEAT = [32, 32]          # GNN_LAYER = 2
    SK_ITER_NUM = 10
    SK_TAU = 0.05
    BATCH = 1                    # MGM_Model.batch_size = 1
    N_GRAPHS = 3
    N_NODES = 8

    key = jax.random.PRNGKey(0)
    key, k_par = jax.random.split(key)
    params = init_params(k_par, FEATURE_CHANNEL, GNN_FEAT)

    pos_features, As = [], []
    for _ in range(N_GRAPHS):
        key, kf, ka = jax.random.split(key, 3)
        pos_features.append(
            jax.random.normal(kf, (BATCH, N_NODES, FEATURE_CHANNEL), jnp.float32))
        # random adjacency-like nonnegative matrices
        As.append(jax.random.uniform(ka, (BATCH, N_NODES, N_NODES), jnp.float32))

    pred_s, nan_encountered = mgm_forward(
        params, pos_features, As, sk_tau=SK_TAU, sk_iter=SK_ITER_NUM)

    pred_s = {k: jax.block_until_ready(v) for k, v in pred_s.items()}
    nan_encountered = bool(jax.block_until_ready(nan_encountered))

    assert len(pred_s) == N_GRAPHS * (N_GRAPHS - 1) // 2
    for (i, j), s in pred_s.items():
        assert s.shape == (BATCH, N_NODES, N_NODES)
        assert bool(jnp.all(jnp.isfinite(s)))
    assert not nan_encountered
    print("KERNEL_OK")
</pallas_src>

<mosaic_0001>
module attributes {stable_mosaic.version = 11 : i64} {
  func.func @_pca_gm_fused_kernel(%arg0: i32, %arg1: memref<1x8x8xf32, #tpu.memory_space<vmem>>, %arg2: memref<1x8x8xf32, #tpu.memory_space<vmem>>, %arg3: memref<1x8x32xf32, #tpu.memory_space<vmem>>, %arg4: memref<1x8x32xf32, #tpu.memory_space<vmem>>, %arg5: memref<32x32xf32, #tpu.memory_space<vmem>>, %arg6: memref<1x32xf32, #tpu.memory_space<vmem>>, %arg7: memref<32x32xf32, #tpu.memory_space<vmem>>, %arg8: memref<1x32xf32, #tpu.memory_space<vmem>>, %arg9: memref<32x32xf32, #tpu.memory_space<vmem>>, %arg10: memref<32x32xf32, #tpu.memory_space<vmem>>, %arg11: memref<1x32xf32, #tpu.memory_space<vmem>>, %arg12: memref<32x32xf32, #tpu.memory_space<vmem>>, %arg13: memref<1x32xf32, #tpu.memory_space<vmem>>, %arg14: memref<32x32xf32, #tpu.memory_space<vmem>>, %arg15: memref<32x32xf32, #tpu.memory_space<vmem>>, %arg16: memref<32x32xf32, #tpu.memory_space<vmem>>, %arg17: memref<1x32xf32, #tpu.memory_space<vmem>>, %arg18: memref<1x8x8xf32, #tpu.memory_space<vmem>>) attributes {dimension_semantics = [#tpu.dimension_semantics<parallel>], iteration_bounds = array<i64: 3>, scalar_prefetch = 0 : i64, scratch_operands = 0 : i64, tpu.core_type = #tpu.core_type<tc>, window_params = [{transform_indices = @transform_0, window_bounds = array<i64: 1, 8, 8>}, {transform_indices = @transform_1, window_bounds = array<i64: 1, 8, 8>}, {transform_indices = @transform_2, window_bounds = array<i64: 1, 8, 32>}, {transform_indices = @transform_3, window_bounds = array<i64: 1, 8, 32>}, {pipeline_mode = #tpu.pipeline_mode<synchronous>, transform_indices = @transform_4, window_bounds = array<i64: 32, 32>}, {pipeline_mode = #tpu.pipeline_mode<synchronous>, transform_indices = @transform_5, window_bounds = array<i64: 1, 32>}, {pipeline_mode = #tpu.pipeline_mode<synchronous>, transform_indices = @transform_6, window_bounds = array<i64: 32, 32>}, {pipeline_mode = #tpu.pipeline_mode<synchronous>, transform_indices = @transform_7, window_bounds = array<i64: 1, 32>}, {pipeline_mode = #tpu.pipeline_mode<synchronous>, transform_indices = @transform_8, window_bounds = array<i64: 32, 32>}, {pipeline_mode = #tpu.pipeline_mode<synchronous>, transform_indices = @transform_9, window_bounds = array<i64: 32, 32>}, {pipeline_mode = #tpu.pipeline_mode<synchronous>, transform_indices = @transform_10, window_bounds = array<i64: 1, 32>}, {pipeline_mode = #tpu.pipeline_mode<synchronous>, transform_indices = @transform_11, window_bounds = array<i64: 32, 32>}, {pipeline_mode = #tpu.pipeline_mode<synchronous>, transform_indices = @transform_12, window_bounds = array<i64: 1, 32>}, {pipeline_mode = #tpu.pipeline_mode<synchronous>, transform_indices = @transform_13, window_bounds = array<i64: 32, 32>}, {pipeline_mode = #tpu.pipeline_mode<synchronous>, transform_indices = @transform_14, window_bounds = array<i64: 32, 32>}, {pipeline_mode = #tpu.pipeline_mode<synchronous>, transform_indices = @transform_15, window_bounds = array<i64: 32, 32>}, {pipeline_mode = #tpu.pipeline_mode<synchronous>, transform_indices = @transform_16, window_bounds = array<i64: 1, 32>}, {transform_indices = @transform_17, window_bounds = array<i64: 1, 8, 8>}]} {
    %c0 = arith.constant 0 : index
    %c0_0 = arith.constant 0 : index
    %c0_1 = arith.constant 0 : index
    %0 = vector.load %arg1[%c0, %c0_0, %c0_1] : memref<1x8x8xf32, #tpu.memory_space<vmem>>, vector<1x8x8xf32>
    %1 = vector.shape_cast %0 : vector<1x8x8xf32> to vector<8x8xf32>
    %c0_2 = arith.constant 0 : index
    %c0_3 = arith.constant 0 : index
    %c0_4 = arith.constant 0 : index
    %2 = vector.load %arg2[%c0_2, %c0_3, %c0_4] : memref<1x8x8xf32, #tpu.memory_space<vmem>>, vector<1x8x8xf32>
    %3 = vector.shape_cast %2 : vector<1x8x8xf32> to vector<8x8xf32>
    %c0_5 = arith.constant 0 : index
    %c0_6 = arith.constant 0 : index
    %c0_7 = arith.constant 0 : index
    %4 = vector.load %arg3[%c0_5, %c0_6, %c0_7] : memref<1x8x32xf32, #tpu.memory_space<vmem>>, vector<1x8x32xf32>
    %5 = vector.shape_cast %4 : vector<1x8x32xf32> to vector<8x32xf32>
    %c0_8 = arith.constant 0 : index
    %c0_9 = arith.constant 0 : index
    %c0_10 = arith.constant 0 : index
    %6 = vector.load %arg4[%c0_8, %c0_9, %c0_10] : memref<1x8x32xf32, #tpu.memory_space<vmem>>, vector<1x8x32xf32>
    %7 = vector.shape_cast %6 : vector<1x8x32xf32> to vector<8x32xf32>
    %8 = math.absf %1 : vector<8x8xf32>
    %cst = arith.constant dense<0.000000e+00> : vector<8xf32>
    %9 = vector.multi_reduction <add>, %8, %cst [0] : vector<8x8xf32> to vector<8xf32>
    %10 = vector.shape_cast %9 : vector<8xf32> to vector<1x8xf32>
    %cst_11 = arith.constant 9.99999996E-13 : f32
    %11 = vector.broadcast %cst_11 : f32 to vector<1x8xf32>
    %12 = arith.maximumf %10, %11 : vector<1x8xf32>
    %13 = tpu.reciprocal %12 {approx = true} : vector<1x8xf32> -> vector<1x8xf32>
    %14 = vector.broadcast %13 : vector<1x8xf32> to vector<8x8xf32>
    %15 = arith.mulf %1, %14 : vector<8x8xf32>
    %16 = math.absf %3 : vector<8x8xf32>
    %cst_12 = arith.constant dense<0.000000e+00> : vector<8xf32>
    %17 = vector.multi_reduction <add>, %16, %cst_12 [0] : vector<8x8xf32> to vector<8xf32>
    %18 = vector.shape_cast %17 : vector<8xf32> to vector<1x8xf32>
    %cst_13 = arith.constant 9.99999996E-13 : f32
    %19 = vector.broadcast %cst_13 : f32 to vector<1x8xf32>
    %20 = arith.maximumf %18, %19 : vector<1x8xf32>
    %21 = tpu.reciprocal %20 {approx = true} : vector<1x8xf32> -> vector<1x8xf32>
    %22 = vector.broadcast %21 : vector<1x8xf32> to vector<8x8xf32>
    %23 = arith.mulf %3, %22 : vector<8x8xf32>
    %24 = tpu.concatenate %5, %7 in 0 : vector<8x32xf32>, vector<8x32xf32> -> vector<16x32xf32>
    %c0_14 = arith.constant 0 : index
    %c0_15 = arith.constant 0 : index
    %25 = vector.load %arg5[%c0_14, %c0_15] : memref<32x32xf32, #tpu.memory_space<vmem>>, vector<32x32xf32>
    %cst_16 = arith.constant dense<0.000000e+00> : vector<16x32xf32>
    %26 = tpu.matmul %24, %25, %cst_16 {dimension_numbers = #tpu.dot_dimension_numbers<[1], [0], [0], [1], [0, 0, 1, 1], [], []>} : vector<16x32xf32>, vector<32x32xf32>, vector<16x32xf32> -> vector<16x32xf32>
    %c0_17 = arith.constant 0 : index
    %c0_18 = arith.constant 0 : index
    %27 = vector.load %arg6[%c0_17, %c0_18] : memref<1x32xf32, #tpu.memory_space<vmem>>, vector<1x32xf32>
    %28 = vector.broadcast %27 : vector<1x32xf32> to vector<16x32xf32>
    %29 = arith.addf %26, %28 : vector<16x32xf32>
    %cst_19 = arith.constant 0.000000e+00 : f32
    %30 = vector.broadcast %cst_19 : f32 to vector<16x32xf32>
    %31 = arith.maximumf %29, %30 : vector<16x32xf32>
    %c0_20 = arith.constant 0 : index
    %c0_21 = arith.constant 0 : index
    %32 = vector.load %arg7[%c0_20, %c0_21] : memref<32x32xf32, #tpu.memory_space<vmem>>, vector<32x32xf32>
    %cst_22 = arith.constant dense<0.000000e+00> : vector<16x32xf32>
    %33 = tpu.matmul %24, %32, %cst_22 {dimension_numbers = #tpu.dot_dimension_numbers<[1], [0], [0], [1], [0, 0, 1, 1], [], []>} : vector<16x32xf32>, vector<32x32xf32>, vector<16x32xf32> -> vector<16x32xf32>
    %c0_23 = arith.constant 0 : index
    %c0_24 = arith.constant 0 : index
    %34 = vector.load %arg8[%c0_23, %c0_24] : memref<1x32xf32, #tpu.memory_space<vmem>>, vector<1x32xf32>
    %35 = vector.broadcast %34 : vector<1x32xf32> to vector<16x32xf32>
    %36 = arith.addf %33, %35 : vector<16x32xf32>
    %cst_25 = arith.constant 0.000000e+00 : f32
    %37 = vector.broadcast %cst_25 : f32 to vector<16x32xf32>
    %38 = arith.maximumf %36, %37 : vector<16x32xf32>
    %39 = vector.extract_strided_slice %31 {offsets = [0, 0], sizes = [8, 32], strides = [1, 1]} : vector<16x32xf32> to vector<8x32xf32>
    %cst_26 = arith.constant dense<0.000000e+00> : vector<8x32xf32>
    %40 = tpu.matmul %15, %39, %cst_26 {dimension_numbers = #tpu.dot_dimension_numbers<[1], [0], [0], [1], [0, 0, 1, 1], [], []>} : vector<8x8xf32>, vector<8x32xf32>, vector<8x32xf32> -> vector<8x32xf32>
    %41 = vector.extract_strided_slice %38 {offsets = [0, 0], sizes = [8, 32], strides = [1, 1]} : vector<16x32xf32> to vector<8x32xf32>
    %42 = arith.addf %40, %41 : vector<8x32xf32>
    %43 = vector.extract_strided_slice %31 {offsets = [8, 0], sizes = [8, 32], strides = [1, 1]} : vector<16x32xf32> to vector<8x32xf32>
    %cst_27 = arith.constant dense<0.000000e+00> : vector<8x32xf32>
    %44 = tpu.matmul %23, %43, %cst_27 {dimension_numbers = #tpu.dot_dimension_numbers<[1], [0], [0], [1], [0, 0, 1, 1], [], []>} : vector<8x8xf32>, vector<8x32xf32>, vector<8x32xf32> -> vector<8x32xf32>
    %45 = vector.extract_strided_slice %38 {offsets = [8, 0], sizes = [8, 32], strides = [1, 1]} : vector<16x32xf32> to vector<8x32xf32>
    %46 = arith.addf %44, %45 : vector<8x32xf32>
    %c0_28 = arith.constant 0 : index
    %c0_29 = arith.constant 0 : index
    %47 = vector.load %arg9[%c0_28, %c0_29] : memref<32x32xf32, #tpu.memory_space<vmem>>, vector<32x32xf32>
    %cst_30 = arith.constant dense<0.000000e+00> : vector<8x32xf32>
    %48 = tpu.matmul %42, %47, %cst_30 {dimension_numbers = #tpu.dot_dimension_numbers<[1], [0], [0], [1], [0, 0, 1, 1], [], []>} : vector<8x32xf32>, vector<32x32xf32>, vector<8x32xf32> -> vector<8x32xf32>
    %49 = tpu.transpose %46, [1, 0] : vector<8x32xf32> -> vector<32x8xf32>
    %cst_31 = arith.constant dense<0.000000e+00> : vector<8x8xf32>
    %50 = tpu.matmul %48, %49, %cst_31 {dimension_numbers = #tpu.dot_dimension_numbers<[1], [0], [0], [1], [0, 0, 1, 1], [], []>} : vector<8x32xf32>, vector<32x8xf32>, vector<8x8xf32> -> vector<8x8xf32>
    %cst_32 = arith.constant 2.000000e+01 : f32
    %51 = vector.broadcast %cst_32 : f32 to vector<8x8xf32>
    %52 = arith.mulf %50, %51 : vector<8x8xf32>
    %cst_33 = arith.constant dense<0xFF800000> : vector<8xf32>
    %53 = vector.multi_reduction <maximumf>, %52, %cst_33 [1] : vector<8x8xf32> to vector<8xf32>
    %54 = vector.shape_cast %53 : vector<8xf32> to vector<8x1xf32>
    %55 = vector.broadcast %54 : vector<8x1xf32> to vector<8x8xf32>
    %56 = arith.subf %52, %55 : vector<8x8xf32>
    %57 = math.exp %56 : vector<8x8xf32>
    %cst_34 = arith.constant dense<0.000000e+00> : vector<8xf32>
    %58 = vector.multi_reduction <add>, %57, %cst_34 [1] : vector<8x8xf32> to vector<8xf32>
    %59 = vector.shape_cast %58 : vector<8xf32> to vector<8x1xf32>
    %60 = math.log %59 : vector<8x1xf32>
    %61 = arith.addf %54, %60 : vector<8x1xf32>
    %62 = vector.broadcast %61 : vector<8x1xf32> to vector<8x8xf32>
    %63 = arith.subf %52, %62 : vector<8x8xf32>
    %cst_35 = arith.constant dense<0xFF800000> : vector<8xf32>
    %64 = vector.multi_reduction <maximumf>, %63, %cst_35 [0] : vector<8x8xf32> to vector<8xf32>
    %65 = vector.shape_cast %64 : vector<8xf32> to vector<1x8xf32>
    %66 = vector.broadcast %65 : vector<1x8xf32> to vector<8x8xf32>
    %67 = arith.subf %63, %66 : vector<8x8xf32>
    %68 = math.exp %67 : vector<8x8xf32>
    %cst_36 = arith.constant dense<0.000000e+00> : vector<8xf32>
    %69 = vector.multi_reduction <add>, %68, %cst_36 [0] : vector<8x8xf32> to vector<8xf32>
    %70 = vector.shape_cast %69 : vector<8xf32> to vector<1x8xf32>
    %71 = math.log %70 : vector<1x8xf32>
    %72 = arith.addf %65, %71 : vector<1x8xf32>
    %73 = vector.broadcast %72 : vector<1x8xf32> to vector<8x8xf32>
    %74 = arith.subf %63, %73 : vector<8x8xf32>
    %cst_37 = arith.constant dense<0xFF800000> : vector<8xf32>
    %75 = vector.multi_reduction <maximumf>, %74, %cst_37 [1] : vector<8x8xf32> to vector<8xf32>
    %76 = vector.shape_cast %75 : vector<8xf32> to vector<8x1xf32>
    %77 = vector.broadcast %76 : vector<8x1xf32> to vector<8x8xf32>
    %78 = arith.subf %74, %77 : vector<8x8xf32>
    %79 = math.exp %78 : vector<8x8xf32>
    %cst_38 = arith.constant dense<0.000000e+00> : vector<8xf32>
    %80 = vector.multi_reduction <add>, %79, %cst_38 [1] : vector<8x8xf32> to vector<8xf32>
    %81 = vector.shape_cast %80 : vector<8xf32> to vector<8x1xf32>
    %82 = math.log %81 : vector<8x1xf32>
    %83 = arith.addf %76, %82 : vector<8x1xf32>
    %84 = vector.broadcast %83 : vector<8x1xf32> to vector<8x8xf32>
    %85 = arith.subf %74, %84 : vector<8x8xf32>
    %cst_39 = arith.constant dense<0xFF800000> : vector<8xf32>
    %86 = vector.multi_reduction <maximumf>, %85, %cst_39 [0] : vector<8x8xf32> to vector<8xf32>
    %87 = vector.shape_cast %86 : vector<8xf32> to vector<1x8xf32>
    %88 = vector.broadcast %87 : vector<1x8xf32> to vector<8x8xf32>
    %89 = arith.subf %85, %88 : vector<8x8xf32>
    %90 = math.exp %89 : vector<8x8xf32>
    %cst_40 = arith.constant dense<0.000000e+00> : vector<8xf32>
    %91 = vector.multi_reduction <add>, %90, %cst_40 [0] : vector<8x8xf32> to vector<8xf32>
    %92 = vector.shape_cast %91 : vector<8xf32> to vector<1x8xf32>
    %93 = math.log %92 : vector<1x8xf32>
    %94 = arith.addf %87, %93 : vector<1x8xf32>
    %95 = vector.broadcast %94 : vector<1x8xf32> to vector<8x8xf32>
    %96 = arith.subf %85, %95 : vector<8x8xf32>
    %cst_41 = arith.constant dense<0xFF800000> : vector<8xf32>
    %97 = vector.multi_reduction <maximumf>, %96, %cst_41 [1] : vector<8x8xf32> to vector<8xf32>
    %98 = vector.shape_cast %97 : vector<8xf32> to vector<8x1xf32>
    %99 = vector.broadcast %98 : vector<8x1xf32> to vector<8x8xf32>
    %100 = arith.subf %96, %99 : vector<8x8xf32>
    %101 = math.exp %100 : vector<8x8xf32>
    %cst_42 = arith.constant dense<0.000000e+00> : vector<8xf32>
    %102 = vector.multi_reduction <add>, %101, %cst_42 [1] : vector<8x8xf32> to vector<8xf32>
    %103 = vector.shape_cast %102 : vector<8xf32> to vector<8x1xf32>
    %104 = math.log %103 : vector<8x1xf32>
    %105 = arith.addf %98, %104 : vector<8x1xf32>
    %106 = vector.broadcast %105 : vector<8x1xf32> to vector<8x8xf32>
    %107 = arith.subf %96, %106 : vector<8x8xf32>
    %cst_43 = arith.constant dense<0xFF800000> : vector<8xf32>
    %108 = vector.multi_reduction <maximumf>, %107, %cst_43 [0] : vector<8x8xf32> to vector<8xf32>
    %109 = vector.shape_cast %108 : vector<8xf32> to vector<1x8xf32>
    %110 = vector.broadcast %109 : vector<1x8xf32> to vector<8x8xf32>
    %111 = arith.subf %107, %110 : vector<8x8xf32>
    %112 = math.exp %111 : vector<8x8xf32>
    %cst_44 = arith.constant dense<0.000000e+00> : vector<8xf32>
    %113 = vector.multi_reduction <add>, %112, %cst_44 [0] : vector<8x8xf32> to vector<8xf32>
    %114 = vector.shape_cast %113 : vector<8xf32> to vector<1x8xf32>
    %115 = math.log %114 : vector<1x8xf32>
    %116 = arith.addf %109, %115 : vector<1x8xf32>
    %117 = vector.broadcast %116 : vector<1x8xf32> to vector<8x8xf32>
    %118 = arith.subf %107, %117 : vector<8x8xf32>
    %cst_45 = arith.constant dense<0xFF800000> : vector<8xf32>
    %119 = vector.multi_reduction <maximumf>, %118, %cst_45 [1] : vector<8x8xf32> to vector<8xf32>
    %120 = vector.shape_cast %119 : vector<8xf32> to vector<8x1xf32>
    %121 = vector.broadcast %120 : vector<8x1xf32> to vector<8x8xf32>
    %122 = arith.subf %118, %121 : vector<8x8xf32>
    %123 = math.exp %122 : vector<8x8xf32>
    %cst_46 = arith.constant dense<0.000000e+00> : vector<8xf32>
    %124 = vector.multi_reduction <add>, %123, %cst_46 [1] : vector<8x8xf32> to vector<8xf32>
    %125 = vector.shape_cast %124 : vector<8xf32> to vector<8x1xf32>
    %126 = math.log %125 : vector<8x1xf32>
    %127 = arith.addf %120, %126 : vector<8x1xf32>
    %128 = vector.broadcast %127 : vector<8x1xf32> to vector<8x8xf32>
    %129 = arith.subf %118, %128 : vector<8x8xf32>
    %cst_47 = arith.constant dense<0xFF800000> : vector<8xf32>
    %130 = vector.multi_reduction <maximumf>, %129, %cst_47 [0] : vector<8x8xf32> to vector<8xf32>
    %131 = vector.shape_cast %130 : vector<8xf32> to vector<1x8xf32>
    %132 = vector.broadcast %131 : vector<1x8xf32> to vector<8x8xf32>
    %133 = arith.subf %129, %132 : vector<8x8xf32>
    %134 = math.exp %133 : vector<8x8xf32>
    %cst_48 = arith.constant dense<0.000000e+00> : vector<8xf32>
    %135 = vector.multi_reduction <add>, %134, %cst_48 [0] : vector<8x8xf32> to vector<8xf32>
    %136 = vector.shape_cast %135 : vector<8xf32> to vector<1x8xf32>
    %137 = math.log %136 : vector<1x8xf32>
    %138 = arith.addf %131, %137 : vector<1x8xf32>
    %139 = vector.broadcast %138 : vector<1x8xf32> to vector<8x8xf32>
    %140 = arith.subf %129, %139 : vector<8x8xf32>
    %cst_49 = arith.constant dense<0xFF800000> : vector<8xf32>
    %141 = vector.multi_reduction <maximumf>, %140, %cst_49 [1] : vector<8x8xf32> to vector<8xf32>
    %142 = vector.shape_cast %141 : vector<8xf32> to vector<8x1xf32>
    %143 = vector.broadcast %142 : vector<8x1xf32> to vector<8x8xf32>
    %144 = arith.subf %140, %143 : vector<8x8xf32>
    %145 = math.exp %144 : vector<8x8xf32>
    %cst_50 = arith.constant dense<0.000000e+00> : vector<8xf32>
    %146 = vector.multi_reduction <add>, %145, %cst_50 [1] : vector<8x8xf32> to vector<8xf32>
    %147 = vector.shape_cast %146 : vector<8xf32> to vector<8x1xf32>
    %148 = math.log %147 : vector<8x1xf32>
    %149 = arith.addf %142, %148 : vector<8x1xf32>
    %150 = vector.broadcast %149 : vector<8x1xf32> to vector<8x8xf32>
    %151 = arith.subf %140, %150 : vector<8x8xf32>
    %cst_51 = arith.constant dense<0xFF800000> : vector<8xf32>
    %152 = vector.multi_reduction <maximumf>, %151, %cst_51 [0] : vector<8x8xf32> to vector<8xf32>
    %153 = vector.shape_cast %152 : vector<8xf32> to vector<1x8xf32>
    %154 = vector.broadcast %153 : vector<1x8xf32> to vector<8x8xf32>
    %155 = arith.subf %151, %154 : vector<8x8xf32>
    %156 = math.exp %155 : vector<8x8xf32>
    %cst_52 = arith.constant dense<0.000000e+00> : vector<8xf32>
    %157 = vector.multi_reduction <add>, %156, %cst_52 [0] : vector<8x8xf32> to vector<8xf32>
    %158 = vector.shape_cast %157 : vector<8xf32> to vector<1x8xf32>
    %159 = math.log %158 : vector<1x8xf32>
    %160 = arith.addf %153, %159 : vector<1x8xf32>
    %161 = vector.broadcast %160 : vector<1x8xf32> to vector<8x8xf32>
    %162 = arith.subf %151, %161 : vector<8x8xf32>
    %163 = math.exp %162 : vector<8x8xf32>
    %cst_53 = arith.constant dense<0.000000e+00> : vector<8x32xf32>
    %164 = tpu.matmul %163, %46, %cst_53 {dimension_numbers = #tpu.dot_dimension_numbers<[1], [0], [0], [1], [0, 0, 1, 1], [], []>} : vector<8x8xf32>, vector<8x32xf32>, vector<8x32xf32> -> vector<8x32xf32>
    %165 = tpu.transpose %163, [1, 0] : vector<8x8xf32> -> vector<8x8xf32>
    %cst_54 = arith.constant dense<0.000000e+00> : vector<8x32xf32>
    %166 = tpu.matmul %165, %42, %cst_54 {dimension_numbers = #tpu.dot_dimension_numbers<[1], [0], [0], [1], [0, 0, 1, 1], [], []>} : vector<8x8xf32>, vector<8x32xf32>, vector<8x32xf32> -> vector<8x32xf32>
    %c0_55 = arith.constant 0 : index
    %c0_56 = arith.constant 0 : index
    %167 = vector.load %arg15[%c0_55, %c0_56] : memref<32x32xf32, #tpu.memory_space<vmem>>, vector<32x32xf32>
    %c0_57 = arith.constant 0 : index
    %c0_58 = arith.constant 0 : index
    %168 = vector.load %arg16[%c0_57, %c0_58] : memref<32x32xf32, #tpu.memory_space<vmem>>, vector<32x32xf32>
    %c0_59 = arith.constant 0 : index
    %c0_60 = arith.constant 0 : index
    %169 = vector.load %arg17[%c0_59, %c0_60] : memref<1x32xf32, #tpu.memory_space<vmem>>, vector<1x32xf32>
    %cst_61 = arith.constant dense<0.000000e+00> : vector<8x32xf32>
    %170 = tpu.matmul %42, %167, %cst_61 {dimension_numbers = #tpu.dot_dimension_numbers<[1], [0], [0], [1], [0, 0, 1, 1], [], []>} : vector<8x32xf32>, vector<32x32xf32>, vector<8x32xf32> -> vector<8x32xf32>
    %cst_62 = arith.constant dense<0.000000e+00> : vector<8x32xf32>
    %171 = tpu.matmul %164, %168, %cst_62 {dimension_numbers = #tpu.dot_dimension_numbers<[1], [0], [0], [1], [0, 0, 1, 1], [], []>} : vector<8x32xf32>, vector<32x32xf32>, vector<8x32xf32> -> vector<8x32xf32>
    %172 = arith.addf %170, %171 : vector<8x32xf32>
    %173 = vector.broadcast %169 : vector<1x32xf32> to vector<8x32xf32>
    %174 = arith.addf %172, %173 : vector<8x32xf32>
    %cst_63 = arith.constant dense<0.000000e+00> : vector<8x32xf32>
    %175 = tpu.matmul %46, %167, %cst_63 {dimension_numbers = #tpu.dot_dimension_numbers<[1], [0], [0], [1], [0, 0, 1, 1], [], []>} : vector<8x32xf32>, vector<32x32xf32>, vector<8x32xf32> -> vector<8x32xf32>
    %cst_64 = arith.constant dense<0.000000e+00> : vector<8x32xf32>
    %176 = tpu.matmul %166, %168, %cst_64 {dimension_numbers = #tpu.dot_dimension_numbers<[1], [0], [0], [1], [0, 0, 1, 1], [], []>} : vector<8x32xf32>, vector<32x32xf32>, vector<8x32xf32> -> vector<8x32xf32>
    %177 = arith.addf %175, %176 : vector<8x32xf32>
    %178 = vector.broadcast %169 : vector<1x32xf32> to vector<8x32xf32>
    %179 = arith.addf %177, %178 : vector<8x32xf32>
    %180 = tpu.concatenate %174, %179 in 0 : vector<8x32xf32>, vector<8x32xf32> -> vector<16x32xf32>
    %c0_65 = arith.constant 0 : index
    %c0_66 = arith.constant 0 : index
    %181 = vector.load %arg10[%c0_65, %c0_66] : memref<32x32xf32, #tpu.memory_space<vmem>>, vector<32x32xf32>
    %cst_67 = arith.constant dense<0.000000e+00> : vector<16x32xf32>
    %182 = tpu.matmul %180, %181, %cst_67 {dimension_numbers = #tpu.dot_dimension_numbers<[1], [0], [0], [1], [0, 0, 1, 1], [], []>} : vector<16x32xf32>, vector<32x32xf32>, vector<16x32xf32> -> vector<16x32xf32>
    %c0_68 = arith.constant 0 : index
    %c0_69 = arith.constant 0 : index
    %183 = vector.load %arg11[%c0_68, %c0_69] : memref<1x32xf32, #tpu.memory_space<vmem>>, vector<1x32xf32>
    %184 = vector.broadcast %183 : vector<1x32xf32> to vector<16x32xf32>
    %185 = arith.addf %182, %184 : vector<16x32xf32>
    %cst_70 = arith.constant 0.000000e+00 : f32
    %186 = vector.broadcast %cst_70 : f32 to vector<16x32xf32>
    %187 = arith.maximumf %185, %186 : vector<16x32xf32>
    %c0_71 = arith.constant 0 : index
    %c0_72 = arith.constant 0 : index
    %188 = vector.load %arg12[%c0_71, %c0_72] : memref<32x32xf32, #tpu.memory_space<vmem>>, vector<32x32xf32>
    %cst_73 = arith.constant dense<0.000000e+00> : vector<16x32xf32>
    %189 = tpu.matmul %180, %188, %cst_73 {dimension_numbers = #tpu.dot_dimension_numbers<[1], [0], [0], [1], [0, 0, 1, 1], [], []>} : vector<16x32xf32>, vector<32x32xf32>, vector<16x32xf32> -> vector<16x32xf32>
    %c0_74 = arith.constant 0 : index
    %c0_75 = arith.constant 0 : index
    %190 = vector.load %arg13[%c0_74, %c0_75] : memref<1x32xf32, #tpu.memory_space<vmem>>, vector<1x32xf32>
    %191 = vector.broadcast %190 : vector<1x32xf32> to vector<16x32xf32>
    %192 = arith.addf %189, %191 : vector<16x32xf32>
    %cst_76 = arith.constant 0.000000e+00 : f32
    %193 = vector.broadcast %cst_76 : f32 to vector<16x32xf32>
    %194 = arith.maximumf %192, %193 : vector<16x32xf32>
    %195 = vector.extract_strided_slice %187 {offsets = [0, 0], sizes = [8, 32], strides = [1, 1]} : vector<16x32xf32> to vector<8x32xf32>
    %cst_77 = arith.constant dense<0.000000e+00> : vector<8x32xf32>
    %196 = tpu.matmul %15, %195, %cst_77 {dimension_numbers = #tpu.dot_dimension_numbers<[1], [0], [0], [1], [0, 0, 1, 1], [], []>} : vector<8x8xf32>, vector<8x32xf32>, vector<8x32xf32> -> vector<8x32xf32>
    %197 = vector.extract_strided_slice %194 {offsets = [0, 0], sizes = [8, 32], strides = [1, 1]} : vector<16x32xf32> to vector<8x32xf32>
    %198 = arith.addf %196, %197 : vector<8x32xf32>
    %199 = vector.extract_strided_slice %187 {offsets = [8, 0], sizes = [8, 32], strides = [1, 1]} : vector<16x32xf32> to vector<8x32xf32>
    %cst_78 = arith.constant dense<0.000000e+00> : vector<8x32xf32>
    %200 = tpu.matmul %23, %199, %cst_78 {dimension_numbers = #tpu.dot_dimension_numbers<[1], [0], [0], [1], [0, 0, 1, 1], [], []>} : vector<8x8xf32>, vector<8x32xf32>, vector<8x32xf32> -> vector<8x32xf32>
    %201 = vector.extract_strided_slice %194 {offsets = [8, 0], sizes = [8, 32], strides = [1, 1]} : vector<16x32xf32> to vector<8x32xf32>
    %202 = arith.addf %200, %201 : vector<8x32xf32>
    %c0_79 = arith.constant 0 : index
    %c0_80 = arith.constant 0 : index
    %203 = vector.load %arg14[%c0_79, %c0_80] : memref<32x32xf32, #tpu.memory_space<vmem>>, vector<32x32xf32>
    %cst_81 = arith.constant dense<0.000000e+00> : vector<8x32xf32>
    %204 = tpu.matmul %198, %203, %cst_81 {dimension_numbers = #tpu.dot_dimension_numbers<[1], [0], [0], [1], [0, 0, 1, 1], [], []>} : vector<8x32xf32>, vector<32x32xf32>, vector<8x32xf32> -> vector<8x32xf32>
    %205 = tpu.transpose %202, [1, 0] : vector<8x32xf32> -> vector<32x8xf32>
    %cst_82 = arith.constant dense<0.000000e+00> : vector<8x8xf32>
    %206 = tpu.matmul %204, %205, %cst_82 {dimension_numbers = #tpu.dot_dimension_numbers<[1], [0], [0], [1], [0, 0, 1, 1], [], []>} : vector<8x32xf32>, vector<32x8xf32>, vector<8x8xf32> -> vector<8x8xf32>
    %cst_83 = arith.constant 2.000000e+01 : f32
    %207 = vector.broadcast %cst_83 : f32 to vector<8x8xf32>
    %208 = arith.mulf %206, %207 : vector<8x8xf32>
    %cst_84 = arith.constant dense<0xFF800000> : vector<8xf32>
    %209 = vector.multi_reduction <maximumf>, %208, %cst_84 [1] : vector<8x8xf32> to vector<8xf32>
    %210 = vector.shape_cast %209 : vector<8xf32> to vector<8x1xf32>
    %211 = vector.broadcast %210 : vector<8x1xf32> to vector<8x8xf32>
    %212 = arith.subf %208, %211 : vector<8x8xf32>
    %213 = math.exp %212 : vector<8x8xf32>
    %cst_85 = arith.constant dense<0.000000e+00> : vector<8xf32>
    %214 = vector.multi_reduction <add>, %213, %cst_85 [1] : vector<8x8xf32> to vector<8xf32>
    %215 = vector.shape_cast %214 : vector<8xf32> to vector<8x1xf32>
    %216 = math.log %215 : vector<8x1xf32>
    %217 = arith.addf %210, %216 : vector<8x1xf32>
    %218 = vector.broadcast %217 : vector<8x1xf32> to vector<8x8xf32>
    %219 = arith.subf %208, %218 : vector<8x8xf32>
    %cst_86 = arith.constant dense<0xFF800000> : vector<8xf32>
    %220 = vector.multi_reduction <maximumf>, %219, %cst_86 [0] : vector<8x8xf32> to vector<8xf32>
    %221 = vector.shape_cast %220 : vector<8xf32> to vector<1x8xf32>
    %222 = vector.broadcast %221 : vector<1x8xf32> to vector<8x8xf32>
    %223 = arith.subf %219, %222 : vector<8x8xf32>
    %224 = math.exp %223 : vector<8x8xf32>
    %cst_87 = arith.constant dense<0.000000e+00> : vector<8xf32>
    %225 = vector.multi_reduction <add>, %224, %cst_87 [0] : vector<8x8xf32> to vector<8xf32>
    %226 = vector.shape_cast %225 : vector<8xf32> to vector<1x8xf32>
    %227 = math.log %226 : vector<1x8xf32>
    %228 = arith.addf %221, %227 : vector<1x8xf32>
    %229 = vector.broadcast %228 : vector<1x8xf32> to vector<8x8xf32>
    %230 = arith.subf %219, %229 : vector<8x8xf32>
    %cst_88 = arith.constant dense<0xFF800000> : vector<8xf32>
    %231 = vector.multi_reduction <maximumf>, %230, %cst_88 [1] : vector<8x8xf32> to vector<8xf32>
    %232 = vector.shape_cast %231 : vector<8xf32> to vector<8x1xf32>
    %233 = vector.broadcast %232 : vector<8x1xf32> to vector<8x8xf32>
    %234 = arith.subf %230, %233 : vector<8x8xf32>
    %235 = math.exp %234 : vector<8x8xf32>
    %cst_89 = arith.constant dense<0.000000e+00> : vector<8xf32>
    %236 = vector.multi_reduction <add>, %235, %cst_89 [1] : vector<8x8xf32> to vector<8xf32>
    %237 = vector.shape_cast %236 : vector<8xf32> to vector<8x1xf32>
    %238 = math.log %237 : vector<8x1xf32>
    %239 = arith.addf %232, %238 : vector<8x1xf32>
    %240 = vector.broadcast %239 : vector<8x1xf32> to vector<8x8xf32>
    %241 = arith.subf %230, %240 : vector<8x8xf32>
    %cst_90 = arith.constant dense<0xFF800000> : vector<8xf32>
    %242 = vector.multi_reduction <maximumf>, %241, %cst_90 [0] : vector<8x8xf32> to vector<8xf32>
    %243 = vector.shape_cast %242 : vector<8xf32> to vector<1x8xf32>
    %244 = vector.broadcast %243 : vector<1x8xf32> to vector<8x8xf32>
    %245 = arith.subf %241, %244 : vector<8x8xf32>
    %246 = math.exp %245 : vector<8x8xf32>
    %cst_91 = arith.constant dense<0.000000e+00> : vector<8xf32>
    %247 = vector.multi_reduction <add>, %246, %cst_91 [0] : vector<8x8xf32> to vector<8xf32>
    %248 = vector.shape_cast %247 : vector<8xf32> to vector<1x8xf32>
    %249 = math.log %248 : vector<1x8xf32>
    %250 = arith.addf %243, %249 : vector<1x8xf32>
    %251 = vector.broadcast %250 : vector<1x8xf32> to vector<8x8xf32>
    %252 = arith.subf %241, %251 : vector<8x8xf32>
    %cst_92 = arith.constant dense<0xFF800000> : vector<8xf32>
    %253 = vector.multi_reduction <maximumf>, %252, %cst_92 [1] : vector<8x8xf32> to vector<8xf32>
    %254 = vector.shape_cast %253 : vector<8xf32> to vector<8x1xf32>
    %255 = vector.broadcast %254 : vector<8x1xf32> to vector<8x8xf32>
    %256 = arith.subf %252, %255 : vector<8x8xf32>
    %257 = math.exp %256 : vector<8x8xf32>
    %cst_93 = arith.constant dense<0.000000e+00> : vector<8xf32>
    %258 = vector.multi_reduction <add>, %257, %cst_93 [1] : vector<8x8xf32> to vector<8xf32>
    %259 = vector.shape_cast %258 : vector<8xf32> to vector<8x1xf32>
    %260 = math.log %259 : vector<8x1xf32>
    %261 = arith.addf %254, %260 : vector<8x1xf32>
    %262 = vector.broadcast %261 : vector<8x1xf32> to vector<8x8xf32>
    %263 = arith.subf %252, %262 : vector<8x8xf32>
    %cst_94 = arith.constant dense<0xFF800000> : vector<8xf32>
    %264 = vector.multi_reduction <maximumf>, %263, %cst_94 [0] : vector<8x8xf32> to vector<8xf32>
    %265 = vector.shape_cast %264 : vector<8xf32> to vector<1x8xf32>
    %266 = vector.broadcast %265 : vector<1x8xf32> to vector<8x8xf32>
    %267 = arith.subf %263, %266 : vector<8x8xf32>
    %268 = math.exp %267 : vector<8x8xf32>
    %cst_95 = arith.constant dense<0.000000e+00> : vector<8xf32>
    %269 = vector.multi_reduction <add>, %268, %cst_95 [0] : vector<8x8xf32> to vector<8xf32>
    %270 = vector.shape_cast %269 : vector<8xf32> to vector<1x8xf32>
    %271 = math.log %270 : vector<1x8xf32>
    %272 = arith.addf %265, %271 : vector<1x8xf32>
    %273 = vector.broadcast %272 : vector<1x8xf32> to vector<8x8xf32>
    %274 = arith.subf %263, %273 : vector<8x8xf32>
    %cst_96 = arith.constant dense<0xFF800000> : vector<8xf32>
    %275 = vector.multi_reduction <maximumf>, %274, %cst_96 [1] : vector<8x8xf32> to vector<8xf32>
    %276 = vector.shape_cast %275 : vector<8xf32> to vector<8x1xf32>
    %277 = vector.broadcast %276 : vector<8x1xf32> to vector<8x8xf32>
    %278 = arith.subf %274, %277 : vector<8x8xf32>
    %279 = math.exp %278 : vector<8x8xf32>
    %cst_97 = arith.constant dense<0.000000e+00> : vector<8xf32>
    %280 = vector.multi_reduction <add>, %279, %cst_97 [1] : vector<8x8xf32> to vector<8xf32>
    %281 = vector.shape_cast %280 : vector<8xf32> to vector<8x1xf32>
    %282 = math.log %281 : vector<8x1xf32>
    %283 = arith.addf %276, %282 : vector<8x1xf32>
    %284 = vector.broadcast %283 : vector<8x1xf32> to vector<8x8xf32>
    %285 = arith.subf %274, %284 : vector<8x8xf32>
    %cst_98 = arith.constant dense<0xFF800000> : vector<8xf32>
    %286 = vector.multi_reduction <maximumf>, %285, %cst_98 [0] : vector<8x8xf32> to vector<8xf32>
    %287 = vector.shape_cast %286 : vector<8xf32> to vector<1x8xf32>
    %288 = vector.broadcast %287 : vector<1x8xf32> to vector<8x8xf32>
    %289 = arith.subf %285, %288 : vector<8x8xf32>
    %290 = math.exp %289 : vector<8x8xf32>
    %cst_99 = arith.constant dense<0.000000e+00> : vector<8xf32>
    %291 = vector.multi_reduction <add>, %290, %cst_99 [0] : vector<8x8xf32> to vector<8xf32>
    %292 = vector.shape_cast %291 : vector<8xf32> to vector<1x8xf32>
    %293 = math.log %292 : vector<1x8xf32>
    %294 = arith.addf %287, %293 : vector<1x8xf32>
    %295 = vector.broadcast %294 : vector<1x8xf32> to vector<8x8xf32>
    %296 = arith.subf %285, %295 : vector<8x8xf32>
    %cst_100 = arith.constant dense<0xFF800000> : vector<8xf32>
    %297 = vector.multi_reduction <maximumf>, %296, %cst_100 [1] : vector<8x8xf32> to vector<8xf32>
    %298 = vector.shape_cast %297 : vector<8xf32> to vector<8x1xf32>
    %299 = vector.broadcast %298 : vector<8x1xf32> to vector<8x8xf32>
    %300 = arith.subf %296, %299 : vector<8x8xf32>
    %301 = math.exp %300 : vector<8x8xf32>
    %cst_101 = arith.constant dense<0.000000e+00> : vector<8xf32>
    %302 = vector.multi_reduction <add>, %301, %cst_101 [1] : vector<8x8xf32> to vector<8xf32>
    %303 = vector.shape_cast %302 : vector<8xf32> to vector<8x1xf32>
    %304 = math.log %303 : vector<8x1xf32>
    %305 = arith.addf %298, %304 : vector<8x1xf32>
    %306 = vector.broadcast %305 : vector<8x1xf32> to vector<8x8xf32>
    %307 = arith.subf %296, %306 : vector<8x8xf32>
    %cst_102 = arith.constant dense<0xFF800000> : vector<8xf32>
    %308 = vector.multi_reduction <maximumf>, %307, %cst_102 [0] : vector<8x8xf32> to vector<8xf32>
    %309 = vector.shape_cast %308 : vector<8xf32> to vector<1x8xf32>
    %310 = vector.broadcast %309 : vector<1x8xf32> to vector<8x8xf32>
    %311 = arith.subf %307, %310 : vector<8x8xf32>
    %312 = math.exp %311 : vector<8x8xf32>
    %cst_103 = arith.constant dense<0.000000e+00> : vector<8xf32>
    %313 = vector.multi_reduction <add>, %312, %cst_103 [0] : vector<8x8xf32> to vector<8xf32>
    %314 = vector.shape_cast %313 : vector<8xf32> to vector<1x8xf32>
    %315 = math.log %314 : vector<1x8xf32>
    %316 = arith.addf %309, %315 : vector<1x8xf32>
    %317 = vector.broadcast %316 : vector<1x8xf32> to vector<8x8xf32>
    %318 = arith.subf %307, %317 : vector<8x8xf32>
    %319 = math.exp %318 : vector<8x8xf32>
    %c0_104 = arith.constant 0 : index
    %c0_105 = arith.constant 0 : index
    %c0_106 = arith.constant 0 : index
    %320 = vector.load %arg18[%c0_104, %c0_105, %c0_106] : memref<1x8x8xf32, #tpu.memory_space<vmem>>, vector<1x8x8xf32>
    %321 = vector.shape_cast %320 : vector<1x8x8xf32> to vector<8x8xf32>
    %322 = vector.shape_cast %319 : vector<8x8xf32> to vector<1x8x8xf32>
    tpu.vector_store %arg18[%c0_104, %c0_105, %c0_106], %322 {strides = array<i32>} : memref<1x8x8xf32, #tpu.memory_space<vmem>>, vector<1x8x8xf32>,
    return
  }
  func.func @transform_0(%arg0: i32) -> (i32, i32, i32) {
    %c0_i32 = arith.constant 0 : i32
    %c0_i32_0 = arith.constant 0 : i32
    %c0_i32_1 = arith.constant 0 : i32
    return %arg0, %c0_i32, %c0_i32_0 : i32, i32, i32
  }
  func.func @transform_1(%arg0: i32) -> (i32, i32, i32) {
    %c0_i32 = arith.constant 0 : i32
    %c0_i32_0 = arith.constant 0 : i32
    %c0_i32_1 = arith.constant 0 : i32
    return %arg0, %c0_i32, %c0_i32_0 : i32, i32, i32
  }
  func.func @transform_2(%arg0: i32) -> (i32, i32, i32) {
    %c0_i32 = arith.constant 0 : i32
    %c0_i32_0 = arith.constant 0 : i32
    %c0_i32_1 = arith.constant 0 : i32
    return %arg0, %c0_i32, %c0_i32_0 : i32, i32, i32
  }
  func.func @transform_3(%arg0: i32) -> (i32, i32, i32) {
    %c0_i32 = arith.constant 0 : i32
    %c0_i32_0 = arith.constant 0 : i32
    %c0_i32_1 = arith.constant 0 : i32
    return %arg0, %c0_i32, %c0_i32_0 : i32, i32, i32
  }
  func.func @transform_4(%arg0: i32) -> (i32, i32) {
    %c0_i32 = arith.constant 0 : i32
    %c0_i32_0 = arith.constant 0 : i32
    %c0_i32_1 = arith.constant 0 : i32
    return %c0_i32, %c0_i32_0 : i32, i32
  }
  func.func @transform_5(%arg0: i32) -> (i32, i32) {
    %c0_i32 = arith.constant 0 : i32
    %c0_i32_0 = arith.constant 0 : i32
    %c0_i32_1 = arith.constant 0 : i32
    return %c0_i32, %c0_i32_0 : i32, i32
  }
  func.func @transform_6(%arg0: i32) -> (i32, i32) {
    %c0_i32 = arith.constant 0 : i32
    %c0_i32_0 = arith.constant 0 : i32
    %c0_i32_1 = arith.constant 0 : i32
    return %c0_i32, %c0_i32_0 : i32, i32
  }
  func.func @transform_7(%arg0: i32) -> (i32, i32) {
    %c0_i32 = arith.constant 0 : i32
    %c0_i32_0 = arith.constant 0 : i32
    %c0_i32_1 = arith.constant 0 : i32
    return %c0_i32, %c0_i32_0 : i32, i32
  }
  func.func @transform_8(%arg0: i32) -> (i32, i32) {
    %c0_i32 = arith.constant 0 : i32
    %c0_i32_0 = arith.constant 0 : i32
    %c0_i32_1 = arith.constant 0 : i32
    return %c0_i32, %c0_i32_0 : i32, i32
  }
  func.func @transform_9(%arg0: i32) -> (i32, i32) {
    %c0_i32 = arith.constant 0 : i32
    %c0_i32_0 = arith.constant 0 : i32
    %c0_i32_1 = arith.constant 0 : i32
    return %c0_i32, %c0_i32_0 : i32, i32
  }
  func.func @transform_10(%arg0: i32) -> (i32, i32) {
    %c0_i32 = arith.constant 0 : i32
    %c0_i32_0 = arith.constant 0 : i32
    %c0_i32_1 = arith.constant 0 : i32
    return %c0_i32, %c0_i32_0 : i32, i32
  }
  func.func @transform_11(%arg0: i32) -> (i32, i32) {
    %c0_i32 = arith.constant 0 : i32
    %c0_i32_0 = arith.constant 0 : i32
    %c0_i32_1 = arith.constant 0 : i32
    return %c0_i32, %c0_i32_0 : i32, i32
  }
  func.func @transform_12(%arg0: i32) -> (i32, i32) {
    %c0_i32 = arith.constant 0 : i32
    %c0_i32_0 = arith.constant 0 : i32
    %c0_i32_1 = arith.constant 0 : i32
    return %c0_i32, %c0_i32_0 : i32, i32
  }
  func.func @transform_13(%arg0: i32) -> (i32, i32) {
    %c0_i32 = arith.constant 0 : i32
    %c0_i32_0 = arith.constant 0 : i32
    %c0_i32_1 = arith.constant 0 : i32
    return %c0_i32, %c0_i32_0 : i32, i32
  }
  func.func @transform_14(%arg0: i32) -> (i32, i32) {
    %c0_i32 = arith.constant 0 : i32
    %c0_i32_0 = arith.constant 0 : i32
    %c0_i32_1 = arith.constant 0 : i32
    return %c0_i32, %c0_i32_0 : i32, i32
  }
  func.func @transform_15(%arg0: i32) -> (i32, i32) {
    %c0_i32 = arith.constant 0 : i32
    %c0_i32_0 = arith.constant 0 : i32
    %c0_i32_1 = arith.constant 0 : i32
    return %c0_i32, %c0_i32_0 : i32, i32
  }
  func.func @transform_16(%arg0: i32) -> (i32, i32) {
    %c0_i32 = arith.constant 0 : i32
    %c0_i32_0 = arith.constant 0 : i32
    %c0_i32_1 = arith.constant 0 : i32
    return %c0_i32, %c0_i32_0 : i32, i32
  }
  func.func @transform_17(%arg0: i32) -> (i32, i32, i32) {
    %c0_i32 = arith.constant 0 : i32
    %c0_i32_0 = arith.constant 0 : i32
    %c0_i32_1 = arith.constant 0 : i32
    return %arg0, %c0_i32, %c0_i32_0 : i32, i32, i32
  }
}

</mosaic_0001>

<llo_original>
// kernel: tpu_custom_call.1
$region0: #{tpu_custom_call.1}
  #allocation0 [shape = 'u32[]', space=smem, size = 0x4, offset = 0x4, fixed_abs, tag = 'smem constant byte address 0x4 - core index']
  #allocation1 [shape = 'u32[144,128]{1,0:T(1,128)}', space=vmem, size = 0x12000, scoped, tag = 'internal scratch']
  %s0 = inlined_call_operand.hbm [shape: f32[3,8,8], index: 0, kind: input, shape index: {}]
  %s1 = inlined_call_operand.hbm [shape: f32[3,8,8], index: 1, kind: input, shape index: {}]
  %s2 = inlined_call_operand.hbm [shape: f32[3,8,32], index: 2, kind: input, shape index: {}]
  %s3 = inlined_call_operand.hbm [shape: f32[3,8,32], index: 3, kind: input, shape index: {}]
  %s4 = inlined_call_operand.hbm [shape: f32[32,32], index: 4, kind: input, shape index: {}]
  %s5 = inlined_call_operand.vmem [shape: f32[1,32], index: 5, kind: input, shape index: {}]
  %s6 = inlined_call_operand.hbm [shape: f32[32,32], index: 6, kind: input, shape index: {}]
  %s7 = inlined_call_operand.vmem [shape: f32[1,32], index: 7, kind: input, shape index: {}]
  %s8 = inlined_call_operand.hbm [shape: f32[32,32], index: 8, kind: input, shape index: {}]
  %s9 = inlined_call_operand.vmem [shape: f32[32,32], index: 9, kind: input, shape index: {}]
  %s10 = inlined_call_operand.vmem [shape: f32[1,32], index: 10, kind: input, shape index: {}]
  %s11 = inlined_call_operand.hbm [shape: f32[32,32], index: 11, kind: input, shape index: {}]
  %s12 = inlined_call_operand.vmem [shape: f32[1,32], index: 12, kind: input, shape index: {}]
  %s13 = inlined_call_operand.hbm [shape: f32[32,32], index: 13, kind: input, shape index: {}]
  %s14 = inlined_call_operand.hbm [shape: f32[32,32], index: 14, kind: input, shape index: {}]
  %s15 = inlined_call_operand.hbm [shape: f32[32,32], index: 15, kind: input, shape index: {}]
  %s16 = inlined_call_operand.vmem [shape: f32[1,32], index: 16, kind: input, shape index: {}]
  %s17 = inlined_call_operand.hbm [shape: f32[3,8,8], index: 17, kind: output, shape index: {}]
  %s18 = sld [smem:[#allocation0]]
  $region145: #{tpu_custom_call.1} parent=0
    _
  %s20 = ssub.s32 1, %s18
  %s21 = scalar_select 0, %s20, %s18
  $region1: #{tpu_custom_call.1} parent=0
    #allocation2 [shape = 'u8[8192]{0}', space=vmem, size = 0x2000, scoped, tag = 'input window, operand 0']
    #allocation3 [shape = 's32[2]{0}', space=sflag, size = 0x8, scoped, tag = 'scoped memory for tpu_custom_call.1']
    #allocation4 [shape = 's32[2]{0}', space=sflag, size = 0x8, scoped, tag = 'scoped memory for tpu_custom_call.1']
    #allocation5 [shape = 'u8[8192]{0}', space=vmem, size = 0x2000, scoped, tag = 'input window, operand 1']
    #allocation6 [shape = 's32[2]{0}', space=sflag, size = 0x8, scoped, tag = 'scoped memory for tpu_custom_call.1']
    #allocation7 [shape = 'u8[8192]{0}', space=vmem, size = 0x2000, scoped, tag = 'input window, operand 2']
    #allocation8 [shape = 'u8[8192]{0}', space=vmem, size = 0x2000, scoped, tag = 'input window, operand 3']
    #allocation9 [shape = 's32[2]{0}', space=sflag, size = 0x8, scoped, tag = 'scoped memory for tpu_custom_call.1']
    #allocation10 [shape = 'u8[16384]{0}', space=vmem, size = 0x4000, scoped, tag = 'input window, operand 4, single buffered']
    #allocation11 [shape = 'u8[16384]{0}', space=vmem, size = 0x4000, scoped, tag = 'input window, operand 6, single buffered']
    #allocation12 [shape = 's32[1]{0}', space=sflag, size = 0x4, scoped, tag = 'scoped memory for tpu_custom_call.1']
    #allocation13 [shape = 'u8[16384]{0}', space=vmem, size = 0x4000, scoped, tag = 'input window, operand 8, single buffered']
    #allocation14 [shape = 'u8[16384]{0}', space=vmem, size = 0x4000, scoped, tag = 'input window, operand 11, single buffered']
    #allocation15 [shape = 's32[1]{0}', space=sflag, size = 0x4, scoped, tag = 'scoped memory for tpu_custom_call.1']
    #allocation16 [shape = 'u8[16384]{0}', space=vmem, size = 0x4000, scoped, tag = 'input window, operand 13, single buffered']
    #allocation17 [shape = 'u8[16384]{0}', space=vmem, size = 0x4000, scoped, tag = 'input window, operand 14, single buffered']
    #allocation18 [shape = 's32[1]{0}', space=sflag, size = 0x4, scoped, tag = 'scoped memory for tpu_custom_call.1']
    #allocation19 [shape = 'u8[16384]{0}', space=vmem, size = 0x4000, scoped, tag = 'input window, operand 15, single buffered']
    #allocation20 [shape = 'u8[8192]{0}', space=vmem, size = 0x2000, scoped, tag = 'output window, operand 0']
    %22 = vsyncpa [#allocation3], 0
    %s23 = scalar_lea.sflag [#allocation3], 1
    %24 = vsyncpa %s23, 0
    %25 = vsyncpa [#allocation6], 0
    %s26 = scalar_lea.sflag [#allocation6], 1
    %27 = vsyncpa %s26, 0
    %28 = vsyncpa [#allocation9], 0
    %s29 = scalar_lea.sflag [#allocation9], 1
    %30 = vsyncpa %s29, 0
    %31 = vsyncpa [#allocation12], 0
    %32 = vsyncpa [#allocation15], 0
    %33 = vsyncpa [#allocation18], 0
    %34 = vsyncpa [#allocation4], 0
    %s35 = scalar_lea.sflag [#allocation4], 1
    %36 = vsyncpa %s35, 0
    loop: start=0, step=1, limit=5
    $region2: #{tpu_custom_call.1} parent=1 // loop_pre_header
      _
    $region3: #{tpu_custom_call.1} parent=1 // loop_header
      %s38 = sphi 0, %s42
      %p39 = scmp.ge.s32.totalorder %s38, 5
      %s48 = sphi 0, %s50
      %s51 = sphi 0, %s48
      %s52 = sphi 0, %s51
      %s68 = sphi 0, %s52
      %s74 = sphi 0, %s76
      %s77 = sphi 0, %s74
      %s78 = sphi 0, %s77
      %s94 = sphi 0, %s78
      %s100 = sphi 0, %s102
      %s103 = sphi 0, %s100
      %s104 = sphi 0, %s103
      %s120 = sphi 0, %s104
      %s126 = sphi 0, %s128
      %s129 = sphi 0, %s126
      %s130 = sphi 0, %s129
      %s146 = sphi 0, %s130
      %s150 = sphi 0, %s150
      %s152 = sphi 0, %s150
      %s153 = sphi 0, %s152
      %s167 = sphi 0, %s153
      %s171 = sphi 0, %s171
      %s173 = sphi 0, %s171
      %s174 = sphi 0, %s173
      %s188 = sphi 0, %s174
      %s192 = sphi 0, %s192
      %s194 = sphi 0, %s192
      %s195 = sphi 0, %s194
      %s209 = sphi 0, %s195
      %s213 = sphi 0, %s213
      %s215 = sphi 0, %s213
      %s216 = sphi 0, %s215
      %s230 = sphi 0, %s216
      %s234 = sphi 0, %s234
      %s236 = sphi 0, %s234
      %s237 = sphi 0, %s236
      %s251 = sphi 0, %s237
      %s255 = sphi 0, %s255
      %s257 = sphi 0, %s255
      %s258 = sphi 0, %s257
      %s272 = sphi 0, %s258
      %s276 = sphi 0, %s276
      %s278 = sphi 0, %s276
      %s279 = sphi 0, %s278
      %s293 = sphi 0, %s279
      %s297 = sphi 0, %s297
      %s299 = sphi 0, %s297
      %s300 = sphi 0, %s299
      %s314 = sphi 0, %s300
      %s318 = sphi 0, %s318
      %s320 = sphi 0, %s318
      %s321 = sphi 0, %s320
      %s335 = sphi 0, %s321
      %s339 = sphi 0, %s339
      %s341 = sphi 0, %s339
      %s342 = sphi 0, %s341
      %s356 = sphi 0, %s342
      %s360 = sphi 0, %s360
      %s362 = sphi 0, %s360
      %s363 = sphi 0, %s362
      %s377 = sphi 0, %s363
      %s381 = sphi 0, %s381
      %s383 = sphi 0, %s381
      %s384 = sphi 0, %s383
      %s398 = sphi 0, %s384
      %s402 = sphi 0, %s402
      %s404 = sphi 0, %s402
      %s405 = sphi 0, %s404
      %s419 = sphi 0, %s405
      %s425 = sphi 0, %s427
      %s428 = sphi 0, %s425
      %s429 = sphi 0, %s428
      %s445 = sphi 0, %s429
    $region4: #{tpu_custom_call.1} parent=1 // loop_header_branch
      %41 = sbr.rel (%p39) target = $region8
    $region5: #{tpu_custom_call.1} parent=1 // loop_body
      %s43 = ssub.s32 %s38, 1
      %s44 = ssub.s32 %s38, 2
      %s45 = sadd.s32 %s38, 1
      %s46 = ssub.s32 %s38, %s45
      %p47 = scmp.eq.s32.totalorder %s46, 0
      %s49 = sadd.s32 %s48, 1
      %s50 = scalar_select %p47, %s48, %s49
      %p53 = pneg %p47
      %p54 = scmp.eq.s32.totalorder %s38, 2
      %p55 = por %p53, %p54
      %p56 = scmp.ne.s32.totalorder %s48, %s51
      %p57 = scmp.eq.s32.totalorder %s38, 0
      %p58 = por %p56, %p57
      %p59 = scmp.ne.s32.totalorder %s48, %s51
      %p60 = scmp.eq.s32.totalorder %s43, 2
      %p61 = por %p59, %p60
      %p62 = scmp.ne.s32.totalorder %s51, %s52
      %p63 = scmp.eq.s32.totalorder %s43, 0
      %p64 = por %p62, %p63
      %p65 = scmp.ne.s32.totalorder %s51, %s52
      %p66 = scmp.eq.s32.totalorder %s44, 2
      %p67 = por %p65, %p66
      %p69 = scmp.ne.s32.totalorder %s52, %s68
      %p70 = scmp.eq.s32.totalorder %s44, 0
      %p71 = por %p69, %p70
      %s72 = ssub.s32 %s38, %s45
      %p73 = scmp.eq.s32.totalorder %s72, 0
      %s75 = sadd.s32 %s74, 1
      %s76 = scalar_select %p73, %s74, %s75
      %p79 = pneg %p73
      %p80 = scmp.eq.s32.totalorder %s38, 2
      %p81 = por %p79, %p80
      %p82 = scmp.ne.s32.totalorder %s74, %s77
      %p83 = scmp.eq.s32.totalorder %s38, 0
      %p84 = por %p82, %p83
      %p85 = scmp.ne.s32.totalorder %s74, %s77
      %p86 = scmp.eq.s32.totalorder %s43, 2
      %p87 = por %p85, %p86
      %p88 = scmp.ne.s32.totalorder %s77, %s78
      %p89 = scmp.eq.s32.totalorder %s43, 0
      %p90 = por %p88, %p89
      %p91 = scmp.ne.s32.totalorder %s77, %s78
      %p92 = scmp.eq.s32.totalorder %s44, 2
      %p93 = por %p91, %p92
      %p95 = scmp.ne.s32.totalorder %s78, %s94
      %p96 = scmp.eq.s32.totalorder %s44, 0
      %p97 = por %p95, %p96
      %s98 = ssub.s32 %s38, %s45
      %p99 = scmp.eq.s32.totalorder %s98, 0
      %s101 = sadd.s32 %s100, 1
      %s102 = scalar_select %p99, %s100, %s101
      %p105 = pneg %p99
      %p106 = scmp.eq.s32.totalorder %s38, 2
      %p107 = por %p105, %p106
      %p108 = scmp.ne.s32.totalorder %s100, %s103
      %p109 = scmp.eq.s32.totalorder %s38, 0
      %p110 = por %p108, %p109
      %p111 = scmp.ne.s32.totalorder %s100, %s103
      %p112 = scmp.eq.s32.totalorder %s43, 2
      %p113 = por %p111, %p112
      %p114 = scmp.ne.s32.totalorder %s103, %s104
      %p115 = scmp.eq.s32.totalorder %s43, 0
      %p116 = por %p114, %p115
      %p117 = scmp.ne.s32.totalorder %s103, %s104
      %p118 = scmp.eq.s32.totalorder %s44, 2
      %p119 = por %p117, %p118
      %p121 = scmp.ne.s32.totalorder %s104, %s120
      %p122 = scmp.eq.s32.totalorder %s44, 0
      %p123 = por %p121, %p122
      %s124 = ssub.s32 %s38, %s45
      %p125 = scmp.eq.s32.totalorder %s124, 0
      %s127 = sadd.s32 %s126, 1
      %s128 = scalar_select %p125, %s126, %s127
      %p131 = pneg %p125
      %p132 = scmp.eq.s32.totalorder %s38, 2
      %p133 = por %p131, %p132
      %p134 = scmp.ne.s32.totalorder %s126, %s129
      %p135 = scmp.eq.s32.totalorder %s38, 0
      %p136 = por %p134, %p135
      %p137 = scmp.ne.s32.totalorder %s126, %s129
      %p138 = scmp.eq.s32.totalorder %s43, 2
      %p139 = por %p137, %p138
      %p140 = scmp.ne.s32.totalorder %s129, %s130
      %p141 = scmp.eq.s32.totalorder %s43, 0
      %p142 = por %p140, %p141
      %p143 = scmp.ne.s32.totalorder %s129, %s130
      %p144 = scmp.eq.s32.totalorder %s44, 2
      %p145 = por %p143, %p144
      %p147 = scmp.ne.s32.totalorder %s130, %s146
      %p148 = scmp.eq.s32.totalorder %s44, 0
      %p149 = por %p147, %p148
      %s151 = sadd.s32 %s150, 1
      %p154 = scmp.eq.s32.totalorder %s38, 2
      %p155 = scmp.ne.s32.totalorder %s150, %s152
      %p156 = scmp.eq.s32.totalorder %s38, 0
      %p157 = por %p155, %p156
      %p158 = scmp.ne.s32.totalorder %s150, %s152
      %p159 = scmp.eq.s32.totalorder %s43, 2
      %p160 = por %p158, %p159
      %p161 = scmp.ne.s32.totalorder %s152, %s153
      %p162 = scmp.eq.s32.totalorder %s43, 0
      %p163 = por %p161, %p162
      %p164 = scmp.ne.s32.totalorder %s152, %s153
      %p165 = scmp.eq.s32.totalorder %s44, 2
      %p166 = por %p164, %p165
      %p168 = scmp.ne.s32.totalorder %s153, %s167
      %p169 = scmp.eq.s32.totalorder %s44, 0
      %p170 = por %p168, %p169
      %s172 = sadd.s32 %s171, 1
      %p175 = scmp.eq.s32.totalorder %s38, 2
      %p176 = scmp.ne.s32.totalorder %s171, %s173
      %p177 = scmp.eq.s32.totalorder %s38, 0
      %p178 = por %p176, %p177
      %p179 = scmp.ne.s32.totalorder %s171, %s173
      %p180 = scmp.eq.s32.totalorder %s43, 2
      %p181 = por %p179, %p180
      %p182 = scmp.ne.s32.totalorder %s173, %s174
      %p183 = scmp.eq.s32.totalorder %s43, 0
      %p184 = por %p182, %p183
      %p185 = scmp.ne.s32.totalorder %s173, %s174
      %p186 = scmp.eq.s32.totalorder %s44, 2
      %p187 = por %p185, %p186
      %p189 = scmp.ne.s32.totalorder %s174, %s188
      %p190 = scmp.eq.s32.totalorder %s44, 0
      %p191 = por %p189, %p190
      %s193 = sadd.s32 %s192, 1
      %p196 = scmp.eq.s32.totalorder %s38, 2
      %p197 = scmp.ne.s32.totalorder %s192, %s194
      %p198 = scmp.eq.s32.totalorder %s38, 0
      %p199 = por %p197, %p198
      %p200 = scmp.ne.s32.totalorder %s192, %s194
      %p201 = scmp.eq.s32.totalorder %s43, 2
      %p202 = por %p200, %p201
      %p203 = scmp.ne.s32.totalorder %s194, %s195
      %p204 = scmp.eq.s32.totalorder %s43, 0
      %p205 = por %p203, %p204
      %p206 = scmp.ne.s32.totalorder %s194, %s195
      %p207 = scmp.eq.s32.totalorder %s44, 2
      %p208 = por %p206, %p207
      %p210 = scmp.ne.s32.totalorder %s195, %s209
      %p211 = scmp.eq.s32.totalorder %s44, 0
      %p212 = por %p210, %p211
      %s214 = sadd.s32 %s213, 1
      %p217 = scmp.eq.s32.totalorder %s38, 2
      %p218 = scmp.ne.s32.totalorder %s213, %s215
      %p219 = scmp.eq.s32.totalorder %s38, 0
      %p220 = por %p218, %p219
      %p221 = scmp.ne.s32.totalorder %s213, %s215
      %p222 = scmp.eq.s32.totalorder %s43, 2
      %p223 = por %p221, %p222
      %p224 = scmp.ne.s32.totalorder %s215, %s216
      %p225 = scmp.eq.s32.totalorder %s43, 0
      %p226 = por %p224, %p225
      %p227 = scmp.ne.s32.totalorder %s215, %s216
      %p228 = scmp.eq.s32.totalorder %s44, 2
      %p229 = por %p227, %p228
      %p231 = scmp.ne.s32.totalorder %s216, %s230
      %p232 = scmp.eq.s32.totalorder %s44, 0
      %p233 = por %p231, %p232
      %s235 = sadd.s32 %s234, 1
      %p238 = scmp.eq.s32.totalorder %s38, 2
      %p239 = scmp.ne.s32.totalorder %s234, %s236
      %p240 = scmp.eq.s32.totalorder %s38, 0
      %p241 = por %p239, %p240
      %p242 = scmp.ne.s32.totalorder %s234, %s236
      %p243 = scmp.eq.s32.totalorder %s43, 2
      %p244 = por %p242, %p243
      %p245 = scmp.ne.s32.totalorder %s236, %s237
      %p246 = scmp.eq.s32.totalorder %s43, 0
      %p247 = por %p245, %p246
      %p248 = scmp.ne.s32.totalorder %s236, %s237
      %p249 = scmp.eq.s32.totalorder %s44, 2
      %p250 = por %p248, %p249
      %p252 = scmp.ne.s32.totalorder %s237, %s251
      %p253 = scmp.eq.s32.totalorder %s44, 0
      %p254 = por %p252, %p253
      %s256 = sadd.s32 %s255, 1
      %p259 = scmp.eq.s32.totalorder %s38, 2
      %p260 = scmp.ne.s32.totalorder %s255, %s257
      %p261 = scmp.eq.s32.totalorder %s38, 0
      %p262 = por %p260, %p261
      %p263 = scmp.ne.s32.totalorder %s255, %s257
      %p264 = scmp.eq.s32.totalorder %s43, 2
      %p265 = por %p263, %p264
      %p266 = scmp.ne.s32.totalorder %s257, %s258
      %p267 = scmp.eq.s32.totalorder %s43, 0
      %p268 = por %p266, %p267
      %p269 = scmp.ne.s32.totalorder %s257, %s258
      %p270 = scmp.eq.s32.totalorder %s44, 2
      %p271 = por %p269, %p270
      %p273 = scmp.ne.s32.totalorder %s258, %s272
      %p274 = scmp.eq.s32.totalorder %s44, 0
      %p275 = por %p273, %p274
      %s277 = sadd.s32 %s276, 1
      %p280 = scmp.eq.s32.totalorder %s38, 2
      %p281 = scmp.ne.s32.totalorder %s276, %s278
      %p282 = scmp.eq.s32.totalorder %s38, 0
      %p283 = por %p281, %p282
      %p284 = scmp.ne.s32.totalorder %s276, %s278
      %p285 = scmp.eq.s32.totalorder %s43, 2
      %p286 = por %p284, %p285
      %p287 = scmp.ne.s32.totalorder %s278, %s279
      %p288 = scmp.eq.s32.totalorder %s43, 0
      %p289 = por %p287, %p288
      %p290 = scmp.ne.s32.totalorder %s278, %s279
      %p291 = scmp.eq.s32.totalorder %s44, 2
      %p292 = por %p290, %p291
      %p294 = scmp.ne.s32.totalorder %s279, %s293
      %p295 = scmp.eq.s32.totalorder %s44, 0
      %p296 = por %p294, %p295
      %s298 = sadd.s32 %s297, 1
      %p301 = scmp.eq.s32.totalorder %s38, 2
      %p302 = scmp.ne.s32.totalorder %s297, %s299
      %p303 = scmp.eq.s32.totalorder %s38, 0
      %p304 = por %p302, %p303
      %p305 = scmp.ne.s32.totalorder %s297, %s299
      %p306 = scmp.eq.s32.totalorder %s43, 2
      %p307 = por %p305, %p306
      %p308 = scmp.ne.s32.totalorder %s299, %s300
      %p309 = scmp.eq.s32.totalorder %s43, 0
      %p310 = por %p308, %p309
      %p311 = scmp.ne.s32.totalorder %s299, %s300
      %p312 = scmp.eq.s32.totalorder %s44, 2
      %p313 = por %p311, %p312
      %p315 = scmp.ne.s32.totalorder %s300, %s314
      %p316 = scmp.eq.s32.totalorder %s44, 0
      %p317 = por %p315, %p316
      %s319 = sadd.s32 %s318, 1
      %p322 = scmp.eq.s32.totalorder %s38, 2
      %p323 = scmp.ne.s32.totalorder %s318, %s320
      %p324 = scmp.eq.s32.totalorder %s38, 0
      %p325 = por %p323, %p324
      %p326 = scmp.ne.s32.totalorder %s318, %s320
      %p327 = scmp.eq.s32.totalorder %s43, 2
      %p328 = por %p326, %p327
      %p329 = scmp.ne.s32.totalorder %s320, %s321
      %p330 = scmp.eq.s32.totalorder %s43, 0
      %p331 = por %p329, %p330
      %p332 = scmp.ne.s32.totalorder %s320, %s321
      %p333 = scmp.eq.s32.totalorder %s44, 2
      %p334 = por %p332, %p333
      %p336 = scmp.ne.s32.totalorder %s321, %s335
      %p337 = scmp.eq.s32.totalorder %s44, 0
      %p338 = por %p336, %p337
      %s340 = sadd.s32 %s339, 1
      %p343 = scmp.eq.s32.totalorder %s38, 2
      %p344 = scmp.ne.s32.totalorder %s339, %s341
      %p345 = scmp.eq.s32.totalorder %s38, 0
      %p346 = por %p344, %p345
      %p347 = scmp.ne.s32.totalorder %s339, %s341
      %p348 = scmp.eq.s32.totalorder %s43, 2
      %p349 = por %p347, %p348
      %p350 = scmp.ne.s32.totalorder %s341, %s342
      %p351 = scmp.eq.s32.totalorder %s43, 0
      %p352 = por %p350, %p351
      %p353 = scmp.ne.s32.totalorder %s341, %s342
      %p354 = scmp.eq.s32.totalorder %s44, 2
      %p355 = por %p353, %p354
      %p357 = scmp.ne.s32.totalorder %s342, %s356
      %p358 = scmp.eq.s32.totalorder %s44, 0
      %p359 = por %p357, %p358
      %s361 = sadd.s32 %s360, 1
      %p364 = scmp.eq.s32.totalorder %s38, 2
      %p365 = scmp.ne.s32.totalorder %s360, %s362
      %p366 = scmp.eq.s32.totalorder %s38, 0
      %p367 = por %p365, %p366
      %p368 = scmp.ne.s32.totalorder %s360, %s362
      %p369 = scmp.eq.s32.totalorder %s43, 2
      %p370 = por %p368, %p369
      %p371 = scmp.ne.s32.totalorder %s362, %s363
      %p372 = scmp.eq.s32.totalorder %s43, 0
      %p373 = por %p371, %p372
      %p374 = scmp.ne.s32.totalorder %s362, %s363
      %p375 = scmp.eq.s32.totalorder %s44, 2
      %p376 = por %p374, %p375
      %p378 = scmp.ne.s32.totalorder %s363, %s377
      %p379 = scmp.eq.s32.totalorder %s44, 0
      %p380 = por %p378, %p379
      %s382 = sadd.s32 %s381, 1
      %p385 = scmp.eq.s32.totalorder %s38, 2
      %p386 = scmp.ne.s32.totalorder %s381, %s383
      %p387 = scmp.eq.s32.totalorder %s38, 0
      %p388 = por %p386, %p387
      %p389 = scmp.ne.s32.totalorder %s381, %s383
      %p390 = scmp.eq.s32.totalorder %s43, 2
      %p391 = por %p389, %p390
      %p392 = scmp.ne.s32.totalorder %s383, %s384
      %p393 = scmp.eq.s32.totalorder %s43, 0
      %p394 = por %p392, %p393
      %p395 = scmp.ne.s32.totalorder %s383, %s384
      %p396 = scmp.eq.s32.totalorder %s44, 2
      %p397 = por %p395, %p396
      %p399 = scmp.ne.s32.totalorder %s384, %s398
      %p400 = scmp.eq.s32.totalorder %s44, 0
      %p401 = por %p399, %p400
      %s403 = sadd.s32 %s402, 1
      %p406 = scmp.eq.s32.totalorder %s38, 2
      %p407 = scmp.ne.s32.totalorder %s402, %s404
      %p408 = scmp.eq.s32.totalorder %s38, 0
      %p409 = por %p407, %p408
      %p410 = scmp.ne.s32.totalorder %s402, %s404
      %p411 = scmp.eq.s32.totalorder %s43, 2
      %p412 = por %p410, %p411
      %p413 = scmp.ne.s32.totalorder %s404, %s405
      %p414 = scmp.eq.s32.totalorder %s43, 0
      %p415 = por %p413, %p414
      %p416 = scmp.ne.s32.totalorder %s404, %s405
      %p417 = scmp.eq.s32.totalorder %s44, 2
      %p418 = por %p416, %p417
      %p420 = scmp.ne.s32.totalorder %s405, %s419
      %p421 = scmp.eq.s32.totalorder %s44, 0
      %p422 = por %p420, %p421
      %s423 = ssub.s32 %s38, %s45
      %p424 = scmp.eq.s32.totalorder %s423, 0
      %s426 = sadd.s32 %s425, 1
      %s427 = scalar_select %p424, %s425, %s426
      %p430 = pneg %p424
      %p431 = scmp.eq.s32.totalorder %s38, 2
      %p432 = por %p430, %p431
      %p433 = scmp.ne.s32.totalorder %s425, %s428
      %p434 = scmp.eq.s32.totalorder %s38, 0
      %p435 = por %p433, %p434
      %p436 = scmp.ne.s32.totalorder %s425, %s428
      %p437 = scmp.eq.s32.totalorder %s43, 2
      %p438 = por %p436, %p437
      %p439 = scmp.ne.s32.totalorder %s428, %s429
      %p440 = scmp.eq.s32.totalorder %s43, 0
      %p441 = por %p439, %p440
      %p442 = scmp.ne.s32.totalorder %s428, %s429
      %p443 = scmp.eq.s32.totalorder %s44, 2
      %p444 = por %p442, %p443
      %p446 = scmp.ne.s32.totalorder %s429, %s445
      %p447 = scmp.eq.s32.totalorder %s44, 0
      %p448 = por %p446, %p447
      %p449 = scmp.le.s32.totalorder 1, %s38
      %p450 = scmp.lt.s32.totalorder %s38, 4
      %p451 = pnand %p449, %p450
      %p452 = pneg %p451
      // Predicated region
      $region9: #{tpu_custom_call.1} parent=5 // pred_check
        _
      $region10: #{tpu_custom_call.1} parent=5 // pred_check_branch
        %454 = sbr.rel (%p451) target = $region12
      $region11: #{tpu_custom_call.1} parent=5 // pred_region
        %s455 = ssub.s32 %s38, 1
        // Predicated region
        $region13: #{tpu_custom_call.1} parent=11 // pred_check
          %p456 = pneg %p163
        $region14: #{tpu_custom_call.1} parent=11 // pred_check_branch
          %458 = sbr.rel (%p456) target = $region16
        $region15: #{tpu_custom_call.1} parent=11 // pred_region
          %s460 = ssub.s32 512, 512
          %461 = vsyncadd [#allocation9], %s460
          %s462 = sshll.u32 [#allocation10], 4
          %s463 = int_to_ptr.vmem [resolvable:$true] %s462
          %468 = dma.hbm_to_vmem [thread:$0]  %s4, 512, %s463, [#allocation9], 128, 128, 8
        $region16: #{tpu_custom_call.1} parent=11 // pred_fallthru
          _
        // Predicated region
        $region17: #{tpu_custom_call.1} parent=11 // pred_check
          %p469 = pneg %p184
        $region18: #{tpu_custom_call.1} parent=11 // pred_check_branch
          %471 = sbr.rel (%p469) target = $region20
        $region19: #{tpu_custom_call.1} parent=11 // pred_region
          _
        $region20: #{tpu_custom_call.1} parent=11 // pred_fallthru
          _
        // Predicated region
        $region21: #{tpu_custom_call.1} parent=11 // pred_check
          %p472 = pneg %p205
        $region22: #{tpu_custom_call.1} parent=11 // pred_check_branch
          %474 = sbr.rel (%p472) target = $region24
        $region23: #{tpu_custom_call.1} parent=11 // pred_region
          %s476 = ssub.s32 512, 512
          %477 = vsyncadd [#allocation12], %s476
          %s478 = sshll.u32 [#allocation11], 4
          %s479 = int_to_ptr.vmem [resolvable:$true] %s478
          %484 = dma.hbm_to_vmem [thread:$0]  %s6, 512, %s479, [#allocation12], 128, 128, 8
        $region24: #{tpu_custom_call.1} parent=11 // pred_fallthru
          _
        // Predicated region
        $region25: #{tpu_custom_call.1} parent=11 // pred_check
          %p485 = pneg %p226
        $region26: #{tpu_custom_call.1} parent=11 // pred_check_branch
          %487 = sbr.rel (%p485) target = $region28
        $region27: #{tpu_custom_call.1} parent=11 // pred_region
          _
        $region28: #{tpu_custom_call.1} parent=11 // pred_fallthru
          _
        // Predicated region
        $region29: #{tpu_custom_call.1} parent=11 // pred_check
          %p488 = pneg %p247
        $region30: #{tpu_custom_call.1} parent=11 // pred_check_branch
          %490 = sbr.rel (%p488) target = $region32
        $region31: #{tpu_custom_call.1} parent=11 // pred_region
          %s492 = ssub.s32 512, 512
          %493 = vsyncadd [#allocation12], %s492
          %s494 = sshll.u32 [#allocation13], 4
          %s495 = int_to_ptr.vmem [resolvable:$true] %s494
          %500 = dma.hbm_to_vmem [thread:$0]  %s8, 512, %s495, [#allocation12], 128, 128, 8
        $region32: #{tpu_custom_call.1} parent=11 // pred_fallthru
          _
        // Predicated region
        $region33: #{tpu_custom_call.1} parent=11 // pred_check
          %p501 = pneg %p268
        $region34: #{tpu_custom_call.1} parent=11 // pred_check_branch
          %503 = sbr.rel (%p501) target = $region36
        $region35: #{tpu_custom_call.1} parent=11 // pred_region
          _
        $region36: #{tpu_custom_call.1} parent=11 // pred_fallthru
          _
        // Predicated region
        $region37: #{tpu_custom_call.1} parent=11 // pred_check
          %p504 = pneg %p289
        $region38: #{tpu_custom_call.1} parent=11 // pred_check_branch
          %506 = sbr.rel (%p504) target = $region40
        $region39: #{tpu_custom_call.1} parent=11 // pred_region
          _
        $region40: #{tpu_custom_call.1} parent=11 // pred_fallthru
          _
        // Predicated region
        $region41: #{tpu_custom_call.1} parent=11 // pred_check
          %p507 = pneg %p310
        $region42: #{tpu_custom_call.1} parent=11 // pred_check_branch
          %509 = sbr.rel (%p507) target = $region44
        $region43: #{tpu_custom_call.1} parent=11 // pred_region
          %s511 = ssub.s32 512, 512
          %512 = vsyncadd [#allocation15], %s511
          %s513 = sshll.u32 [#allocation14], 4
          %s514 = int_to_ptr.vmem [resolvable:$true] %s513
          %519 = dma.hbm_to_vmem [thread:$0]  %s11, 512, %s514, [#allocation15], 128, 128, 8
        $region44: #{tpu_custom_call.1} parent=11 // pred_fallthru
          _
        // Predicated region
        $region45: #{tpu_custom_call.1} parent=11 // pred_check
          %p520 = pneg %p331
        $region46: #{tpu_custom_call.1} parent=11 // pred_check_branch
          %522 = sbr.rel (%p520) target = $region48
        $region47: #{tpu_custom_call.1} parent=11 // pred_region
          _
        $region48: #{tpu_custom_call.1} parent=11 // pred_fallthru
          _
        // Predicated region
        $region49: #{tpu_custom_call.1} parent=11 // pred_check
          %p523 = pneg %p352
        $region50: #{tpu_custom_call.1} parent=11 // pred_check_branch
          %525 = sbr.rel (%p523) target = $region52
        $region51: #{tpu_custom_call.1} parent=11 // pred_region
          %s527 = ssub.s32 512, 512
          %528 = vsyncadd [#allocation15], %s527
          %s529 = sshll.u32 [#allocation16], 4
          %s530 = int_to_ptr.vmem [resolvable:$true] %s529
          %535 = dma.hbm_to_vmem [thread:$0]  %s13, 512, %s530, [#allocation15], 128, 128, 8
        $region52: #{tpu_custom_call.1} parent=11 // pred_fallthru
          _
        // Predicated region
        $region53: #{tpu_custom_call.1} parent=11 // pred_check
          %p536 = pneg %p373
        $region54: #{tpu_custom_call.1} parent=11 // pred_check_branch
          %538 = sbr.rel (%p536) target = $region56
        $region55: #{tpu_custom_call.1} parent=11 // pred_region
          %s540 = ssub.s32 512, 512
          %541 = vsyncadd [#allocation18], %s540
          %s542 = sshll.u32 [#allocation17], 4
          %s543 = int_to_ptr.vmem [resolvable:$true] %s542
          %548 = dma.hbm_to_vmem [thread:$0]  %s14, 512, %s543, [#allocation18], 128, 128, 8
        $region56: #{tpu_custom_call.1} parent=11 // pred_fallthru
          _
        // Predicated region
        $region57: #{tpu_custom_call.1} parent=11 // pred_check
          %p549 = pneg %p394
        $region58: #{tpu_custom_call.1} parent=11 // pred_check_branch
          %551 = sbr.rel (%p549) target = $region60
        $region59: #{tpu_custom_call.1} parent=11 // pred_region
          %s553 = ssub.s32 512, 512
          %554 = vsyncadd [#allocation18], %s553
          %s555 = sshll.u32 [#allocation19], 4
          %s556 = int_to_ptr.vmem [resolvable:$true] %s555
          %561 = dma.hbm_to_vmem [thread:$0]  %s15, 512, %s556, [#allocation18], 128, 128, 8
        $region60: #{tpu_custom_call.1} parent=11 // pred_fallthru
          _
        // Predicated region
        $region61: #{tpu_custom_call.1} parent=11 // pred_check
          %p562 = pneg %p415
        $region62: #{tpu_custom_call.1} parent=11 // pred_check_branch
          %564 = sbr.rel (%p562) target = $region64
        $region63: #{tpu_custom_call.1} parent=11 // pred_region
          _
        $region64: #{tpu_custom_call.1} parent=11 // pred_fallthru
          _
      $region12: #{tpu_custom_call.1} parent=5 // pred_fallthru
        _
      %p565 = scmp.lt.s32.totalorder %s38, 3
      // Predicated region
      $region65: #{tpu_custom_call.1} parent=5 // pred_check
        %p566 = pneg %p565
      $region66: #{tpu_custom_call.1} parent=5 // pred_check_branch
        %568 = sbr.rel (%p566) target = $region68
      $region67: #{tpu_custom_call.1} parent=5 // pred_region
        // Predicated region
        $region69: #{tpu_custom_call.1} parent=67 // pred_check
          %p569 = pneg %p58
        $region70: #{tpu_custom_call.1} parent=67 // pred_check_branch
          %571 = sbr.rel (%p569) target = $region72
        $region71: #{tpu_custom_call.1} parent=67 // pred_region
          %s572 = sand.u32 %s48, 1
          %s573 = scalar_lea.sflag [#allocation3], %s572
          %s574 = sand.u32 %s48, 1
          %s575 = smul.addr %s574, 8
          %s576 = scalar_lea.vmem [#allocation2], %s575
          %s578 = ssub.s32 128, 128
          %579 = vsyncadd %s573, %s578
          %s580 = smul.addr %s38, 128
          %s581 = scalar_lea.hbm %s0, %s580
          %s583 = sshll.u32 %s576, 4
          %s584 = int_to_ptr.vmem [resolvable:$true] %s583
          %586 = dma.hbm_to_vmem [thread:$0]  %s581, 128, %s584, %s573
        $region72: #{tpu_custom_call.1} parent=67 // pred_fallthru
          _
        // Predicated region
        $region73: #{tpu_custom_call.1} parent=67 // pred_check
          %p587 = pneg %p84
        $region74: #{tpu_custom_call.1} parent=67 // pred_check_branch
          %589 = sbr.rel (%p587) target = $region76
        $region75: #{tpu_custom_call.1} parent=67 // pred_region
          %s590 = sand.u32 %s38, 1
          %s591 = scalar_lea.sflag [#allocation6], %s590
          %s592 = sand.u32 %s74, 1
          %s593 = smul.addr %s592, 8
          %s594 = scalar_lea.vmem [#allocation5], %s593
          %s596 = ssub.s32 128, 128
          %597 = vsyncadd %s591, %s596
          %s598 = smul.addr %s38, 128
          %s599 = scalar_lea.hbm %s1, %s598
          %s601 = sshll.u32 %s594, 4
          %s602 = int_to_ptr.vmem [resolvable:$true] %s601
          %604 = dma.hbm_to_vmem [thread:$0]  %s599, 128, %s602, %s591
        $region76: #{tpu_custom_call.1} parent=67 // pred_fallthru
          _
        // Predicated region
        $region77: #{tpu_custom_call.1} parent=67 // pred_check
          %p605 = pneg %p110
        $region78: #{tpu_custom_call.1} parent=67 // pred_check_branch
          %607 = sbr.rel (%p605) target = $region80
        $region79: #{tpu_custom_call.1} parent=67 // pred_region
          %s608 = sand.u32 %s38, 1
          %s609 = scalar_lea.sflag [#allocation6], %s608
          %s610 = sand.u32 %s100, 1
          %s611 = smul.addr %s610, 8
          %s612 = scalar_lea.vmem [#allocation7], %s611
          %s614 = ssub.s32 128, 128
          %615 = vsyncadd %s609, %s614
          %s616 = smul.addr %s38, 128
          %s617 = scalar_lea.hbm %s2, %s616
          %s619 = sshll.u32 %s612, 4
          %s620 = int_to_ptr.vmem [resolvable:$true] %s619
          %622 = dma.hbm_to_vmem [thread:$0]  %s617, 128, %s620, %s609
        $region80: #{tpu_custom_call.1} parent=67 // pred_fallthru
          _
        // Predicated region
        $region81: #{tpu_custom_call.1} parent=67 // pred_check
          %p623 = pneg %p136
        $region82: #{tpu_custom_call.1} parent=67 // pred_check_branch
          %625 = sbr.rel (%p623) target = $region84
        $region83: #{tpu_custom_call.1} parent=67 // pred_region
          %s626 = sand.u32 %s38, 1
          %s627 = scalar_lea.sflag [#allocation9], %s626
          %s628 = sand.u32 %s126, 1
          %s629 = smul.addr %s628, 8
          %s630 = scalar_lea.vmem [#allocation8], %s629
          %s632 = ssub.s32 128, 128
          %633 = vsyncadd %s627, %s632
          %s634 = smul.addr %s38, 128
          %s635 = scalar_lea.hbm %s3, %s634
          %s637 = sshll.u32 %s630, 4
          %s638 = int_to_ptr.vmem [resolvable:$true] %s637
          %640 = dma.hbm_to_vmem [thread:$0]  %s635, 128, %s638, %s627
        $region84: #{tpu_custom_call.1} parent=67 // pred_fallthru
          _
      $region68: #{tpu_custom_call.1} parent=5 // pred_fallthru
        _
      %p641 = scmp.le.s32.totalorder 1, %s38
      %p642 = scmp.lt.s32.totalorder %s38, 4
      %p643 = pnand %p641, %p642
      %p644 = pneg %p643
      // Predicated region
      $region85: #{tpu_custom_call.1} parent=5 // pred_check
        _
      $region86: #{tpu_custom_call.1} parent=5 // pred_check_branch
        %646 = sbr.rel (%p643) target = $region88
      $region87: #{tpu_custom_call.1} parent=5 // pred_region
        %s647 = ssub.s32 %s38, 1
        %s648 = sand.u32 %s51, 1
        %s649 = scalar_lea.sflag [#allocation3], %s648
        %s650 = sand.u32 %s51, 1
        %s651 = smul.addr %s650, 8
        %s652 = scalar_lea.vmem [#allocation2], %s651
        // Predicated region
        $region89: #{tpu_custom_call.1} parent=87 // pred_check
          %p653 = pneg %p64
        $region90: #{tpu_custom_call.1} parent=87 // pred_check_branch
          %655 = sbr.rel (%p653) target = $region92
        $region91: #{tpu_custom_call.1} parent=87 // pred_region
          %656 = dma.done %s649, 128
        $region92: #{tpu_custom_call.1} parent=87 // pred_fallthru
          _
        %s657 = sand.u32 %s43, 1
        %s658 = scalar_lea.sflag [#allocation6], %s657
        %s659 = sand.u32 %s77, 1
        %s660 = smul.addr %s659, 8
        %s661 = scalar_lea.vmem [#allocation5], %s660
        // Predicated region
        $region93: #{tpu_custom_call.1} parent=87 // pred_check
          %p662 = pneg %p90
        $region94: #{tpu_custom_call.1} parent=87 // pred_check_branch
          %664 = sbr.rel (%p662) target = $region96
        $region95: #{tpu_custom_call.1} parent=87 // pred_region
          %665 = dma.done %s658, 128
        $region96: #{tpu_custom_call.1} parent=87 // pred_fallthru
          _
        %s666 = sand.u32 %s43, 1
        %s667 = scalar_lea.sflag [#allocation6], %s666
        %s668 = sand.u32 %s103, 1
        %s669 = smul.addr %s668, 8
        %s670 = scalar_lea.vmem [#allocation7], %s669
        // Predicated region
        $region97: #{tpu_custom_call.1} parent=87 // pred_check
          %p671 = pneg %p116
        $region98: #{tpu_custom_call.1} parent=87 // pred_check_branch
          %673 = sbr.rel (%p671) target = $region100
        $region99: #{tpu_custom_call.1} parent=87 // pred_region
          %674 = dma.done %s667, 128
        $region100: #{tpu_custom_call.1} parent=87 // pred_fallthru
          _
        %s675 = sand.u32 %s43, 1
        %s676 = scalar_lea.sflag [#allocation9], %s675
        %s677 = sand.u32 %s129, 1
        %s678 = smul.addr %s677, 8
        %s679 = scalar_lea.vmem [#allocation8], %s678
        // Predicated region
        $region101: #{tpu_custom_call.1} parent=87 // pred_check
          %p680 = pneg %p142
        $region102: #{tpu_custom_call.1} parent=87 // pred_check_branch
          %682 = sbr.rel (%p680) target = $region104
        $region103: #{tpu_custom_call.1} parent=87 // pred_region
          %683 = dma.done %s676, 128
        $region104: #{tpu_custom_call.1} parent=87 // pred_fallthru
          _
        // Predicated region
        $region105: #{tpu_custom_call.1} parent=87 // pred_check
          %p684 = pneg %p163
        $region106: #{tpu_custom_call.1} parent=87 // pred_check_branch
          %686 = sbr.rel (%p684) target = $region108
        $region107: #{tpu_custom_call.1} parent=87 // pred_region
          %687 = dma.done [#allocation9], 512
        $region108: #{tpu_custom_call.1} parent=87 // pred_fallthru
          _
        // Predicated region
        $region109: #{tpu_custom_call.1} parent=87 // pred_check
          %p688 = pneg %p205
        $region110: #{tpu_custom_call.1} parent=87 // pred_check_branch
          %690 = sbr.rel (%p688) target = $region112
        $region111: #{tpu_custom_call.1} parent=87 // pred_region
          %691 = dma.done [#allocation12], 512
        $region112: #{tpu_custom_call.1} parent=87 // pred_fallthru
          _
        // Predicated region
        $region113: #{tpu_custom_call.1} parent=87 // pred_check
          %p692 = pneg %p247
        $region114: #{tpu_custom_call.1} parent=87 // pred_check_branch
          %694 = sbr.rel (%p692) target = $region116
        $region115: #{tpu_custom_call.1} parent=87 // pred_region
          %695 = dma.done [#allocation12], 512
        $region116: #{tpu_custom_call.1} parent=87 // pred_fallthru
          _
        // Predicated region
        $region117: #{tpu_custom_call.1} parent=87 // pred_check
          %p696 = pneg %p310
        $region118: #{tpu_custom_call.1} parent=87 // pred_check_branch
          %698 = sbr.rel (%p696) target = $region120
        $region119: #{tpu_custom_call.1} parent=87 // pred_region
          %699 = dma.done [#allocation15], 512
        $region120: #{tpu_custom_call.1} parent=87 // pred_fallthru
          _
        // Predicated region
        $region121: #{tpu_custom_call.1} parent=87 // pred_check
          %p700 = pneg %p352
        $region122: #{tpu_custom_call.1} parent=87 // pred_check_branch
          %702 = sbr.rel (%p700) target = $region124
        $region123: #{tpu_custom_call.1} parent=87 // pred_region
          %703 = dma.done [#allocation15], 512
        $region124: #{tpu_custom_call.1} parent=87 // pred_fallthru
          _
        // Predicated region
        $region125: #{tpu_custom_call.1} parent=87 // pred_check
          %p704 = pneg %p373
        $region126: #{tpu_custom_call.1} parent=87 // pred_check_branch
          %706 = sbr.rel (%p704) target = $region128
        $region127: #{tpu_custom_call.1} parent=87 // pred_region
          %707 = dma.done [#allocation18], 512
        $region128: #{tpu_custom_call.1} parent=87 // pred_fallthru
          _
        // Predicated region
        $region129: #{tpu_custom_call.1} parent=87 // pred_check
          %p708 = pneg %p394
        $region130: #{tpu_custom_call.1} parent=87 // pred_check_branch
          %710 = sbr.rel (%p708) target = $region132
        $region131: #{tpu_custom_call.1} parent=87 // pred_region
          %711 = dma.done [#allocation18], 512
        $region132: #{tpu_custom_call.1} parent=87 // pred_fallthru
          _
        %s712 = sand.u32 %s51, 1
        %s713 = scalar_lea.sflag [#allocation3], %s712
        %s714 = sand.u32 %s51, 1
        %s715 = smul.addr %s714, 8
        %s716 = scalar_lea.vmem [#allocation2], %s715
        %p717 = pneg %p64
        %p718 = pneg %p61
        %s719 = sand.u32 %s43, 1
        %s720 = scalar_lea.sflag [#allocation6], %s719
        %s721 = sand.u32 %s77, 1
        %s722 = smul.addr %s721, 8
        %s723 = scalar_lea.vmem [#allocation5], %s722
        %p724 = pneg %p90
        %p725 = pneg %p87
        %s726 = sand.u32 %s43, 1
        %s727 = scalar_lea.sflag [#allocation6], %s726
        %s728 = sand.u32 %s103, 1
        %s729 = smul.addr %s728, 8
        %s730 = scalar_lea.vmem [#allocation7], %s729
        %p731 = pneg %p116
        %p732 = pneg %p113
        %s733 = sand.u32 %s43, 1
        %s734 = scalar_lea.sflag [#allocation9], %s733
        %s735 = sand.u32 %s129, 1
        %s736 = smul.addr %s735, 8
        %s737 = scalar_lea.vmem [#allocation8], %s736
        %p738 = pneg %p142
        %p739 = pneg %p139
        %p740 = pneg %p163
        %p741 = pneg %p160
        %p742 = pneg %p184
        %p743 = pneg %p181
        %p744 = pneg %p205
        %p745 = pneg %p202
        %p746 = pneg %p226
        %p747 = pneg %p223
        %p748 = pneg %p247
        %p749 = pneg %p244
        %p750 = pneg %p268
        %p751 = pneg %p265
        %p752 = pneg %p289
        %p753 = pneg %p286
        %p754 = pneg %p310
        %p755 = pneg %p307
        %p756 = pneg %p331
        %p757 = pneg %p328
        %p758 = pneg %p352
        %p759 = pneg %p349
        %p760 = pneg %p373
        %p761 = pneg %p370
        %p762 = pneg %p394
        %p763 = pneg %p391
        %p764 = pneg %p415
        %p765 = pneg %p412
        %p766 = pneg %p441
        %p767 = pneg %p438
        %s768 = sand.u32 %s428, 1
        %s769 = scalar_lea.sflag [#allocation4], %s768
        %s770 = sand.u32 %s428, 1
        %s771 = smul.addr %s770, 8
        %s772 = scalar_lea.vmem [#allocation20], %s771
        %v773 = vld [vmem:[%s652] sm:$0xff]
        %v774 = vld [vmem:[%s661] sm:$0xff]
        %v775 = vld [vmem:[%s670] sm:$0xff]
        %v776 = vld [vmem:[%s679] sm:$0xff]
        %v777 = vand.u32 2147483647, %v773
        %vm778 = vcmask 64512
        %v779 = vsel %vm778, %v777, 0.0
        %v780 = vrot.slane %v779, 4
        %v781 = vadd.f32 %v779, %v780
        %v782 = vrot.slane %v781, 2
        %v783 = vadd.f32 %v781, %v782
        %v784 = vrot.slane %v783, 1
        %v785 = vadd.f32 %v783, %v784
        %v786 = vmax.f32 %v785, 1e-12
        %v787 = vrcp.pop %v786
        %v788 = vmul.f32 %v773, %v787
        %v789 = vand.u32 2147483647, %v774
        %v790 = vsel %vm778, %v789, 0.0
        %v791 = vrot.slane %v790, 4
        %v792 = vadd.f32 %v790, %v791
        %v793 = vrot.slane %v792, 2
        %v794 = vadd.f32 %v792, %v793
        %v795 = vrot.slane %v794, 1
        %v796 = vadd.f32 %v794, %v795
        %v797 = vmax.f32 %v796, 1e-12
        %v798 = vrcp.pop %v797
        %v799 = vmul.f32 %v774, %v798
        %v800 = vld [vmem:[#allocation10] sm:$0xff]
        %v801 = vld [vmem:[#allocation10 + $0x8] sm:$0xff]
        %v802 = vld [vmem:[#allocation10 + $0x10] sm:$0xff]
        %v803 = vld [vmem:[#allocation10 + $0x18] sm:$0xff]
        %v804 = vld [vmem:[%s5] sm:$0x1]
        %v806 = vlaneseq
        %v807 = vshrl.u32 %v806, 7
        %v808 = vsub.s32 0, %v807
        %v809 = vrot.slane %v804, %v808
        %vm811 = vcmask 261120
        %v813 = vsel %vm811, %v775, 0
        %v816 = vsel %vm811, %v776, 0
        %818 = vmatprep.subr.mxu0 0.0
        %819 = vmatpush1.msra.mxu0 %v800
        %820 = vmatprep.subr.mxu0 0.0
        %821 = vmatpush1.msra.mxu0 %v801
        %822 = vmatprep.subr.mxu0 0.0
        %823 = vmatpush1.msra.mxu0 %v802
        %824 = vmatprep.subr.mxu0 0.0
        %825 = vmatpush1.msra.mxu0 %v803
        %826 = vmatprep.subr.mxu0 0.0
        %827 = vmatpush1.msra.mxu0 0.0
        %828 = vmatprep.subr.mxu0 0.0
        %829 = vmatpush1.msra.mxu0 0.0
        %830 = vmatprep.subr.mxu0 0.0
        %831 = vmatpush1.msra.mxu0 0.0
        %832 = vmatprep.subr.mxu0 0.0
        %833 = vmatpush1.msra.mxu0 0.0
        %834 = vmatprep.subr.mxu0 0.0
        %835 = vmatpush1.msra.mxu0 0.0
        %836 = vmatprep.subr.mxu0 0.0
        %837 = vmatpush1.msra.mxu0 0.0
        %838 = vmatprep.subr.mxu0 0.0
        %839 = vmatpush1.msra.mxu0 0.0
        %840 = vmatprep.subr.mxu0 0.0
        %841 = vmatpush1.msra.mxu0 0.0
        %842 = vmatprep.subr.mxu0 0.0
        %843 = vmatpush1.msra.mxu0 0.0
        %844 = vmatprep.subr.mxu0 0.0
        %845 = vmatpush1.msra.mxu0 0.0
        %846 = vmatprep.subr.mxu0 0.0
        %847 = vmatpush1.msra.mxu0 0.0
        %848 = vmatprep.subr.mxu0 0.0
        %849 = vmatpush1.msra.mxu0 0.0
        %850 = vmatprep.subr.mxu0 0.0
        %851 = vmatpush1.msra.mxu0 0.0
        %852 = vmatprep.subr.mxu0 0.0
        %853 = vmatpush1.msra.mxu0 0.0
        %854 = vmatprep.subr.mxu0 0.0
        %855 = vmatpush1.msra.mxu0 0.0
        %856 = vmatprep.subr.mxu0 0.0
        %857 = vmatpush1.msra.mxu0 0.0
        %858 = vmatprep.subr.mxu0 0.0
        %859 = vmatpush1.msra.mxu0 0.0
        %860 = vmatprep.subr.mxu0 0.0
        %861 = vmatpush1.msra.mxu0 0.0
        %862 = vmatprep.subr.mxu0 0.0
        %863 = vmatpush1.msra.mxu0 0.0
        %864 = vmatprep.subr.mxu0 0.0
        %865 = vmatpush1.msra.mxu0 0.0
        %866 = vmatprep.subr.mxu0 0.0
        %867 = vmatpush1.msra.mxu0 0.0
        %868 = vmatprep.subr.mxu0 0.0
        %869 = vmatpush1.msra.mxu0 0.0
        %870 = vmatprep.subr.mxu0 0.0
        %871 = vmatpush1.msra.mxu0 0.0
        %872 = vmatprep.subr.mxu0 0.0
        %873 = vmatpush1.msra.mxu0 0.0
        %874 = vmatprep.subr.mxu0 0.0
        %875 = vmatpush1.msra.mxu0 0.0
        %876 = vmatprep.subr.mxu0 0.0
        %877 = vmatpush1.msra.mxu0 0.0
        %878 = vmatprep.subr.mxu0 0.0
        %879 = vmatpush1.msra.mxu0 0.0
        %880 = vmatprep.subr.mxu0 0.0
        %881 = vmatpush1.msra.mxu0 0.0
        %882 = vmatprep.mubr.f32.mxu0 0.0
        %883 = vmatmul.mubr.f32.gmra.mrb[0].mxu0 %v813
        %v884 = vpop.f32.mrb[0].mxu0
        %v885 = vadd.f32 %v809, %v884
        %v886 = vpop.f32.mrb[0].mxu0
        %887 = vmatprep.mubr.f32.mxu0 0.0
        %888 = vmatmul.mubr.f32.gmra.mrb[0].mxu0 %v816
        %v889 = vpop.f32.mrb[0].mxu0
        %v890 = vadd.f32 %v809, %v889
        %v891 = vpop.f32.mrb[0].mxu0
        %892 = vdwg.mxu0
        %v893 = vmax.f32 %v885, 0.0
        %v894 = vmax.f32 %v890, 0.0
        %v895 = vld [vmem:[#allocation11] sm:$0xff]
        %v896 = vld [vmem:[#allocation11 + $0x8] sm:$0xff]
        %v897 = vld [vmem:[#allocation11 + $0x10] sm:$0xff]
        %v898 = vld [vmem:[#allocation11 + $0x18] sm:$0xff]
        %v899 = vld [vmem:[%s7] sm:$0x1]
        %v901 = vlaneseq
        %v902 = vshrl.u32 %v901, 7
        %v903 = vsub.s32 0, %v902
        %v904 = vrot.slane %v899, %v903
        %906 = vmatprep.subr.mxu0 0.0
        %907 = vmatpush1.msra.mxu0 %v895
        %908 = vmatprep.subr.mxu0 0.0
        %909 = vmatpush1.msra.mxu0 %v896
        %910 = vmatprep.subr.mxu0 0.0
        %911 = vmatpush1.msra.mxu0 %v897
        %912 = vmatprep.subr.mxu0 0.0
        %913 = vmatpush1.msra.mxu0 %v898
        %914 = vmatprep.subr.mxu0 0.0
        %915 = vmatpush1.msra.mxu0 0.0
        %916 = vmatprep.subr.mxu0 0.0
        %917 = vmatpush1.msra.mxu0 0.0
        %918 = vmatprep.subr.mxu0 0.0
        %919 = vmatpush1.msra.mxu0 0.0
        %920 = vmatprep.subr.mxu0 0.0
        %921 = vmatpush1.msra.mxu0 0.0
        %922 = vmatprep.subr.mxu0 0.0
        %923 = vmatpush1.msra.mxu0 0.0
        %924 = vmatprep.subr.mxu0 0.0
        %925 = vmatpush1.msra.mxu0 0.0
        %926 = vmatprep.subr.mxu0 0.0
        %927 = vmatpush1.msra.mxu0 0.0
        %928 = vmatprep.subr.mxu0 0.0
        %929 = vmatpush1.msra.mxu0 0.0
        %930 = vmatprep.subr.mxu0 0.0
        %931 = vmatpush1.msra.mxu0 0.0
        %932 = vmatprep.subr.mxu0 0.0
        %933 = vmatpush1.msra.mxu0 0.0
        %934 = vmatprep.subr.mxu0 0.0
        %935 = vmatpush1.msra.mxu0 0.0
        %936 = vmatprep.subr.mxu0 0.0
        %937 = vmatpush1.msra.mxu0 0.0
        %938 = vmatprep.subr.mxu0 0.0
        %939 = vmatpush1.msra.mxu0 0.0
        %940 = vmatprep.subr.mxu0 0.0
        %941 = vmatpush1.msra.mxu0 0.0
        %942 = vmatprep.subr.mxu0 0.0
        %943 = vmatpush1.msra.mxu0 0.0
        %944 = vmatprep.subr.mxu0 0.0
        %945 = vmatpush1.msra.mxu0 0.0
        %946 = vmatprep.subr.mxu0 0.0
        %947 = vmatpush1.msra.mxu0 0.0
        %948 = vmatprep.subr.mxu0 0.0
        %949 = vmatpush1.msra.mxu0 0.0
        %950 = vmatprep.subr.mxu0 0.0
        %951 = vmatpush1.msra.mxu0 0.0
        %952 = vmatprep.subr.mxu0 0.0
        %953 = vmatpush1.msra.mxu0 0.0
        %954 = vmatprep.subr.mxu0 0.0
        %955 = vmatpush1.msra.mxu0 0.0
        %956 = vmatprep.subr.mxu0 0.0
        %957 = vmatpush1.msra.mxu0 0.0
        %958 = vmatprep.subr.mxu0 0.0
        %959 = vmatpush1.msra.mxu0 0.0
        %960 = vmatprep.subr.mxu0 0.0
        %961 = vmatpush1.msra.mxu0 0.0
        %962 = vmatprep.subr.mxu0 0.0
        %963 = vmatpush1.msra.mxu0 0.0
        %964 = vmatprep.subr.mxu0 0.0
        %965 = vmatpush1.msra.mxu0 0.0
        %966 = vmatprep.subr.mxu0 0.0
        %967 = vmatpush1.msra.mxu0 0.0
        %968 = vmatprep.subr.mxu0 0.0
        %969 = vmatpush1.msra.mxu0 0.0
        %970 = vmatprep.mubr.f32.mxu0 0.0
        %971 = vmatmul.mubr.f32.gmra.mrb[0].mxu0 %v813
        %v972 = vpop.f32.mrb[0].mxu0
        %v973 = vadd.f32 %v904, %v972
        %v974 = vpop.f32.mrb[0].mxu0
        %975 = vmatprep.mubr.f32.mxu0 0.0
        %976 = vmatmul.mubr.f32.gmra.mrb[0].mxu0 %v816
        %v977 = vpop.f32.mrb[0].mxu0
        %v978 = vadd.f32 %v904, %v977
        %v979 = vpop.f32.mrb[0].mxu0
        %980 = vdwg.mxu0
        %v981 = vmax.f32 %v973, 0.0
        %v982 = vmax.f32 %v978, 0.0
        %v984 = vsel %vm778, %v788, 0
        %986 = vmatprep.subr.mxu0 0.0
        %987 = vmatpush1.msra.mxu0 %v893
        %988 = vmatprep.subr.mxu0 0.0
        %989 = vmatpush1.msra.mxu0 0.0
        %990 = vmatprep.subr.mxu0 0.0
        %991 = vmatpush1.msra.mxu0 0.0
        %992 = vmatprep.subr.mxu0 0.0
        %993 = vmatpush1.msra.mxu0 0.0
        %994 = vmatprep.subr.mxu0 0.0
        %995 = vmatpush1.msra.mxu0 0.0
        %996 = vmatprep.subr.mxu0 0.0
        %997 = vmatpush1.msra.mxu0 0.0
        %998 = vmatprep.subr.mxu0 0.0
        %999 = vmatpush1.msra.mxu0 0.0
        %1000 = vmatprep.subr.mxu0 0.0
        %1001 = vmatpush1.msra.mxu0 0.0
        %1002 = vmatprep.subr.mxu0 0.0
        %1003 = vmatpush1.msra.mxu0 0.0
        %1004 = vmatprep.subr.mxu0 0.0
        %1005 = vmatpush1.msra.mxu0 0.0
        %1006 = vmatprep.subr.mxu0 0.0
        %1007 = vmatpush1.msra.mxu0 0.0
        %1008 = vmatprep.subr.mxu0 0.0
        %1009 = vmatpush1.msra.mxu0 0.0
        %1010 = vmatprep.subr.mxu0 0.0
        %1011 = vmatpush1.msra.mxu0 0.0
        %1012 = vmatprep.subr.mxu0 0.0
        %1013 = vmatpush1.msra.mxu0 0.0
        %1014 = vmatprep.subr.mxu0 0.0
        %1015 = vmatpush1.msra.mxu0 0.0
        %1016 = vmatprep.subr.mxu0 0.0
        %1017 = vmatpush1.msra.mxu0 0.0
        %1018 = vmatprep.subr.mxu0 0.0
        %1019 = vmatpush1.msra.mxu0 0.0
        %1020 = vmatprep.subr.mxu0 0.0
        %1021 = vmatpush1.msra.mxu0 0.0
        %1022 = vmatprep.subr.mxu0 0.0
        %1023 = vmatpush1.msra.mxu0 0.0
        %1024 = vmatprep.subr.mxu0 0.0
        %1025 = vmatpush1.msra.mxu0 0.0
        %1026 = vmatprep.subr.mxu0 0.0
        %1027 = vmatpush1.msra.mxu0 0.0
        %1028 = vmatprep.subr.mxu0 0.0
        %1029 = vmatpush1.msra.mxu0 0.0
        %1030 = vmatprep.subr.mxu0 0.0
        %1031 = vmatpush1.msra.mxu0 0.0
        %1032 = vmatprep.subr.mxu0 0.0
        %1033 = vmatpush1.msra.mxu0 0.0
        %1034 = vmatprep.subr.mxu0 0.0
        %1035 = vmatpush1.msra.mxu0 0.0
        %1036 = vmatprep.subr.mxu0 0.0
        %1037 = vmatpush1.msra.mxu0 0.0
        %1038 = vmatprep.subr.mxu0 0.0
        %1039 = vmatpush1.msra.mxu0 0.0
        %1040 = vmatprep.subr.mxu0 0.0
        %1041 = vmatpush1.msra.mxu0 0.0
        %1042 = vmatprep.subr.mxu0 0.0
        %1043 = vmatpush1.msra.mxu0 0.0
        %1044 = vmatprep.subr.mxu0 0.0
        %1045 = vmatpush1.msra.mxu0 0.0
        %1046 = vmatprep.subr.mxu0 0.0
        %1047 = vmatpush1.msra.mxu0 0.0
        %1048 = vmatprep.subr.mxu0 0.0
        %1049 = vmatpush1.msra.mxu0 0.0
        %1050 = vmatprep.mubr.f32.mxu0 0.0
        %1051 = vmatmul.mubr.f32.gmra.mrb[0].mxu0 %v984
        %v1052 = vpop.f32.mrb[0].mxu0
        %v1053 = vadd.f32 %v981, %v1052
        %v1054 = vpop.f32.mrb[0].mxu0
        %1055 = vdwg.mxu0
        %v1057 = vsel %vm778, %v799, 0
        %1059 = vmatprep.subr.mxu0 0.0
        %1060 = vmatpush1.msra.mxu0 %v894
        %1061 = vmatprep.subr.mxu0 0.0
        %1062 = vmatpush1.msra.mxu0 0.0
        %1063 = vmatprep.subr.mxu0 0.0
        %1064 = vmatpush1.msra.mxu0 0.0
        %1065 = vmatprep.subr.mxu0 0.0
        %1066 = vmatpush1.msra.mxu0 0.0
        %1067 = vmatprep.subr.mxu0 0.0
        %1068 = vmatpush1.msra.mxu0 0.0
        %1069 = vmatprep.subr.mxu0 0.0
        %1070 = vmatpush1.msra.mxu0 0.0
        %1071 = vmatprep.subr.mxu0 0.0
        %1072 = vmatpush1.msra.mxu0 0.0
        %1073 = vmatprep.subr.mxu0 0.0
        %1074 = vmatpush1.msra.mxu0 0.0
        %1075 = vmatprep.subr.mxu0 0.0
        %1076 = vmatpush1.msra.mxu0 0.0
        %1077 = vmatprep.subr.mxu0 0.0
        %1078 = vmatpush1.msra.mxu0 0.0
        %1079 = vmatprep.subr.mxu0 0.0
        %1080 = vmatpush1.msra.mxu0 0.0
        %1081 = vmatprep.subr.mxu0 0.0
        %1082 = vmatpush1.msra.mxu0 0.0
        %1083 = vmatprep.subr.mxu0 0.0
        %1084 = vmatpush1.msra.mxu0 0.0
        %1085 = vmatprep.subr.mxu0 0.0
        %1086 = vmatpush1.msra.mxu0 0.0
        %1087 = vmatprep.subr.mxu0 0.0
        %1088 = vmatpush1.msra.mxu0 0.0
        %1089 = vmatprep.subr.mxu0 0.0
        %1090 = vmatpush1.msra.mxu0 0.0
        %1091 = vmatprep.subr.mxu0 0.0
        %1092 = vmatpush1.msra.mxu0 0.0
        %1093 = vmatprep.subr.mxu0 0.0
        %1094 = vmatpush1.msra.mxu0 0.0
        %1095 = vmatprep.subr.mxu0 0.0
        %1096 = vmatpush1.msra.mxu0 0.0
        %1097 = vmatprep.subr.mxu0 0.0
        %1098 = vmatpush1.msra.mxu0 0.0
        %1099 = vmatprep.subr.mxu0 0.0
        %1100 = vmatpush1.msra.mxu0 0.0
        %1101 = vmatprep.subr.mxu0 0.0
        %1102 = vmatpush1.msra.mxu0 0.0
        %1103 = vmatprep.subr.mxu0 0.0
        %1104 = vmatpush1.msra.mxu0 0.0
        %1105 = vmatprep.subr.mxu0 0.0
        %1106 = vmatpush1.msra.mxu0 0.0
        %1107 = vmatprep.subr.mxu0 0.0
        %1108 = vmatpush1.msra.mxu0 0.0
        %1109 = vmatprep.subr.mxu0 0.0
        %1110 = vmatpush1.msra.mxu0 0.0
        %1111 = vmatprep.subr.mxu0 0.0
        %1112 = vmatpush1.msra.mxu0 0.0
        %1113 = vmatprep.subr.mxu0 0.0
        %1114 = vmatpush1.msra.mxu0 0.0
        %1115 = vmatprep.subr.mxu0 0.0
        %1116 = vmatpush1.msra.mxu0 0.0
        %1117 = vmatprep.subr.mxu0 0.0
        %1118 = vmatpush1.msra.mxu0 0.0
        %1119 = vmatprep.subr.mxu0 0.0
        %1120 = vmatpush1.msra.mxu0 0.0
        %1121 = vmatprep.subr.mxu0 0.0
        %1122 = vmatpush1.msra.mxu0 0.0
        %1123 = vmatprep.mubr.f32.mxu0 0.0
        %1124 = vmatmul.mubr.f32.gmra.mrb[0].mxu0 %v1057
        %v1125 = vpop.f32.mrb[0].mxu0
        %v1126 = vadd.f32 %v982, %v1125
        %v1127 = vpop.f32.mrb[0].mxu0
        %1128 = vdwg.mxu0
        %v1129 = vld [vmem:[#allocation13] sm:$0xff]
        %v1130 = vld [vmem:[#allocation13 + $0x8] sm:$0xff]
        %v1131 = vld [vmem:[#allocation13 + $0x10] sm:$0xff]
        %v1132 = vld [vmem:[#allocation13 + $0x18] sm:$0xff]
        %v1134 = vsel %vm811, %v1053, 0
        %1136 = vmatprep.subr.mxu0 0.0
        %1137 = vmatpush1.msra.mxu0 %v1129
        %1138 = vmatprep.subr.mxu0 0.0
        %1139 = vmatpush1.msra.mxu0 %v1130
        %1140 = vmatprep.subr.mxu0 0.0
        %1141 = vmatpush1.msra.mxu0 %v1131
        %1142 = vmatprep.subr.mxu0 0.0
        %1143 = vmatpush1.msra.mxu0 %v1132
        %1144 = vmatprep.subr.mxu0 0.0
        %1145 = vmatpush1.msra.mxu0 0.0
        %1146 = vmatprep.subr.mxu0 0.0
        %1147 = vmatpush1.msra.mxu0 0.0
        %1148 = vmatprep.subr.mxu0 0.0
        %1149 = vmatpush1.msra.mxu0 0.0
        %1150 = vmatprep.subr.mxu0 0.0
        %1151 = vmatpush1.msra.mxu0 0.0
        %1152 = vmatprep.subr.mxu0 0.0
        %1153 = vmatpush1.msra.mxu0 0.0
        %1154 = vmatprep.subr.mxu0 0.0
        %1155 = vmatpush1.msra.mxu0 0.0
        %1156 = vmatprep.subr.mxu0 0.0
        %1157 = vmatpush1.msra.mxu0 0.0
        %1158 = vmatprep.subr.mxu0 0.0
        %1159 = vmatpush1.msra.mxu0 0.0
        %1160 = vmatprep.subr.mxu0 0.0
        %1161 = vmatpush1.msra.mxu0 0.0
        %1162 = vmatprep.subr.mxu0 0.0
        %1163 = vmatpush1.msra.mxu0 0.0
        %1164 = vmatprep.subr.mxu0 0.0
        %1165 = vmatpush1.msra.mxu0 0.0
        %1166 = vmatprep.subr.mxu0 0.0
        %1167 = vmatpush1.msra.mxu0 0.0
        %1168 = vmatprep.subr.mxu0 0.0
        %1169 = vmatpush1.msra.mxu0 0.0
        %1170 = vmatprep.subr.mxu0 0.0
        %1171 = vmatpush1.msra.mxu0 0.0
        %1172 = vmatprep.subr.mxu0 0.0
        %1173 = vmatpush1.msra.mxu0 0.0
        %1174 = vmatprep.subr.mxu0 0.0
        %1175 = vmatpush1.msra.mxu0 0.0
        %1176 = vmatprep.subr.mxu0 0.0
        %1177 = vmatpush1.msra.mxu0 0.0
        %1178 = vmatprep.subr.mxu0 0.0
        %1179 = vmatpush1.msra.mxu0 0.0
        %1180 = vmatprep.subr.mxu0 0.0
        %1181 = vmatpush1.msra.mxu0 0.0
        %1182 = vmatprep.subr.mxu0 0.0
        %1183 = vmatpush1.msra.mxu0 0.0
        %1184 = vmatprep.subr.mxu0 0.0
        %1185 = vmatpush1.msra.mxu0 0.0
        %1186 = vmatprep.subr.mxu0 0.0
        %1187 = vmatpush1.msra.mxu0 0.0
        %1188 = vmatprep.subr.mxu0 0.0
        %1189 = vmatpush1.msra.mxu0 0.0
        %1190 = vmatprep.subr.mxu0 0.0
        %1191 = vmatpush1.msra.mxu0 0.0
        %1192 = vmatprep.subr.mxu0 0.0
        %1193 = vmatpush1.msra.mxu0 0.0
        %1194 = vmatprep.subr.mxu0 0.0
        %1195 = vmatpush1.msra.mxu0 0.0
        %1196 = vmatprep.subr.mxu0 0.0
        %1197 = vmatpush1.msra.mxu0 0.0
        %1198 = vmatprep.subr.mxu0 0.0
        %1199 = vmatpush1.msra.mxu0 0.0
        %1200 = vmatprep.mubr.f32.mxu0 0.0
        %1201 = vmatmul.mubr.f32.gmra.mrb[0].mxu0 %v1134
        %v1202 = vpop.f32.mrb[0].mxu0
        %v1203 = vadd.f32 0.0, %v1202
        %v1204 = vpop.f32.mrb[0].mxu0
        %1205 = vdwg.mxu0
        %v1207 = vsel %vm811, %v1203, 0
        %v1210 = vsel %vm811, %v1126, 0
        %1212 = vmatprep.subr.mxu0 0.0
        %1213 = vmatpush1.xpose.msra.mxu0 %v1210
        %1214 = vmatprep.subr.mxu0 0.0
        %1215 = vmatpush1.xpose.msra.mxu0 0.0
        %1216 = vmatprep.subr.mxu0 0.0
        %1217 = vmatpush1.xpose.msra.mxu0 0.0
        %1218 = vmatprep.subr.mxu0 0.0
        %1219 = vmatpush1.xpose.msra.mxu0 0.0
        %1220 = vmatprep.subr.mxu0 0.0
        %1221 = vmatpush1.xpose.msra.mxu0 0.0
        %1222 = vmatprep.subr.mxu0 0.0
        %1223 = vmatpush1.xpose.msra.mxu0 0.0
        %1224 = vmatprep.subr.mxu0 0.0
        %1225 = vmatpush1.xpose.msra.mxu0 0.0
        %1226 = vmatprep.subr.mxu0 0.0
        %1227 = vmatpush1.xpose.msra.mxu0 0.0
        %1228 = vmatprep.subr.mxu0 0.0
        %1229 = vmatpush1.xpose.msra.mxu0 0.0
        %1230 = vmatprep.subr.mxu0 0.0
        %1231 = vmatpush1.xpose.msra.mxu0 0.0
        %1232 = vmatprep.subr.mxu0 0.0
        %1233 = vmatpush1.xpose.msra.mxu0 0.0
        %1234 = vmatprep.subr.mxu0 0.0
        %1235 = vmatpush1.xpose.msra.mxu0 0.0
        %1236 = vmatprep.subr.mxu0 0.0
        %1237 = vmatpush1.xpose.msra.mxu0 0.0
        %1238 = vmatprep.subr.mxu0 0.0
        %1239 = vmatpush1.xpose.msra.mxu0 0.0
        %1240 = vmatprep.subr.mxu0 0.0
        %1241 = vmatpush1.xpose.msra.mxu0 0.0
        %1242 = vmatprep.subr.mxu0 0.0
        %1243 = vmatpush1.xpose.msra.mxu0 0.0
        %1244 = vmatprep.subr.mxu0 0.0
        %1245 = vmatpush1.xpose.msra.mxu0 0.0
        %1246 = vmatprep.subr.mxu0 0.0
        %1247 = vmatpush1.xpose.msra.mxu0 0.0
        %1248 = vmatprep.subr.mxu0 0.0
        %1249 = vmatpush1.xpose.msra.mxu0 0.0
        %1250 = vmatprep.subr.mxu0 0.0
        %1251 = vmatpush1.xpose.msra.mxu0 0.0
        %1252 = vmatprep.subr.mxu0 0.0
        %1253 = vmatpush1.xpose.msra.mxu0 0.0
        %1254 = vmatprep.subr.mxu0 0.0
        %1255 = vmatpush1.xpose.msra.mxu0 0.0
        %1256 = vmatprep.subr.mxu0 0.0
        %1257 = vmatpush1.xpose.msra.mxu0 0.0
        %1258 = vmatprep.subr.mxu0 0.0
        %1259 = vmatpush1.xpose.msra.mxu0 0.0
        %1260 = vmatprep.subr.mxu0 0.0
        %1261 = vmatpush1.xpose.msra.mxu0 0.0
        %1262 = vmatprep.subr.mxu0 0.0
        %1263 = vmatpush1.xpose.msra.mxu0 0.0
        %1264 = vmatprep.subr.mxu0 0.0
        %1265 = vmatpush1.xpose.msra.mxu0 0.0
        %1266 = vmatprep.subr.mxu0 0.0
        %1267 = vmatpush1.xpose.msra.mxu0 0.0
        %1268 = vmatprep.subr.mxu0 0.0
        %1269 = vmatpush1.xpose.msra.mxu0 0.0
        %1270 = vmatprep.subr.mxu0 0.0
        %1271 = vmatpush1.xpose.msra.mxu0 0.0
        %1272 = vmatprep.subr.mxu0 0.0
        %1273 = vmatpush1.xpose.msra.mxu0 0.0
        %1274 = vmatprep.subr.mxu0 0.0
        %1275 = vmatpush1.xpose.msra.mxu0 0.0
        %1276 = vmatprep.mubr.f32.mxu0 0.0
        %1277 = vmatmul.mubr.f32.gmra.mrb[0].mxu0 %v1207
        %v1278 = vpop.f32.mrb[0].mxu0
        %v1279 = vadd.f32 0.0, %v1278
        %v1280 = vpop.f32.mrb[0].mxu0
        %1281 = vdwg.mxu0
        %v1282 = vmul.f32 %v1279, 20.0
        %v1283 = vsel %vm778, %v1282, -inf
        %1284 = vmax.xlane.f32.xlu0 %v1283
        %v1285 = vpop.xlane.xlu0 %1284
        %v1286 = vsub.f32 %v1282, %v1285
        %v1287 = vmul.f32 %v1286, 1.442695
        %v1288 = vpow.pop %v1287
        %v1289 = vsel %vm778, %v1288, 0.0
        %1290 = vadd.xlane.f32.xlu0 %v1289
        %v1291 = vpop.xlane.xlu0 %1290
        %v1292 = vlog2.pop %v1291
        %v1293 = vmul.f32 %v1292, 0.6931472
        %v1294 = vadd.f32 %v1285, %v1293
        %v1295 = vsub.f32 %v1282, %v1294
        %v1296 = vsel %vm778, %v1295, -inf
        %v1297 = vrot.slane %v1296, 4
        %v1298 = vmax.f32 %v1296, %v1297
        %v1299 = vrot.slane %v1298, 2
        %v1300 = vmax.f32 %v1298, %v1299
        %v1301 = vrot.slane %v1300, 1
        %v1302 = vmax.f32 %v1300, %v1301
        %v1303 = vsub.f32 %v1295, %v1302
        %v1304 = vmul.f32 %v1303, 1.442695
        %v1305 = vpow.pop %v1304
        %v1306 = vsel %vm778, %v1305, 0.0
        %v1307 = vrot.slane %v1306, 4
        %v1308 = vadd.f32 %v1306, %v1307
        %v1309 = vrot.slane %v1308, 2
        %v1310 = vadd.f32 %v1308, %v1309
        %v1311 = vrot.slane %v1310, 1
        %v1312 = vadd.f32 %v1310, %v1311
        %v1313 = vlog2.pop %v1312
        %v1314 = vmul.f32 %v1313, 0.6931472
        %v1315 = vadd.f32 %v1302, %v1314
        %v1316 = vsub.f32 %v1295, %v1315
        %v1317 = vsel %vm778, %v1316, -inf
        %1318 = vmax.xlane.f32.xlu0 %v1317
        %v1319 = vpop.xlane.xlu0 %1318
        %v1320 = vsub.f32 %v1316, %v1319
        %v1321 = vmul.f32 %v1320, 1.442695
        %v1322 = vpow.pop %v1321
        %v1323 = vsel %vm778, %v1322, 0.0
        %1324 = vadd.xlane.f32.xlu0 %v1323
        %v1325 = vpop.xlane.xlu0 %1324
        %v1326 = vlog2.pop %v1325
        %v1327 = vmul.f32 %v1326, 0.6931472
        %v1328 = vadd.f32 %v1319, %v1327
        %v1329 = vsub.f32 %v1316, %v1328
        %v1330 = vsel %vm778, %v1329, -inf
        %v1331 = vrot.slane %v1330, 4
        %v1332 = vmax.f32 %v1330, %v1331
        %v1333 = vrot.slane %v1332, 2
        %v1334 = vmax.f32 %v1332, %v1333
        %v1335 = vrot.slane %v1334, 1
        %v1336 = vmax.f32 %v1334, %v1335
        %v1337 = vsub.f32 %v1329, %v1336
        %v1338 = vmul.f32 %v1337, 1.442695
        %v1339 = vpow.pop %v1338
        %v1340 = vsel %vm778, %v1339, 0.0
        %v1341 = vrot.slane %v1340, 4
        %v1342 = vadd.f32 %v1340, %v1341
        %v1343 = vrot.slane %v1342, 2
        %v1344 = vadd.f32 %v1342, %v1343
        %v1345 = vrot.slane %v1344, 1
        %v1346 = vadd.f32 %v1344, %v1345
        %v1347 = vlog2.pop %v1346
        %v1348 = vmul.f32 %v1347, 0.6931472
        %v1349 = vadd.f32 %v1336, %v1348
        %v1350 = vsub.f32 %v1329, %v1349
        %v1351 = vsel %vm778, %v1350, -inf
        %1352 = vmax.xlane.f32.xlu0 %v1351
        %v1353 = vpop.xlane.xlu0 %1352
        %v1354 = vsub.f32 %v1350, %v1353
        %v1355 = vmul.f32 %v1354, 1.442695
        %v1356 = vpow.pop %v1355
        %v1357 = vsel %vm778, %v1356, 0.0
        %1358 = vadd.xlane.f32.xlu0 %v1357
        %v1359 = vpop.xlane.xlu0 %1358
        %v1360 = vlog2.pop %v1359
        %v1361 = vmul.f32 %v1360, 0.6931472
        %v1362 = vadd.f32 %v1353, %v1361
        %v1363 = vsub.f32 %v1350, %v1362
        %v1364 = vsel %vm778, %v1363, -inf
        %v1365 = vrot.slane %v1364, 4
        %v1366 = vmax.f32 %v1364, %v1365
        %v1367 = vrot.slane %v1366, 2
        %v1368 = vmax.f32 %v1366, %v1367
        %v1369 = vrot.slane %v1368, 1
        %v1370 = vmax.f32 %v1368, %v1369
        %v1371 = vsub.f32 %v1363, %v1370
        %v1372 = vmul.f32 %v1371, 1.442695
        %v1373 = vpow.pop %v1372
        %v1374 = vsel %vm778, %v1373, 0.0
        %v1375 = vrot.slane %v1374, 4
        %v1376 = vadd.f32 %v1374, %v1375
        %v1377 = vrot.slane %v1376, 2
        %v1378 = vadd.f32 %v1376, %v1377
        %v1379 = vrot.slane %v1378, 1
        %v1380 = vadd.f32 %v1378, %v1379
        %v1381 = vlog2.pop %v1380
        %v1382 = vmul.f32 %v1381, 0.6931472
        %v1383 = vadd.f32 %v1370, %v1382
        %v1384 = vsub.f32 %v1363, %v1383
        %v1385 = vsel %vm778, %v1384, -inf
        %1386 = vmax.xlane.f32.xlu0 %v1385
        %v1387 = vpop.xlane.xlu0 %1386
        %v1388 = vsub.f32 %v1384, %v1387
        %v1389 = vmul.f32 %v1388, 1.442695
        %v1390 = vpow.pop %v1389
        %v1391 = vsel %vm778, %v1390, 0.0
        %1392 = vadd.xlane.f32.xlu0 %v1391
        %v1393 = vpop.xlane.xlu0 %1392
        %v1394 = vlog2.pop %v1393
        %v1395 = vmul.f32 %v1394, 0.6931472
        %v1396 = vadd.f32 %v1387, %v1395
        %v1397 = vsub.f32 %v1384, %v1396
        %v1398 = vsel %vm778, %v1397, -inf
        %v1399 = vrot.slane %v1398, 4
        %v1400 = vmax.f32 %v1398, %v1399
        %v1401 = vrot.slane %v1400, 2
        %v1402 = vmax.f32 %v1400, %v1401
        %v1403 = vrot.slane %v1402, 1
        %v1404 = vmax.f32 %v1402, %v1403
        %v1405 = vsub.f32 %v1397, %v1404
        %v1406 = vmul.f32 %v1405, 1.442695
        %v1407 = vpow.pop %v1406
        %v1408 = vsel %vm778, %v1407, 0.0
        %v1409 = vrot.slane %v1408, 4
        %v1410 = vadd.f32 %v1408, %v1409
        %v1411 = vrot.slane %v1410, 2
        %v1412 = vadd.f32 %v1410, %v1411
        %v1413 = vrot.slane %v1412, 1
        %v1414 = vadd.f32 %v1412, %v1413
        %v1415 = vlog2.pop %v1414
        %v1416 = vmul.f32 %v1415, 0.6931472
        %v1417 = vadd.f32 %v1404, %v1416
        %v1418 = vsub.f32 %v1397, %v1417
        %v1419 = vsel %vm778, %v1418, -inf
        %1420 = vmax.xlane.f32.xlu0 %v1419
        %v1421 = vpop.xlane.xlu0 %1420
        %v1422 = vsub.f32 %v1418, %v1421
        %v1423 = vmul.f32 %v1422, 1.442695
        %v1424 = vpow.pop %v1423
        %v1425 = vsel %vm778, %v1424, 0.0
        %1426 = vadd.xlane.f32.xlu0 %v1425
        %v1427 = vpop.xlane.xlu0 %1426
        %v1428 = vlog2.pop %v1427
        %v1429 = vmul.f32 %v1428, 0.6931472
        %v1430 = vadd.f32 %v1421, %v1429
        %v1431 = vsub.f32 %v1418, %v1430
        %v1432 = vsel %vm778, %v1431, -inf
        %v1433 = vrot.slane %v1432, 4
        %v1434 = vmax.f32 %v1432, %v1433
        %v1435 = vrot.slane %v1434, 2
        %v1436 = vmax.f32 %v1434, %v1435
        %v1437 = vrot.slane %v1436, 1
        %v1438 = vmax.f32 %v1436, %v1437
        %v1439 = vsub.f32 %v1431, %v1438
        %v1440 = vmul.f32 %v1439, 1.442695
        %v1441 = vpow.pop %v1440
        %v1442 = vsel %vm778, %v1441, 0.0
        %v1443 = vrot.slane %v1442, 4
        %v1444 = vadd.f32 %v1442, %v1443
        %v1445 = vrot.slane %v1444, 2
        %v1446 = vadd.f32 %v1444, %v1445
        %v1447 = vrot.slane %v1446, 1
        %v1448 = vadd.f32 %v1446, %v1447
        %v1449 = vlog2.pop %v1448
        %v1450 = vmul.f32 %v1449, 0.6931472
        %v1451 = vadd.f32 %v1438, %v1450
        %v1452 = vsub.f32 %v1431, %v1451
        %v1453 = vmul.f32 %v1452, 1.442695
        %v1454 = vpow.pop %v1453
        %v1456 = vsel %vm778, %v1454, 0
        %1458 = vmatprep.subr.mxu0 0.0
        %1459 = vmatpush1.msra.mxu0 %v1126
        %1460 = vmatprep.subr.mxu0 0.0
        %1461 = vmatpush1.msra.mxu0 0.0
        %1462 = vmatprep.subr.mxu0 0.0
        %1463 = vmatpush1.msra.mxu0 0.0
        %1464 = vmatprep.subr.mxu0 0.0
        %1465 = vmatpush1.msra.mxu0 0.0
        %1466 = vmatprep.subr.mxu0 0.0
        %1467 = vmatpush1.msra.mxu0 0.0
        %1468 = vmatprep.subr.mxu0 0.0
        %1469 = vmatpush1.msra.mxu0 0.0
        %1470 = vmatprep.subr.mxu0 0.0
        %1471 = vmatpush1.msra.mxu0 0.0
        %1472 = vmatprep.subr.mxu0 0.0
        %1473 = vmatpush1.msra.mxu0 0.0
        %1474 = vmatprep.subr.mxu0 0.0
        %1475 = vmatpush1.msra.mxu0 0.0
        %1476 = vmatprep.subr.mxu0 0.0
        %1477 = vmatpush1.msra.mxu0 0.0
        %1478 = vmatprep.subr.mxu0 0.0
        %1479 = vmatpush1.msra.mxu0 0.0
        %1480 = vmatprep.subr.mxu0 0.0
        %1481 = vmatpush1.msra.mxu0 0.0
        %1482 = vmatprep.subr.mxu0 0.0
        %1483 = vmatpush1.msra.mxu0 0.0
        %1484 = vmatprep.subr.mxu0 0.0
        %1485 = vmatpush1.msra.mxu0 0.0
        %1486 = vmatprep.subr.mxu0 0.0
        %1487 = vmatpush1.msra.mxu0 0.0
        %1488 = vmatprep.subr.mxu0 0.0
        %1489 = vmatpush1.msra.mxu0 0.0
        %1490 = vmatprep.subr.mxu0 0.0
        %1491 = vmatpush1.msra.mxu0 0.0
        %1492 = vmatprep.subr.mxu0 0.0
        %1493 = vmatpush1.msra.mxu0 0.0
        %1494 = vmatprep.subr.mxu0 0.0
        %1495 = vmatpush1.msra.mxu0 0.0
        %1496 = vmatprep.subr.mxu0 0.0
        %1497 = vmatpush1.msra.mxu0 0.0
        %1498 = vmatprep.subr.mxu0 0.0
        %1499 = vmatpush1.msra.mxu0 0.0
        %1500 = vmatprep.subr.mxu0 0.0
        %1501 = vmatpush1.msra.mxu0 0.0
        %1502 = vmatprep.subr.mxu0 0.0
        %1503 = vmatpush1.msra.mxu0 0.0
        %1504 = vmatprep.subr.mxu0 0.0
        %1505 = vmatpush1.msra.mxu0 0.0
        %1506 = vmatprep.subr.mxu0 0.0
        %1507 = vmatpush1.msra.mxu0 0.0
        %1508 = vmatprep.subr.mxu0 0.0
        %1509 = vmatpush1.msra.mxu0 0.0
        %1510 = vmatprep.subr.mxu0 0.0
        %1511 = vmatpush1.msra.mxu0 0.0
        %1512 = vmatprep.subr.mxu0 0.0
        %1513 = vmatpush1.msra.mxu0 0.0
        %1514 = vmatprep.subr.mxu0 0.0
        %1515 = vmatpush1.msra.mxu0 0.0
        %1516 = vmatprep.subr.mxu0 0.0
        %1517 = vmatpush1.msra.mxu0 0.0
        %1518 = vmatprep.subr.mxu0 0.0
        %1519 = vmatpush1.msra.mxu0 0.0
        %1520 = vmatprep.subr.mxu0 0.0
        %1521 = vmatpush1.msra.mxu0 0.0
        %1522 = vmatprep.mubr.f32.mxu0 0.0
        %1523 = vmatmul.mubr.f32.gmra.mrb[0].mxu0 %v1456
        %v1524 = vpop.f32.mrb[0].mxu0
        %v1525 = vadd.f32 0.0, %v1524
        %v1526 = vpop.f32.mrb[0].mxu0
        %1527 = vdwg.mxu0
        %1528 = vxpose.xlu0.b32.start [1/16] %v1454, 128
        %1529 = vxpose.xlu0.b32.cont [2/16] 0.0, 128
        %1530 = vxpose.xlu0.b32.cont [3/16] 0.0, 128
        %1531 = vxpose.xlu0.b32.cont [4/16] 0.0, 128
        %1532 = vxpose.xlu0.b32.cont [5/16] 0.0, 128
        %1533 = vxpose.xlu0.b32.cont [6/16] 0.0, 128
        %1534 = vxpose.xlu0.b32.cont [7/16] 0.0, 128
        %1535 = vxpose.xlu0.b32.cont [8/16] 0.0, 128
        %1536 = vxpose.xlu0.b32.cont [9/16] 0.0, 128
        %1537 = vxpose.xlu0.b32.cont [10/16] 0.0, 128
        %1538 = vxpose.xlu0.b32.cont [11/16] 0.0, 128
        %1539 = vxpose.xlu0.b32.cont [12/16] 0.0, 128
        %1540 = vxpose.xlu0.b32.cont [13/16] 0.0, 128
        %1541 = vxpose.xlu0.b32.cont [14/16] 0.0, 128
        %1542 = vxpose.xlu0.b32.cont [15/16] 0.0, 128
        %1543 = vxpose.xlu0.b32.end [16/16] 0.0, 128
        %v1544 = vpop.trf.xlu0
        %v1545 = vpop.trf.xlu0
        %v1546 = vpop.trf.xlu0
        %v1547 = vpop.trf.xlu0
        %v1548 = vpop.trf.xlu0
        %v1549 = vpop.trf.xlu0
        %v1550 = vpop.trf.xlu0
        %v1551 = vpop.trf.xlu0
        %v1552 = vpop.trf.xlu0
        %v1553 = vpop.trf.xlu0
        %v1554 = vpop.trf.xlu0
        %v1555 = vpop.trf.xlu0
        %v1556 = vpop.trf.xlu0
        %v1557 = vpop.trf.xlu0
        %v1558 = vpop.trf.xlu0
        %v1559 = vpop.trf.xlu0
        %v1561 = vsel %vm778, %v1544, 0
        %1563 = vmatprep.subr.mxu0 0.0
        %1564 = vmatpush1.msra.mxu0 %v1053
        %1565 = vmatprep.subr.mxu0 0.0
        %1566 = vmatpush1.msra.mxu0 0.0
        %1567 = vmatprep.subr.mxu0 0.0
        %1568 = vmatpush1.msra.mxu0 0.0
        %1569 = vmatprep.subr.mxu0 0.0
        %1570 = vmatpush1.msra.mxu0 0.0
        %1571 = vmatprep.subr.mxu0 0.0
        %1572 = vmatpush1.msra.mxu0 0.0
        %1573 = vmatprep.subr.mxu0 0.0
        %1574 = vmatpush1.msra.mxu0 0.0
        %1575 = vmatprep.subr.mxu0 0.0
        %1576 = vmatpush1.msra.mxu0 0.0
        %1577 = vmatprep.subr.mxu0 0.0
        %1578 = vmatpush1.msra.mxu0 0.0
        %1579 = vmatprep.subr.mxu0 0.0
        %1580 = vmatpush1.msra.mxu0 0.0
        %1581 = vmatprep.subr.mxu0 0.0
        %1582 = vmatpush1.msra.mxu0 0.0
        %1583 = vmatprep.subr.mxu0 0.0
        %1584 = vmatpush1.msra.mxu0 0.0
        %1585 = vmatprep.subr.mxu0 0.0
        %1586 = vmatpush1.msra.mxu0 0.0
        %1587 = vmatprep.subr.mxu0 0.0
        %1588 = vmatpush1.msra.mxu0 0.0
        %1589 = vmatprep.subr.mxu0 0.0
        %1590 = vmatpush1.msra.mxu0 0.0
        %1591 = vmatprep.subr.mxu0 0.0
        %1592 = vmatpush1.msra.mxu0 0.0
        %1593 = vmatprep.subr.mxu0 0.0
        %1594 = vmatpush1.msra.mxu0 0.0
        %1595 = vmatprep.subr.mxu0 0.0
        %1596 = vmatpush1.msra.mxu0 0.0
        %1597 = vmatprep.subr.mxu0 0.0
        %1598 = vmatpush1.msra.mxu0 0.0
        %1599 = vmatprep.subr.mxu0 0.0
        %1600 = vmatpush1.msra.mxu0 0.0
        %1601 = vmatprep.subr.mxu0 0.0
        %1602 = vmatpush1.msra.mxu0 0.0
        %1603 = vmatprep.subr.mxu0 0.0
        %1604 = vmatpush1.msra.mxu0 0.0
        %1605 = vmatprep.subr.mxu0 0.0
        %1606 = vmatpush1.msra.mxu0 0.0
        %1607 = vmatprep.subr.mxu0 0.0
        %1608 = vmatpush1.msra.mxu0 0.0
        %1609 = vmatprep.subr.mxu0 0.0
        %1610 = vmatpush1.msra.mxu0 0.0
        %1611 = vmatprep.subr.mxu0 0.0
        %1612 = vmatpush1.msra.mxu0 0.0
        %1613 = vmatprep.subr.mxu0 0.0
        %1614 = vmatpush1.msra.mxu0 0.0
        %1615 = vmatprep.subr.mxu0 0.0
        %1616 = vmatpush1.msra.mxu0 0.0
        %1617 = vmatprep.subr.mxu0 0.0
        %1618 = vmatpush1.msra.mxu0 0.0
        %1619 = vmatprep.subr.mxu0 0.0
        %1620 = vmatpush1.msra.mxu0 0.0
        %1621 = vmatprep.subr.mxu0 0.0
        %1622 = vmatpush1.msra.mxu0 0.0
        %1623 = vmatprep.subr.mxu0 0.0
        %1624 = vmatpush1.msra.mxu0 0.0
        %1625 = vmatprep.subr.mxu0 0.0
        %1626 = vmatpush1.msra.mxu0 0.0
        %1627 = vmatprep.mubr.f32.mxu0 0.0
        %1628 = vmatmul.mubr.f32.gmra.mrb[0].mxu0 %v1561
        %v1629 = vpop.f32.mrb[0].mxu0
        %v1630 = vadd.f32 0.0, %v1629
        %v1631 = vpop.f32.mrb[0].mxu0
        %1632 = vdwg.mxu0
        %v1633 = vld [vmem:[#allocation17] sm:$0xff]
        %v1634 = vld [vmem:[#allocation17 + $0x8] sm:$0xff]
        %v1635 = vld [vmem:[#allocation17 + $0x10] sm:$0xff]
        %v1636 = vld [vmem:[#allocation17 + $0x18] sm:$0xff]
        %v1637 = vld [vmem:[#allocation19] sm:$0xff]
        %v1638 = vld [vmem:[#allocation19 + $0x8] sm:$0xff]
        %v1639 = vld [vmem:[#allocation19 + $0x10] sm:$0xff]
        %v1640 = vld [vmem:[#allocation19 + $0x18] sm:$0xff]
        %v1641 = vld [vmem:[%s16] sm:$0x1]
        %v1643 = vsel %vm811, %v1525, 0
        %1645 = vmatprep.subr.mxu0 0.0
        %1646 = vmatpush1.msra.mxu0 %v1637
        %1647 = vmatprep.subr.mxu0 0.0
        %1648 = vmatpush1.msra.mxu0 %v1638
        %1649 = vmatprep.subr.mxu0 0.0
        %1650 = vmatpush1.msra.mxu0 %v1639
        %1651 = vmatprep.subr.mxu0 0.0
        %1652 = vmatpush1.msra.mxu0 %v1640
        %1653 = vmatprep.subr.mxu0 0.0
        %1654 = vmatpush1.msra.mxu0 0.0
        %1655 = vmatprep.subr.mxu0 0.0
        %1656 = vmatpush1.msra.mxu0 0.0
        %1657 = vmatprep.subr.mxu0 0.0
        %1658 = vmatpush1.msra.mxu0 0.0
        %1659 = vmatprep.subr.mxu0 0.0
        %1660 = vmatpush1.msra.mxu0 0.0
        %1661 = vmatprep.subr.mxu0 0.0
        %1662 = vmatpush1.msra.mxu0 0.0
        %1663 = vmatprep.subr.mxu0 0.0
        %1664 = vmatpush1.msra.mxu0 0.0
        %1665 = vmatprep.subr.mxu0 0.0
        %1666 = vmatpush1.msra.mxu0 0.0
        %1667 = vmatprep.subr.mxu0 0.0
        %1668 = vmatpush1.msra.mxu0 0.0
        %1669 = vmatprep.subr.mxu0 0.0
        %1670 = vmatpush1.msra.mxu0 0.0
        %1671 = vmatprep.subr.mxu0 0.0
        %1672 = vmatpush1.msra.mxu0 0.0
        %1673 = vmatprep.subr.mxu0 0.0
        %1674 = vmatpush1.msra.mxu0 0.0
        %1675 = vmatprep.subr.mxu0 0.0
        %1676 = vmatpush1.msra.mxu0 0.0
        %1677 = vmatprep.subr.mxu0 0.0
        %1678 = vmatpush1.msra.mxu0 0.0
        %1679 = vmatprep.subr.mxu0 0.0
        %1680 = vmatpush1.msra.mxu0 0.0
        %1681 = vmatprep.subr.mxu0 0.0
        %1682 = vmatpush1.msra.mxu0 0.0
        %1683 = vmatprep.subr.mxu0 0.0
        %1684 = vmatpush1.msra.mxu0 0.0
        %1685 = vmatprep.subr.mxu0 0.0
        %1686 = vmatpush1.msra.mxu0 0.0
        %1687 = vmatprep.subr.mxu0 0.0
        %1688 = vmatpush1.msra.mxu0 0.0
        %1689 = vmatprep.subr.mxu0 0.0
        %1690 = vmatpush1.msra.mxu0 0.0
        %1691 = vmatprep.subr.mxu0 0.0
        %1692 = vmatpush1.msra.mxu0 0.0
        %1693 = vmatprep.subr.mxu0 0.0
        %1694 = vmatpush1.msra.mxu0 0.0
        %1695 = vmatprep.subr.mxu0 0.0
        %1696 = vmatpush1.msra.mxu0 0.0
        %1697 = vmatprep.subr.mxu0 0.0
        %1698 = vmatpush1.msra.mxu0 0.0
        %1699 = vmatprep.subr.mxu0 0.0
        %1700 = vmatpush1.msra.mxu0 0.0
        %1701 = vmatprep.subr.mxu0 0.0
        %1702 = vmatpush1.msra.mxu0 0.0
        %1703 = vmatprep.subr.mxu0 0.0
        %1704 = vmatpush1.msra.mxu0 0.0
        %1705 = vmatprep.subr.mxu0 0.0
        %1706 = vmatpush1.msra.mxu0 0.0
        %1707 = vmatprep.subr.mxu0 0.0
        %1708 = vmatpush1.msra.mxu0 0.0
        %1709 = vmatprep.mubr.f32.mxu0 0.0
        %1710 = vmatmul.mubr.f32.gmra.mrb[0].mxu0 %v1643
        %v1711 = vpop.f32.mrb[0].mxu0
        %v1712 = vadd.f32 0.0, %v1711
        %v1713 = vpop.f32.mrb[0].mxu0
        %1714 = vdwg.mxu0
        %1715 = vmatprep.subr.mxu0 0.0
        %1716 = vmatpush1.msra.mxu0 %v1633
        %1717 = vmatprep.subr.mxu0 0.0
        %1718 = vmatpush1.msra.mxu0 %v1634
        %1719 = vmatprep.subr.mxu0 0.0
        %1720 = vmatpush1.msra.mxu0 %v1635
        %1721 = vmatprep.subr.mxu0 0.0
        %1722 = vmatpush1.msra.mxu0 %v1636
        %1723 = vmatprep.subr.mxu0 0.0
        %1724 = vmatpush1.msra.mxu0 0.0
        %1725 = vmatprep.subr.mxu0 0.0
        %1726 = vmatpush1.msra.mxu0 0.0
        %1727 = vmatprep.subr.mxu0 0.0
        %1728 = vmatpush1.msra.mxu0 0.0
        %1729 = vmatprep.subr.mxu0 0.0
        %1730 = vmatpush1.msra.mxu0 0.0
        %1731 = vmatprep.subr.mxu0 0.0
        %1732 = vmatpush1.msra.mxu0 0.0
        %1733 = vmatprep.subr.mxu0 0.0
        %1734 = vmatpush1.msra.mxu0 0.0
        %1735 = vmatprep.subr.mxu0 0.0
        %1736 = vmatpush1.msra.mxu0 0.0
        %1737 = vmatprep.subr.mxu0 0.0
        %1738 = vmatpush1.msra.mxu0 0.0
        %1739 = vmatprep.subr.mxu0 0.0
        %1740 = vmatpush1.msra.mxu0 0.0
        %1741 = vmatprep.subr.mxu0 0.0
        %1742 = vmatpush1.msra.mxu0 0.0
        %1743 = vmatprep.subr.mxu0 0.0
        %1744 = vmatpush1.msra.mxu0 0.0
        %1745 = vmatprep.subr.mxu0 0.0
        %1746 = vmatpush1.msra.mxu0 0.0
        %1747 = vmatprep.subr.mxu0 0.0
        %1748 = vmatpush1.msra.mxu0 0.0
        %1749 = vmatprep.subr.mxu0 0.0
        %1750 = vmatpush1.msra.mxu0 0.0
        %1751 = vmatprep.subr.mxu0 0.0
        %1752 = vmatpush1.msra.mxu0 0.0
        %1753 = vmatprep.subr.mxu0 0.0
        %1754 = vmatpush1.msra.mxu0 0.0
        %1755 = vmatprep.subr.mxu0 0.0
        %1756 = vmatpush1.msra.mxu0 0.0
        %1757 = vmatprep.subr.mxu0 0.0
        %1758 = vmatpush1.msra.mxu0 0.0
        %1759 = vmatprep.subr.mxu0 0.0
        %1760 = vmatpush1.msra.mxu0 0.0
        %1761 = vmatprep.subr.mxu0 0.0
        %1762 = vmatpush1.msra.mxu0 0.0
        %1763 = vmatprep.subr.mxu0 0.0
        %1764 = vmatpush1.msra.mxu0 0.0
        %1765 = vmatprep.subr.mxu0 0.0
        %1766 = vmatpush1.msra.mxu0 0.0
        %1767 = vmatprep.subr.mxu0 0.0
        %1768 = vmatpush1.msra.mxu0 0.0
        %1769 = vmatprep.subr.mxu0 0.0
        %1770 = vmatpush1.msra.mxu0 0.0
        %1771 = vmatprep.subr.mxu0 0.0
        %1772 = vmatpush1.msra.mxu0 0.0
        %1773 = vmatprep.subr.mxu0 0.0
        %1774 = vmatpush1.msra.mxu0 0.0
        %1775 = vmatprep.subr.mxu0 0.0
        %1776 = vmatpush1.msra.mxu0 0.0
        %1777 = vmatprep.subr.mxu0 0.0
        %1778 = vmatpush1.msra.mxu0 0.0
        %1779 = vmatprep.mubr.f32.mxu0 0.0
        %1780 = vmatmul.mubr.f32.gmra.mrb[0].mxu0 %v1134
        %v1781 = vpop.f32.mrb[0].mxu0
        %v1782 = vadd.f32 %v1712, %v1781
        %v1783 = vpop.f32.mrb[0].mxu0
        %1784 = vdwg.mxu0
        %v1786 = vlaneseq
        %v1787 = vshrl.u32 %v1786, 7
        %v1788 = vsub.s32 0, %v1787
        %v1789 = vrot.slane %v1641, %v1788
        %v1791 = vadd.f32 %v1782, %v1789
        %v1793 = vsel %vm811, %v1630, 0
        %1795 = vmatprep.subr.mxu0 0.0
        %1796 = vmatpush1.msra.mxu0 %v1637
        %1797 = vmatprep.subr.mxu0 0.0
        %1798 = vmatpush1.msra.mxu0 %v1638
        %1799 = vmatprep.subr.mxu0 0.0
        %1800 = vmatpush1.msra.mxu0 %v1639
        %1801 = vmatprep.subr.mxu0 0.0
        %1802 = vmatpush1.msra.mxu0 %v1640
        %1803 = vmatprep.subr.mxu0 0.0
        %1804 = vmatpush1.msra.mxu0 0.0
        %1805 = vmatprep.subr.mxu0 0.0
        %1806 = vmatpush1.msra.mxu0 0.0
        %1807 = vmatprep.subr.mxu0 0.0
        %1808 = vmatpush1.msra.mxu0 0.0
        %1809 = vmatprep.subr.mxu0 0.0
        %1810 = vmatpush1.msra.mxu0 0.0
        %1811 = vmatprep.subr.mxu0 0.0
        %1812 = vmatpush1.msra.mxu0 0.0
        %1813 = vmatprep.subr.mxu0 0.0
        %1814 = vmatpush1.msra.mxu0 0.0
        %1815 = vmatprep.subr.mxu0 0.0
        %1816 = vmatpush1.msra.mxu0 0.0
        %1817 = vmatprep.subr.mxu0 0.0
        %1818 = vmatpush1.msra.mxu0 0.0
        %1819 = vmatprep.subr.mxu0 0.0
        %1820 = vmatpush1.msra.mxu0 0.0
        %1821 = vmatprep.subr.mxu0 0.0
        %1822 = vmatpush1.msra.mxu0 0.0
        %1823 = vmatprep.subr.mxu0 0.0
        %1824 = vmatpush1.msra.mxu0 0.0
        %1825 = vmatprep.subr.mxu0 0.0
        %1826 = vmatpush1.msra.mxu0 0.0
        %1827 = vmatprep.subr.mxu0 0.0
        %1828 = vmatpush1.msra.mxu0 0.0
        %1829 = vmatprep.subr.mxu0 0.0
        %1830 = vmatpush1.msra.mxu0 0.0
        %1831 = vmatprep.subr.mxu0 0.0
        %1832 = vmatpush1.msra.mxu0 0.0
        %1833 = vmatprep.subr.mxu0 0.0
        %1834 = vmatpush1.msra.mxu0 0.0
        %1835 = vmatprep.subr.mxu0 0.0
        %1836 = vmatpush1.msra.mxu0 0.0
        %1837 = vmatprep.subr.mxu0 0.0
        %1838 = vmatpush1.msra.mxu0 0.0
        %1839 = vmatprep.subr.mxu0 0.0
        %1840 = vmatpush1.msra.mxu0 0.0
        %1841 = vmatprep.subr.mxu0 0.0
        %1842 = vmatpush1.msra.mxu0 0.0
        %1843 = vmatprep.subr.mxu0 0.0
        %1844 = vmatpush1.msra.mxu0 0.0
        %1845 = vmatprep.subr.mxu0 0.0
        %1846 = vmatpush1.msra.mxu0 0.0
        %1847 = vmatprep.subr.mxu0 0.0
        %1848 = vmatpush1.msra.mxu0 0.0
        %1849 = vmatprep.subr.mxu0 0.0
        %1850 = vmatpush1.msra.mxu0 0.0
        %1851 = vmatprep.subr.mxu0 0.0
        %1852 = vmatpush1.msra.mxu0 0.0
        %1853 = vmatprep.subr.mxu0 0.0
        %1854 = vmatpush1.msra.mxu0 0.0
        %1855 = vmatprep.subr.mxu0 0.0
        %1856 = vmatpush1.msra.mxu0 0.0
        %1857 = vmatprep.subr.mxu0 0.0
        %1858 = vmatpush1.msra.mxu0 0.0
        %1859 = vmatprep.mubr.f32.mxu0 0.0
        %1860 = vmatmul.mubr.f32.gmra.mrb[0].mxu0 %v1793
        %v1861 = vpop.f32.mrb[0].mxu0
        %v1862 = vadd.f32 0.0, %v1861
        %v1863 = vpop.f32.mrb[0].mxu0
        %1864 = vdwg.mxu0
        %1865 = vmatprep.subr.mxu0 0.0
        %1866 = vmatpush1.msra.mxu0 %v1633
        %1867 = vmatprep.subr.mxu0 0.0
        %1868 = vmatpush1.msra.mxu0 %v1634
        %1869 = vmatprep.subr.mxu0 0.0
        %1870 = vmatpush1.msra.mxu0 %v1635
        %1871 = vmatprep.subr.mxu0 0.0
        %1872 = vmatpush1.msra.mxu0 %v1636
        %1873 = vmatprep.subr.mxu0 0.0
        %1874 = vmatpush1.msra.mxu0 0.0
        %1875 = vmatprep.subr.mxu0 0.0
        %1876 = vmatpush1.msra.mxu0 0.0
        %1877 = vmatprep.subr.mxu0 0.0
        %1878 = vmatpush1.msra.mxu0 0.0
        %1879 = vmatprep.subr.mxu0 0.0
        %1880 = vmatpush1.msra.mxu0 0.0
        %1881 = vmatprep.subr.mxu0 0.0
        %1882 = vmatpush1.msra.mxu0 0.0
        %1883 = vmatprep.subr.mxu0 0.0
        %1884 = vmatpush1.msra.mxu0 0.0
        %1885 = vmatprep.subr.mxu0 0.0
        %1886 = vmatpush1.msra.mxu0 0.0
        %1887 = vmatprep.subr.mxu0 0.0
        %1888 = vmatpush1.msra.mxu0 0.0
        %1889 = vmatprep.subr.mxu0 0.0
        %1890 = vmatpush1.msra.mxu0 0.0
        %1891 = vmatprep.subr.mxu0 0.0
        %1892 = vmatpush1.msra.mxu0 0.0
        %1893 = vmatprep.subr.mxu0 0.0
        %1894 = vmatpush1.msra.mxu0 0.0
        %1895 = vmatprep.subr.mxu0 0.0
        %1896 = vmatpush1.msra.mxu0 0.0
        %1897 = vmatprep.subr.mxu0 0.0
        %1898 = vmatpush1.msra.mxu0 0.0
        %1899 = vmatprep.subr.mxu0 0.0
        %1900 = vmatpush1.msra.mxu0 0.0
        %1901 = vmatprep.subr.mxu0 0.0
        %1902 = vmatpush1.msra.mxu0 0.0
        %1903 = vmatprep.subr.mxu0 0.0
        %1904 = vmatpush1.msra.mxu0 0.0
        %1905 = vmatprep.subr.mxu0 0.0
        %1906 = vmatpush1.msra.mxu0 0.0
        %1907 = vmatprep.subr.mxu0 0.0
        %1908 = vmatpush1.msra.mxu0 0.0
        %1909 = vmatprep.subr.mxu0 0.0
        %1910 = vmatpush1.msra.mxu0 0.0
        %1911 = vmatprep.subr.mxu0 0.0
        %1912 = vmatpush1.msra.mxu0 0.0
        %1913 = vmatprep.subr.mxu0 0.0
        %1914 = vmatpush1.msra.mxu0 0.0
        %1915 = vmatprep.subr.mxu0 0.0
        %1916 = vmatpush1.msra.mxu0 0.0
        %1917 = vmatprep.subr.mxu0 0.0
        %1918 = vmatpush1.msra.mxu0 0.0
        %1919 = vmatprep.subr.mxu0 0.0
        %1920 = vmatpush1.msra.mxu0 0.0
        %1921 = vmatprep.subr.mxu0 0.0
        %1922 = vmatpush1.msra.mxu0 0.0
        %1923 = vmatprep.subr.mxu0 0.0
        %1924 = vmatpush1.msra.mxu0 0.0
        %1925 = vmatprep.subr.mxu0 0.0
        %1926 = vmatpush1.msra.mxu0 0.0
        %1927 = vmatprep.subr.mxu0 0.0
        %1928 = vmatpush1.msra.mxu0 0.0
        %1929 = vmatprep.mubr.f32.mxu0 0.0
        %1930 = vmatmul.mubr.f32.gmra.mrb[0].mxu0 %v1210
        %v1931 = vpop.f32.mrb[0].mxu0
        %v1932 = vadd.f32 %v1862, %v1931
        %v1933 = vpop.f32.mrb[0].mxu0
        %1934 = vdwg.mxu0
        %v1935 = vadd.f32 %v1932, %v1789
        %v1936 = vld [vmem:[%s9] sm:$0xff]
        %v1937 = vld [vmem:[%s9 + $0x8] sm:$0xff]
        %v1938 = vld [vmem:[%s9 + $0x10] sm:$0xff]
        %v1939 = vld [vmem:[%s9 + $0x18] sm:$0xff]
        %v1940 = vld [vmem:[%s10] sm:$0x1]
        %v1942 = vlaneseq
        %v1943 = vshrl.u32 %v1942, 7
        %v1944 = vsub.s32 0, %v1943
        %v1945 = vrot.slane %v1940, %v1944
        %v1948 = vsel %vm811, %v1791, 0
        %v1951 = vsel %vm811, %v1935, 0
        %1953 = vmatprep.subr.mxu0 0.0
        %1954 = vmatpush1.msra.mxu0 %v1936
        %1955 = vmatprep.subr.mxu0 0.0
        %1956 = vmatpush1.msra.mxu0 %v1937
        %1957 = vmatprep.subr.mxu0 0.0
        %1958 = vmatpush1.msra.mxu0 %v1938
        %1959 = vmatprep.subr.mxu0 0.0
        %1960 = vmatpush1.msra.mxu0 %v1939
        %1961 = vmatprep.subr.mxu0 0.0
        %1962 = vmatpush1.msra.mxu0 0.0
        %1963 = vmatprep.subr.mxu0 0.0
        %1964 = vmatpush1.msra.mxu0 0.0
        %1965 = vmatprep.subr.mxu0 0.0
        %1966 = vmatpush1.msra.mxu0 0.0
        %1967 = vmatprep.subr.mxu0 0.0
        %1968 = vmatpush1.msra.mxu0 0.0
        %1969 = vmatprep.subr.mxu0 0.0
        %1970 = vmatpush1.msra.mxu0 0.0
        %1971 = vmatprep.subr.mxu0 0.0
        %1972 = vmatpush1.msra.mxu0 0.0
        %1973 = vmatprep.subr.mxu0 0.0
        %1974 = vmatpush1.msra.mxu0 0.0
        %1975 = vmatprep.subr.mxu0 0.0
        %1976 = vmatpush1.msra.mxu0 0.0
        %1977 = vmatprep.subr.mxu0 0.0
        %1978 = vmatpush1.msra.mxu0 0.0
        %1979 = vmatprep.subr.mxu0 0.0
        %1980 = vmatpush1.msra.mxu0 0.0
        %1981 = vmatprep.subr.mxu0 0.0
        %1982 = vmatpush1.msra.mxu0 0.0
        %1983 = vmatprep.subr.mxu0 0.0
        %1984 = vmatpush1.msra.mxu0 0.0
        %1985 = vmatprep.subr.mxu0 0.0
        %1986 = vmatpush1.msra.mxu0 0.0
        %1987 = vmatprep.subr.mxu0 0.0
        %1988 = vmatpush1.msra.mxu0 0.0
        %1989 = vmatprep.subr.mxu0 0.0
        %1990 = vmatpush1.msra.mxu0 0.0
        %1991 = vmatprep.subr.mxu0 0.0
        %1992 = vmatpush1.msra.mxu0 0.0
        %1993 = vmatprep.subr.mxu0 0.0
        %1994 = vmatpush1.msra.mxu0 0.0
        %1995 = vmatprep.subr.mxu0 0.0
        %1996 = vmatpush1.msra.mxu0 0.0
        %1997 = vmatprep.subr.mxu0 0.0
        %1998 = vmatpush1.msra.mxu0 0.0
        %1999 = vmatprep.subr.mxu0 0.0
        %2000 = vmatpush1.msra.mxu0 0.0
        %2001 = vmatprep.subr.mxu0 0.0
        %2002 = vmatpush1.msra.mxu0 0.0
        %2003 = vmatprep.subr.mxu0 0.0
        %2004 = vmatpush1.msra.mxu0 0.0
        %2005 = vmatprep.subr.mxu0 0.0
        %2006 = vmatpush1.msra.mxu0 0.0
        %2007 = vmatprep.subr.mxu0 0.0
        %2008 = vmatpush1.msra.mxu0 0.0
        %2009 = vmatprep.subr.mxu0 0.0
        %2010 = vmatpush1.msra.mxu0 0.0
        %2011 = vmatprep.subr.mxu0 0.0
        %2012 = vmatpush1.msra.mxu0 0.0
        %2013 = vmatprep.subr.mxu0 0.0
        %2014 = vmatpush1.msra.mxu0 0.0
        %2015 = vmatprep.subr.mxu0 0.0
        %2016 = vmatpush1.msra.mxu0 0.0
        %2017 = vmatprep.mubr.f32.mxu0 0.0
        %2018 = vmatmul.mubr.f32.gmra.mrb[0].mxu0 %v1948
        %v2019 = vpop.f32.mrb[0].mxu0
        %v2020 = vadd.f32 %v1945, %v2019
        %v2021 = vpop.f32.mrb[0].mxu0
        %2022 = vmatprep.mubr.f32.mxu0 0.0
        %2023 = vmatmul.mubr.f32.gmra.mrb[0].mxu0 %v1951
        %v2024 = vpop.f32.mrb[0].mxu0
        %v2025 = vadd.f32 %v1945, %v2024
        %v2026 = vpop.f32.mrb[0].mxu0
        %2027 = vdwg.mxu0
        %v2028 = vmax.f32 %v2020, 0.0
        %v2029 = vmax.f32 %v2025, 0.0
        %v2030 = vld [vmem:[#allocation14] sm:$0xff]
        %v2031 = vld [vmem:[#allocation14 + $0x8] sm:$0xff]
        %v2032 = vld [vmem:[#allocation14 + $0x10] sm:$0xff]
        %v2033 = vld [vmem:[#allocation14 + $0x18] sm:$0xff]
        %v2034 = vld [vmem:[%s12] sm:$0x1]
        %v2036 = vlaneseq
        %v2037 = vshrl.u32 %v2036, 7
        %v2038 = vsub.s32 0, %v2037
        %v2039 = vrot.slane %v2034, %v2038
        %2041 = vmatprep.subr.mxu0 0.0
        %2042 = vmatpush1.msra.mxu0 %v2030
        %2043 = vmatprep.subr.mxu0 0.0
        %2044 = vmatpush1.msra.mxu0 %v2031
        %2045 = vmatprep.subr.mxu0 0.0
        %2046 = vmatpush1.msra.mxu0 %v2032
        %2047 = vmatprep.subr.mxu0 0.0
        %2048 = vmatpush1.msra.mxu0 %v2033
        %2049 = vmatprep.subr.mxu0 0.0
        %2050 = vmatpush1.msra.mxu0 0.0
        %2051 = vmatprep.subr.mxu0 0.0
        %2052 = vmatpush1.msra.mxu0 0.0
        %2053 = vmatprep.subr.mxu0 0.0
        %2054 = vmatpush1.msra.mxu0 0.0
        %2055 = vmatprep.subr.mxu0 0.0
        %2056 = vmatpush1.msra.mxu0 0.0
        %2057 = vmatprep.subr.mxu0 0.0
        %2058 = vmatpush1.msra.mxu0 0.0
        %2059 = vmatprep.subr.mxu0 0.0
        %2060 = vmatpush1.msra.mxu0 0.0
        %2061 = vmatprep.subr.mxu0 0.0
        %2062 = vmatpush1.msra.mxu0 0.0
        %2063 = vmatprep.subr.mxu0 0.0
        %2064 = vmatpush1.msra.mxu0 0.0
        %2065 = vmatprep.subr.mxu0 0.0
        %2066 = vmatpush1.msra.mxu0 0.0
        %2067 = vmatprep.subr.mxu0 0.0
        %2068 = vmatpush1.msra.mxu0 0.0
        %2069 = vmatprep.subr.mxu0 0.0
        %2070 = vmatpush1.msra.mxu0 0.0
        %2071 = vmatprep.subr.mxu0 0.0
        %2072 = vmatpush1.msra.mxu0 0.0
        %2073 = vmatprep.subr.mxu0 0.0
        %2074 = vmatpush1.msra.mxu0 0.0
        %2075 = vmatprep.subr.mxu0 0.0
        %2076 = vmatpush1.msra.mxu0 0.0
        %2077 = vmatprep.subr.mxu0 0.0
        %2078 = vmatpush1.msra.mxu0 0.0
        %2079 = vmatprep.subr.mxu0 0.0
        %2080 = vmatpush1.msra.mxu0 0.0
        %2081 = vmatprep.subr.mxu0 0.0
        %2082 = vmatpush1.msra.mxu0 0.0
        %2083 = vmatprep.subr.mxu0 0.0
        %2084 = vmatpush1.msra.mxu0 0.0
        %2085 = vmatprep.subr.mxu0 0.0
        %2086 = vmatpush1.msra.mxu0 0.0
        %2087 = vmatprep.subr.mxu0 0.0
        %2088 = vmatpush1.msra.mxu0 0.0
        %2089 = vmatprep.subr.mxu0 0.0
        %2090 = vmatpush1.msra.mxu0 0.0
        %2091 = vmatprep.subr.mxu0 0.0
        %2092 = vmatpush1.msra.mxu0 0.0
        %2093 = vmatprep.subr.mxu0 0.0
        %2094 = vmatpush1.msra.mxu0 0.0
        %2095 = vmatprep.subr.mxu0 0.0
        %2096 = vmatpush1.msra.mxu0 0.0
        %2097 = vmatprep.subr.mxu0 0.0
        %2098 = vmatpush1.msra.mxu0 0.0
        %2099 = vmatprep.subr.mxu0 0.0
        %2100 = vmatpush1.msra.mxu0 0.0
        %2101 = vmatprep.subr.mxu0 0.0
        %2102 = vmatpush1.msra.mxu0 0.0
        %2103 = vmatprep.subr.mxu0 0.0
        %2104 = vmatpush1.msra.mxu0 0.0
        %2105 = vmatprep.mubr.f32.mxu0 0.0
        %2106 = vmatmul.mubr.f32.gmra.mrb[0].mxu0 %v1948
        %v2107 = vpop.f32.mrb[0].mxu0
        %v2108 = vadd.f32 %v2039, %v2107
        %v2109 = vpop.f32.mrb[0].mxu0
        %2110 = vmatprep.mubr.f32.mxu0 0.0
        %2111 = vmatmul.mubr.f32.gmra.mrb[0].mxu0 %v1951
        %v2112 = vpop.f32.mrb[0].mxu0
        %v2113 = vadd.f32 %v2039, %v2112
        %v2114 = vpop.f32.mrb[0].mxu0
        %2115 = vdwg.mxu0
        %v2116 = vmax.f32 %v2108, 0.0
        %v2117 = vmax.f32 %v2113, 0.0
        %2118 = vmatprep.subr.mxu0 0.0
        %2119 = vmatpush1.msra.mxu0 %v2028
        %2120 = vmatprep.subr.mxu0 0.0
        %2121 = vmatpush1.msra.mxu0 0.0
        %2122 = vmatprep.subr.mxu0 0.0
        %2123 = vmatpush1.msra.mxu0 0.0
        %2124 = vmatprep.subr.mxu0 0.0
        %2125 = vmatpush1.msra.mxu0 0.0
        %2126 = vmatprep.subr.mxu0 0.0
        %2127 = vmatpush1.msra.mxu0 0.0
        %2128 = vmatprep.subr.mxu0 0.0
        %2129 = vmatpush1.msra.mxu0 0.0
        %2130 = vmatprep.subr.mxu0 0.0
        %2131 = vmatpush1.msra.mxu0 0.0
        %2132 = vmatprep.subr.mxu0 0.0
        %2133 = vmatpush1.msra.mxu0 0.0
        %2134 = vmatprep.subr.mxu0 0.0
        %2135 = vmatpush1.msra.mxu0 0.0
        %2136 = vmatprep.subr.mxu0 0.0
        %2137 = vmatpush1.msra.mxu0 0.0
        %2138 = vmatprep.subr.mxu0 0.0
        %2139 = vmatpush1.msra.mxu0 0.0
        %2140 = vmatprep.subr.mxu0 0.0
        %2141 = vmatpush1.msra.mxu0 0.0
        %2142 = vmatprep.subr.mxu0 0.0
        %2143 = vmatpush1.msra.mxu0 0.0
        %2144 = vmatprep.subr.mxu0 0.0
        %2145 = vmatpush1.msra.mxu0 0.0
        %2146 = vmatprep.subr.mxu0 0.0
        %2147 = vmatpush1.msra.mxu0 0.0
        %2148 = vmatprep.subr.mxu0 0.0
        %2149 = vmatpush1.msra.mxu0 0.0
        %2150 = vmatprep.subr.mxu0 0.0
        %2151 = vmatpush1.msra.mxu0 0.0
        %2152 = vmatprep.subr.mxu0 0.0
        %2153 = vmatpush1.msra.mxu0 0.0
        %2154 = vmatprep.subr.mxu0 0.0
        %2155 = vmatpush1.msra.mxu0 0.0
        %2156 = vmatprep.subr.mxu0 0.0
        %2157 = vmatpush1.msra.mxu0 0.0
        %2158 = vmatprep.subr.mxu0 0.0
        %2159 = vmatpush1.msra.mxu0 0.0
        %2160 = vmatprep.subr.mxu0 0.0
        %2161 = vmatpush1.msra.mxu0 0.0
        %2162 = vmatprep.subr.mxu0 0.0
        %2163 = vmatpush1.msra.mxu0 0.0
        %2164 = vmatprep.subr.mxu0 0.0
        %2165 = vmatpush1.msra.mxu0 0.0
        %2166 = vmatprep.subr.mxu0 0.0
        %2167 = vmatpush1.msra.mxu0 0.0
        %2168 = vmatprep.subr.mxu0 0.0
        %2169 = vmatpush1.msra.mxu0 0.0
        %2170 = vmatprep.subr.mxu0 0.0
        %2171 = vmatpush1.msra.mxu0 0.0
        %2172 = vmatprep.subr.mxu0 0.0
        %2173 = vmatpush1.msra.mxu0 0.0
        %2174 = vmatprep.subr.mxu0 0.0
        %2175 = vmatpush1.msra.mxu0 0.0
        %2176 = vmatprep.subr.mxu0 0.0
        %2177 = vmatpush1.msra.mxu0 0.0
        %2178 = vmatprep.subr.mxu0 0.0
        %2179 = vmatpush1.msra.mxu0 0.0
        %2180 = vmatprep.subr.mxu0 0.0
        %2181 = vmatpush1.msra.mxu0 0.0
        %2182 = vmatprep.mubr.f32.mxu0 0.0
        %2183 = vmatmul.mubr.f32.gmra.mrb[0].mxu0 %v984
        %v2184 = vpop.f32.mrb[0].mxu0
        %v2185 = vadd.f32 %v2116, %v2184
        %v2186 = vpop.f32.mrb[0].mxu0
        %2187 = vdwg.mxu0
        %2188 = vmatprep.subr.mxu0 0.0
        %2189 = vmatpush1.msra.mxu0 %v2029
        %2190 = vmatprep.subr.mxu0 0.0
        %2191 = vmatpush1.msra.mxu0 0.0
        %2192 = vmatprep.subr.mxu0 0.0
        %2193 = vmatpush1.msra.mxu0 0.0
        %2194 = vmatprep.subr.mxu0 0.0
        %2195 = vmatpush1.msra.mxu0 0.0
        %2196 = vmatprep.subr.mxu0 0.0
        %2197 = vmatpush1.msra.mxu0 0.0
        %2198 = vmatprep.subr.mxu0 0.0
        %2199 = vmatpush1.msra.mxu0 0.0
        %2200 = vmatprep.subr.mxu0 0.0
        %2201 = vmatpush1.msra.mxu0 0.0
        %2202 = vmatprep.subr.mxu0 0.0
        %2203 = vmatpush1.msra.mxu0 0.0
        %2204 = vmatprep.subr.mxu0 0.0
        %2205 = vmatpush1.msra.mxu0 0.0
        %2206 = vmatprep.subr.mxu0 0.0
        %2207 = vmatpush1.msra.mxu0 0.0
        %2208 = vmatprep.subr.mxu0 0.0
        %2209 = vmatpush1.msra.mxu0 0.0
        %2210 = vmatprep.subr.mxu0 0.0
        %2211 = vmatpush1.msra.mxu0 0.0
        %2212 = vmatprep.subr.mxu0 0.0
        %2213 = vmatpush1.msra.mxu0 0.0
        %2214 = vmatprep.subr.mxu0 0.0
        %2215 = vmatpush1.msra.mxu0 0.0
        %2216 = vmatprep.subr.mxu0 0.0
        %2217 = vmatpush1.msra.mxu0 0.0
        %2218 = vmatprep.subr.mxu0 0.0
        %2219 = vmatpush1.msra.mxu0 0.0
        %2220 = vmatprep.subr.mxu0 0.0
        %2221 = vmatpush1.msra.mxu0 0.0
        %2222 = vmatprep.subr.mxu0 0.0
        %2223 = vmatpush1.msra.mxu0 0.0
        %2224 = vmatprep.subr.mxu0 0.0
        %2225 = vmatpush1.msra.mxu0 0.0
        %2226 = vmatprep.subr.mxu0 0.0
        %2227 = vmatpush1.msra.mxu0 0.0
        %2228 = vmatprep.subr.mxu0 0.0
        %2229 = vmatpush1.msra.mxu0 0.0
        %2230 = vmatprep.subr.mxu0 0.0
        %2231 = vmatpush1.msra.mxu0 0.0
        %2232 = vmatprep.subr.mxu0 0.0
        %2233 = vmatpush1.msra.mxu0 0.0
        %2234 = vmatprep.subr.mxu0 0.0
        %2235 = vmatpush1.msra.mxu0 0.0
        %2236 = vmatprep.subr.mxu0 0.0
        %2237 = vmatpush1.msra.mxu0 0.0
        %2238 = vmatprep.subr.mxu0 0.0
        %2239 = vmatpush1.msra.mxu0 0.0
        %2240 = vmatprep.subr.mxu0 0.0
        %2241 = vmatpush1.msra.mxu0 0.0
        %2242 = vmatprep.subr.mxu0 0.0
        %2243 = vmatpush1.msra.mxu0 0.0
        %2244 = vmatprep.subr.mxu0 0.0
        %2245 = vmatpush1.msra.mxu0 0.0
        %2246 = vmatprep.subr.mxu0 0.0
        %2247 = vmatpush1.msra.mxu0 0.0
        %2248 = vmatprep.subr.mxu0 0.0
        %2249 = vmatpush1.msra.mxu0 0.0
        %2250 = vmatprep.subr.mxu0 0.0
        %2251 = vmatpush1.msra.mxu0 0.0
        %2252 = vmatprep.mubr.f32.mxu0 0.0
        %2253 = vmatmul.mubr.f32.gmra.mrb[0].mxu0 %v1057
        %v2254 = vpop.f32.mrb[0].mxu0
        %v2255 = vadd.f32 %v2117, %v2254
        %v2256 = vpop.f32.mrb[0].mxu0
        %2257 = vdwg.mxu0
        %v2258 = vld [vmem:[#allocation16] sm:$0xff]
        %v2259 = vld [vmem:[#allocation16 + $0x8] sm:$0xff]
        %v2260 = vld [vmem:[#allocation16 + $0x10] sm:$0xff]
        %v2261 = vld [vmem:[#allocation16 + $0x18] sm:$0xff]
        %v2263 = vsel %vm811, %v2185, 0
        %2265 = vmatprep.subr.mxu0 0.0
        %2266 = vmatpush1.msra.mxu0 %v2258
        %2267 = vmatprep.subr.mxu0 0.0
        %2268 = vmatpush1.msra.mxu0 %v2259
        %2269 = vmatprep.subr.mxu0 0.0
        %2270 = vmatpush1.msra.mxu0 %v2260
        %2271 = vmatprep.subr.mxu0 0.0
        %2272 = vmatpush1.msra.mxu0 %v2261
        %2273 = vmatprep.subr.mxu0 0.0
        %2274 = vmatpush1.msra.mxu0 0.0
        %2275 = vmatprep.subr.mxu0 0.0
        %2276 = vmatpush1.msra.mxu0 0.0
        %2277 = vmatprep.subr.mxu0 0.0
        %2278 = vmatpush1.msra.mxu0 0.0
        %2279 = vmatprep.subr.mxu0 0.0
        %2280 = vmatpush1.msra.mxu0 0.0
        %2281 = vmatprep.subr.mxu0 0.0
        %2282 = vmatpush1.msra.mxu0 0.0
        %2283 = vmatprep.subr.mxu0 0.0
        %2284 = vmatpush1.msra.mxu0 0.0
        %2285 = vmatprep.subr.mxu0 0.0
        %2286 = vmatpush1.msra.mxu0 0.0
        %2287 = vmatprep.subr.mxu0 0.0
        %2288 = vmatpush1.msra.mxu0 0.0
        %2289 = vmatprep.subr.mxu0 0.0
        %2290 = vmatpush1.msra.mxu0 0.0
        %2291 = vmatprep.subr.mxu0 0.0
        %2292 = vmatpush1.msra.mxu0 0.0
        %2293 = vmatprep.subr.mxu0 0.0
        %2294 = vmatpush1.msra.mxu0 0.0
        %2295 = vmatprep.subr.mxu0 0.0
        %2296 = vmatpush1.msra.mxu0 0.0
        %2297 = vmatprep.subr.mxu0 0.0
        %2298 = vmatpush1.msra.mxu0 0.0
        %2299 = vmatprep.subr.mxu0 0.0
        %2300 = vmatpush1.msra.mxu0 0.0
        %2301 = vmatprep.subr.mxu0 0.0
        %2302 = vmatpush1.msra.mxu0 0.0
        %2303 = vmatprep.subr.mxu0 0.0
        %2304 = vmatpush1.msra.mxu0 0.0
        %2305 = vmatprep.subr.mxu0 0.0
        %2306 = vmatpush1.msra.mxu0 0.0
        %2307 = vmatprep.subr.mxu0 0.0
        %2308 = vmatpush1.msra.mxu0 0.0
        %2309 = vmatprep.subr.mxu0 0.0
        %2310 = vmatpush1.msra.mxu0 0.0
        %2311 = vmatprep.subr.mxu0 0.0
        %2312 = vmatpush1.msra.mxu0 0.0
        %2313 = vmatprep.subr.mxu0 0.0
        %2314 = vmatpush1.msra.mxu0 0.0
        %2315 = vmatprep.subr.mxu0 0.0
        %2316 = vmatpush1.msra.mxu0 0.0
        %2317 = vmatprep.subr.mxu0 0.0
        %2318 = vmatpush1.msra.mxu0 0.0
        %2319 = vmatprep.subr.mxu0 0.0
        %2320 = vmatpush1.msra.mxu0 0.0
        %2321 = vmatprep.subr.mxu0 0.0
        %2322 = vmatpush1.msra.mxu0 0.0
        %2323 = vmatprep.subr.mxu0 0.0
        %2324 = vmatpush1.msra.mxu0 0.0
        %2325 = vmatprep.subr.mxu0 0.0
        %2326 = vmatpush1.msra.mxu0 0.0
        %2327 = vmatprep.subr.mxu0 0.0
        %2328 = vmatpush1.msra.mxu0 0.0
        %2329 = vmatprep.mubr.f32.mxu0 0.0
        %2330 = vmatmul.mubr.f32.gmra.mrb[0].mxu0 %v2263
        %v2331 = vpop.f32.mrb[0].mxu0
        %v2332 = vadd.f32 0.0, %v2331
        %v2333 = vpop.f32.mrb[0].mxu0
        %2334 = vdwg.mxu0
        %v2336 = vsel %vm811, %v2332, 0
        %v2339 = vsel %vm811, %v2255, 0
        %2341 = vmatprep.subr.mxu0 0.0
        %2342 = vmatpush1.xpose.msra.mxu0 %v2339
        %2343 = vmatprep.subr.mxu0 0.0
        %2344 = vmatpush1.xpose.msra.mxu0 0.0
        %2345 = vmatprep.subr.mxu0 0.0
        %2346 = vmatpush1.xpose.msra.mxu0 0.0
        %2347 = vmatprep.subr.mxu0 0.0
        %2348 = vmatpush1.xpose.msra.mxu0 0.0
        %2349 = vmatprep.subr.mxu0 0.0
        %2350 = vmatpush1.xpose.msra.mxu0 0.0
        %2351 = vmatprep.subr.mxu0 0.0
        %2352 = vmatpush1.xpose.msra.mxu0 0.0
        %2353 = vmatprep.subr.mxu0 0.0
        %2354 = vmatpush1.xpose.msra.mxu0 0.0
        %2355 = vmatprep.subr.mxu0 0.0
        %2356 = vmatpush1.xpose.msra.mxu0 0.0
        %2357 = vmatprep.subr.mxu0 0.0
        %2358 = vmatpush1.xpose.msra.mxu0 0.0
        %2359 = vmatprep.subr.mxu0 0.0
        %2360 = vmatpush1.xpose.msra.mxu0 0.0
        %2361 = vmatprep.subr.mxu0 0.0
        %2362 = vmatpush1.xpose.msra.mxu0 0.0
        %2363 = vmatprep.subr.mxu0 0.0
        %2364 = vmatpush1.xpose.msra.mxu0 0.0
        %2365 = vmatprep.subr.mxu0 0.0
        %2366 = vmatpush1.xpose.msra.mxu0 0.0
        %2367 = vmatprep.subr.mxu0 0.0
        %2368 = vmatpush1.xpose.msra.mxu0 0.0
        %2369 = vmatprep.subr.mxu0 0.0
        %2370 = vmatpush1.xpose.msra.mxu0 0.0
        %2371 = vmatprep.subr.mxu0 0.0
        %2372 = vmatpush1.xpose.msra.mxu0 0.0
        %2373 = vmatprep.subr.mxu0 0.0
        %2374 = vmatpush1.xpose.msra.mxu0 0.0
        %2375 = vmatprep.subr.mxu0 0.0
        %2376 = vmatpush1.xpose.msra.mxu0 0.0
        %2377 = vmatprep.subr.mxu0 0.0
        %2378 = vmatpush1.xpose.msra.mxu0 0.0
        %2379 = vmatprep.subr.mxu0 0.0
        %2380 = vmatpush1.xpose.msra.mxu0 0.0
        %2381 = vmatprep.subr.mxu0 0.0
        %2382 = vmatpush1.xpose.msra.mxu0 0.0
        %2383 = vmatprep.subr.mxu0 0.0
        %2384 = vmatpush1.xpose.msra.mxu0 0.0
        %2385 = vmatprep.subr.mxu0 0.0
        %2386 = vmatpush1.xpose.msra.mxu0 0.0
        %2387 = vmatprep.subr.mxu0 0.0
        %2388 = vmatpush1.xpose.msra.mxu0 0.0
        %2389 = vmatprep.subr.mxu0 0.0
        %2390 = vmatpush1.xpose.msra.mxu0 0.0
        %2391 = vmatprep.subr.mxu0 0.0
        %2392 = vmatpush1.xpose.msra.mxu0 0.0
        %2393 = vmatprep.subr.mxu0 0.0
        %2394 = vmatpush1.xpose.msra.mxu0 0.0
        %2395 = vmatprep.subr.mxu0 0.0
        %2396 = vmatpush1.xpose.msra.mxu0 0.0
        %2397 = vmatprep.subr.mxu0 0.0
        %2398 = vmatpush1.xpose.msra.mxu0 0.0
        %2399 = vmatprep.subr.mxu0 0.0
        %2400 = vmatpush1.xpose.msra.mxu0 0.0
        %2401 = vmatprep.subr.mxu0 0.0
        %2402 = vmatpush1.xpose.msra.mxu0 0.0
        %2403 = vmatprep.subr.mxu0 0.0
        %2404 = vmatpush1.xpose.msra.mxu0 0.0
        %2405 = vmatprep.mubr.f32.mxu0 0.0
        %2406 = vmatmul.mubr.f32.gmra.mrb[0].mxu0 %v2336
        %v2407 = vpop.f32.mrb[0].mxu0
        %v2408 = vadd.f32 0.0, %v2407
        %v2409 = vpop.f32.mrb[0].mxu0
        %2410 = vdwg.mxu0
        %v2411 = vmul.f32 %v2408, 20.0
        %v2412 = vsel %vm778, %v2411, -inf
        %2413 = vmax.xlane.f32.xlu0 %v2412
        %v2414 = vpop.xlane.xlu0 %2413
        %v2415 = vsub.f32 %v2411, %v2414
        %v2416 = vmul.f32 %v2415, 1.442695
        %v2417 = vpow.pop %v2416
        %v2418 = vsel %vm778, %v2417, 0.0
        %2419 = vadd.xlane.f32.xlu0 %v2418
        %v2420 = vpop.xlane.xlu0 %2419
        %v2421 = vlog2.pop %v2420
        %v2422 = vmul.f32 %v2421, 0.6931472
        %v2423 = vadd.f32 %v2414, %v2422
        %v2424 = vsub.f32 %v2411, %v2423
        %v2425 = vsel %vm778, %v2424, -inf
        %v2426 = vrot.slane %v2425, 4
        %v2427 = vmax.f32 %v2425, %v2426
        %v2428 = vrot.slane %v2427, 2
        %v2429 = vmax.f32 %v2427, %v2428
        %v2430 = vrot.slane %v2429, 1
        %v2431 = vmax.f32 %v2429, %v2430
        %v2432 = vsub.f32 %v2424, %v2431
        %v2433 = vmul.f32 %v2432, 1.442695
        %v2434 = vpow.pop %v2433
        %v2435 = vsel %vm778, %v2434, 0.0
        %v2436 = vrot.slane %v2435, 4
        %v2437 = vadd.f32 %v2435, %v2436
        %v2438 = vrot.slane %v2437, 2
        %v2439 = vadd.f32 %v2437, %v2438
        %v2440 = vrot.slane %v2439, 1
        %v2441 = vadd.f32 %v2439, %v2440
        %v2442 = vlog2.pop %v2441
        %v2443 = vmul.f32 %v2442, 0.6931472
        %v2444 = vadd.f32 %v2431, %v2443
        %v2445 = vsub.f32 %v2424, %v2444
        %v2446 = vsel %vm778, %v2445, -inf
        %2447 = vmax.xlane.f32.xlu0 %v2446
        %v2448 = vpop.xlane.xlu0 %2447
        %v2449 = vsub.f32 %v2445, %v2448
        %v2450 = vmul.f32 %v2449, 1.442695
        %v2451 = vpow.pop %v2450
        %v2452 = vsel %vm778, %v2451, 0.0
        %2453 = vadd.xlane.f32.xlu0 %v2452
        %v2454 = vpop.xlane.xlu0 %2453
        %v2455 = vlog2.pop %v2454
        %v2456 = vmul.f32 %v2455, 0.6931472
        %v2457 = vadd.f32 %v2448, %v2456
        %v2458 = vsub.f32 %v2445, %v2457
        %v2459 = vsel %vm778, %v2458, -inf
        %v2460 = vrot.slane %v2459, 4
        %v2461 = vmax.f32 %v2459, %v2460
        %v2462 = vrot.slane %v2461, 2
        %v2463 = vmax.f32 %v2461, %v2462
        %v2464 = vrot.slane %v2463, 1
        %v2465 = vmax.f32 %v2463, %v2464
        %v2466 = vsub.f32 %v2458, %v2465
        %v2467 = vmul.f32 %v2466, 1.442695
        %v2468 = vpow.pop %v2467
        %v2469 = vsel %vm778, %v2468, 0.0
        %v2470 = vrot.slane %v2469, 4
        %v2471 = vadd.f32 %v2469, %v2470
        %v2472 = vrot.slane %v2471, 2
        %v2473 = vadd.f32 %v2471, %v2472
        %v2474 = vrot.slane %v2473, 1
        %v2475 = vadd.f32 %v2473, %v2474
        %v2476 = vlog2.pop %v2475
        %v2477 = vmul.f32 %v2476, 0.6931472
        %v2478 = vadd.f32 %v2465, %v2477
        %v2479 = vsub.f32 %v2458, %v2478
        %v2480 = vsel %vm778, %v2479, -inf
        %2481 = vmax.xlane.f32.xlu0 %v2480
        %v2482 = vpop.xlane.xlu0 %2481
        %v2483 = vsub.f32 %v2479, %v2482
        %v2484 = vmul.f32 %v2483, 1.442695
        %v2485 = vpow.pop %v2484
        %v2486 = vsel %vm778, %v2485, 0.0
        %2487 = vadd.xlane.f32.xlu0 %v2486
        %v2488 = vpop.xlane.xlu0 %2487
        %v2489 = vlog2.pop %v2488
        %v2490 = vmul.f32 %v2489, 0.6931472
        %v2491 = vadd.f32 %v2482, %v2490
        %v2492 = vsub.f32 %v2479, %v2491
        %v2493 = vsel %vm778, %v2492, -inf
        %v2494 = vrot.slane %v2493, 4
        %v2495 = vmax.f32 %v2493, %v2494
        %v2496 = vrot.slane %v2495, 2
        %v2497 = vmax.f32 %v2495, %v2496
        %v2498 = vrot.slane %v2497, 1
        %v2499 = vmax.f32 %v2497, %v2498
        %v2500 = vsub.f32 %v2492, %v2499
        %v2501 = vmul.f32 %v2500, 1.442695
        %v2502 = vpow.pop %v2501
        %v2503 = vsel %vm778, %v2502, 0.0
        %v2504 = vrot.slane %v2503, 4
        %v2505 = vadd.f32 %v2503, %v2504
        %v2506 = vrot.slane %v2505, 2
        %v2507 = vadd.f32 %v2505, %v2506
        %v2508 = vrot.slane %v2507, 1
        %v2509 = vadd.f32 %v2507, %v2508
        %v2510 = vlog2.pop %v2509
        %v2511 = vmul.f32 %v2510, 0.6931472
        %v2512 = vadd.f32 %v2499, %v2511
        %v2513 = vsub.f32 %v2492, %v2512
        %v2514 = vsel %vm778, %v2513, -inf
        %2515 = vmax.xlane.f32.xlu0 %v2514
        %v2516 = vpop.xlane.xlu0 %2515
        %v2517 = vsub.f32 %v2513, %v2516
        %v2518 = vmul.f32 %v2517, 1.442695
        %v2519 = vpow.pop %v2518
        %v2520 = vsel %vm778, %v2519, 0.0
        %2521 = vadd.xlane.f32.xlu0 %v2520
        %v2522 = vpop.xlane.xlu0 %2521
        %v2523 = vlog2.pop %v2522
        %v2524 = vmul.f32 %v2523, 0.6931472
        %v2525 = vadd.f32 %v2516, %v2524
        %v2526 = vsub.f32 %v2513, %v2525
        %v2527 = vsel %vm778, %v2526, -inf
        %v2528 = vrot.slane %v2527, 4
        %v2529 = vmax.f32 %v2527, %v2528
        %v2530 = vrot.slane %v2529, 2
        %v2531 = vmax.f32 %v2529, %v2530
        %v2532 = vrot.slane %v2531, 1
        %v2533 = vmax.f32 %v2531, %v2532
        %v2534 = vsub.f32 %v2526, %v2533
        %v2535 = vmul.f32 %v2534, 1.442695
        %v2536 = vpow.pop %v2535
        %v2537 = vsel %vm778, %v2536, 0.0
        %v2538 = vrot.slane %v2537, 4
        %v2539 = vadd.f32 %v2537, %v2538
        %v2540 = vrot.slane %v2539, 2
        %v2541 = vadd.f32 %v2539, %v2540
        %v2542 = vrot.slane %v2541, 1
        %v2543 = vadd.f32 %v2541, %v2542
        %v2544 = vlog2.pop %v2543
        %v2545 = vmul.f32 %v2544, 0.6931472
        %v2546 = vadd.f32 %v2533, %v2545
        %v2547 = vsub.f32 %v2526, %v2546
        %v2548 = vsel %vm778, %v2547, -inf
        %2549 = vmax.xlane.f32.xlu0 %v2548
        %v2550 = vpop.xlane.xlu0 %2549
        %v2551 = vsub.f32 %v2547, %v2550
        %v2552 = vmul.f32 %v2551, 1.442695
        %v2553 = vpow.pop %v2552
        %v2554 = vsel %vm778, %v2553, 0.0
        %2555 = vadd.xlane.f32.xlu0 %v2554
        %v2556 = vpop.xlane.xlu0 %2555
        %v2557 = vlog2.pop %v2556
        %v2558 = vmul.f32 %v2557, 0.6931472
        %v2559 = vadd.f32 %v2550, %v2558
        %v2560 = vsub.f32 %v2547, %v2559
        %v2561 = vsel %vm778, %v2560, -inf
        %v2562 = vrot.slane %v2561, 4
        %v2563 = vmax.f32 %v2561, %v2562
        %v2564 = vrot.slane %v2563, 2
        %v2565 = vmax.f32 %v2563, %v2564
        %v2566 = vrot.slane %v2565, 1
        %v2567 = vmax.f32 %v2565, %v2566
        %v2568 = vsub.f32 %v2560, %v2567
        %v2569 = vmul.f32 %v2568, 1.442695
        %v2570 = vpow.pop %v2569
        %v2571 = vsel %vm778, %v2570, 0.0
        %v2572 = vrot.slane %v2571, 4
        %v2573 = vadd.f32 %v2571, %v2572
        %v2574 = vrot.slane %v2573, 2
        %v2575 = vadd.f32 %v2573, %v2574
        %v2576 = vrot.slane %v2575, 1
        %v2577 = vadd.f32 %v2575, %v2576
        %v2578 = vlog2.pop %v2577
        %v2579 = vmul.f32 %v2578, 0.6931472
        %v2580 = vadd.f32 %v2567, %v2579
        %v2581 = vsub.f32 %v2560, %v2580
        %v2582 = vmul.f32 %v2581, 1.442695
        %v2583 = vpow.pop %v2582
        %2584 = vst.msk [vmem:[%s772] sm:$0xff] %vm778, %v2583
        %s2585 = sand.u32 %s428, 1
        %s2586 = scalar_lea.sflag [#allocation4], %s2585
        %s2587 = sand.u32 %s428, 1
        %s2588 = smul.addr %s2587, 8
        %s2589 = scalar_lea.vmem [#allocation20], %s2588
        // Predicated region
        $region133: #{tpu_custom_call.1} parent=87 // pred_check
          %p2590 = pneg %p438
        $region134: #{tpu_custom_call.1} parent=87 // pred_check_branch
          %2592 = sbr.rel (%p2590) target = $region136
        $region135: #{tpu_custom_call.1} parent=87 // pred_region
          %s2594 = ssub.s32 128, 128
          %2595 = vsyncadd %s2586, %s2594
          %s2596 = smul.addr %s43, 128
          %s2597 = scalar_lea.hbm %s17, %s2596
          %s2599 = sshll.u32 %s2589, 4
          %s2600 = int_to_ptr.vmem [resolvable:$true] %s2599
          %2602 = dma.vmem_to_hbm [thread:$0]  %s2600, 128, %s2597, %s2586
        $region136: #{tpu_custom_call.1} parent=87 // pred_fallthru
          _
      $region88: #{tpu_custom_call.1} parent=5 // pred_fallthru
        _
      %p2603 = scmp.le.s32.totalorder 2, %s38
      // Predicated region
      $region137: #{tpu_custom_call.1} parent=5 // pred_check
        %p2604 = pneg %p2603
      $region138: #{tpu_custom_call.1} parent=5 // pred_check_branch
        %2606 = sbr.rel (%p2604) target = $region140
      $region139: #{tpu_custom_call.1} parent=5 // pred_region
        %s2607 = ssub.s32 %s38, 2
        // Predicated region
        $region141: #{tpu_custom_call.1} parent=139 // pred_check
          %p2608 = pneg %p444
        $region142: #{tpu_custom_call.1} parent=139 // pred_check_branch
          %2610 = sbr.rel (%p2608) target = $region144
        $region143: #{tpu_custom_call.1} parent=139 // pred_region
          %s2611 = sand.u32 %s429, 1
          %s2612 = scalar_lea.sflag [#allocation4], %s2611
          %s2613 = sand.u32 %s429, 1
          %s2614 = smul.addr %s2613, 8
          %s2615 = scalar_lea.vmem [#allocation20], %s2614
          %2616 = dma.done %s2612, 128
        $region144: #{tpu_custom_call.1} parent=139 // pred_fallthru
          _
      $region140: #{tpu_custom_call.1} parent=5 // pred_fallthru
        _
    $region6: #{tpu_custom_call.1} parent=1 // loop_footer
      %s42 = sadd.s32 1, %s38
    $region7: #{tpu_custom_call.1} parent=1 // loop_footer_branch
      %37 = sbr.rel target = $region3
    $region8: #{tpu_custom_call.1} parent=1 // loop_exit
      _
    %2617 = vsyncpa [#allocation3], 1
    %s2618 = scalar_lea.sflag [#allocation3], 1
    %2619 = vsyncpa %s2618, 1
    %2620 = vsyncpa [#allocation6], 1
    %s2621 = scalar_lea.sflag [#allocation6], 1
    %2622 = vsyncpa %s2621, 1
    %2623 = vsyncpa [#allocation9], 1
    %s2624 = scalar_lea.sflag [#allocation9], 1
    %2625 = vsyncpa %s2624, 1
    %2626 = vsyncpa [#allocation12], 1
    %2627 = vsyncpa [#allocation15], 1
    %2628 = vsyncpa [#allocation18], 1
    %2629 = vsyncpa [#allocation4], 1
    %s2630 = scalar_lea.sflag [#allocation4], 1
    %2631 = vsyncpa %s2630, 1

</llo_original>
